<compile_context>
chip_gen: v7x
topology: tpu7x:2x2x1
jax: 0.10.0
libtpu: 0.0.40
codegen_flags: <defaults>
</compile_context>

<pallas_src>
import functools
import math

import jax
import jax.numpy as jnp
from jax.experimental import pallas as pl
from jax.experimental.pallas import tpu as pltpu

F32 = jnp.float32
BF16 = jnp.bfloat16

# ----------------------------- config ---------------------------------------
B = 2          # batch
C = 3          # image channels
IMG = 16       # image height/width
PATCH = 8      # patch size -> 2x2 = 4 patches
NPATCH = (IMG // PATCH) ** 2
DV = 32        # vision hidden
NHV, DHV = 4, 8
DV_MLP = 64
T = 8          # text tokens
VOCAB = 64
D = 32         # LM hidden
NH, DH = 4, 8
DI = 64        # LM MLP intermediate
S_TOTAL = NPATCH + T

LANE = 128     # lane-dense output padding
VOCAB_PAD = LANE
D_PAD = LANE

# ------------------------- in-kernel helpers ---------------------------------


def _mm(x, w_ref, b_ref=None):
    """MXU matmul: bf16 operands, f32 accumulation, optional f32 bias."""
    y = jnp.dot(x.astype(BF16), w_ref[...], preferred_element_type=F32)
    if b_ref is not None:
        y = y + b_ref[...]
    return y


def _gelu(y):
    # TODO(synk): HF CLIP uses quick_gelu and the LLaVA projector exact-erf GELU;
    # tanh-approx GELU kept here for parity with the synthetic reference.
    return 0.5 * y * (1.0 + jnp.tanh(0.7978845608028654 * (y + 0.044715 * y * y * y)))


def _layernorm(x, g, b):
    mu = jnp.mean(x, axis=-1, keepdims=True)
    var = jnp.mean((x - mu) * (x - mu), axis=-1, keepdims=True)
    return (x - mu) * jax.lax.rsqrt(var + 1e-5) * g + b


def _rmsnorm(x, g):
    ms = jnp.mean(x * x, axis=-1, keepdims=True)
    return x * jax.lax.rsqrt(ms + 1e-5) * g


def _attention(qkv, attn_ref, *, batch, seq, heads, head_dim, causal,
               cos=None, sin=None, rot_ref=None):
    """MHA over a fused-QKV slab (batch*seq, 3*heads*head_dim).

    * RoPE (if requested) is applied once to the whole q/k slabs.
    * Per-(batch, head) results are stored directly into the VMEM scratch slab
      `attn_ref` laid out as (batch*seq, heads*head_dim): no concat trees.
    * All MXU operands are bf16 with f32 accumulation.
    TODO(synk): at real sizes (head_dim=128) keep head slices 128-lane aligned
    and/or use a batched dot_general instead of per-head unrolled matmuls.
    """
    dm = heads * head_dim
    q_all = qkv[:, :dm]
    k_all = qkv[:, dm:2 * dm]
    v_all = qkv[:, 2 * dm:]
    scale = 1.0 / math.sqrt(head_dim)

    if cos is not None:
        # Single-pass slab RoPE: cos/sin are (seq, heads*head_dim); replicate
        # across batch in-kernel (sublane concat, hoisted) rather than DMA-ing
        # B copies.  rotate_half is one +/-1 block-diagonal permutation matmul.
        cos_b = jnp.concatenate([cos] * batch, axis=0)
        sin_b = jnp.concatenate([sin] * batch, axis=0)
        q_all = q_all * cos_b + _mm(q_all, rot_ref) * sin_b
        k_all = k_all * cos_b + _mm(k_all, rot_ref) * sin_b

    # One slab-wide cast; per-head slices below are already bf16 MXU operands.
    q_bf = q_all.astype(BF16)
    k_bf = k_all.astype(BF16)
    v_bf = v_all.astype(BF16)

    if causal:
        row = jax.lax.broadcasted_iota(jnp.int32, (seq, seq), 0)
        col = jax.lax.broadcasted_iota(jnp.int32, (seq, seq), 1)
        mask = jnp.where(col <= row, 0.0, -1e9)

    for b in range(batch):
        r0 = b * seq
        for h in range(heads):
            c0 = h * head_dim
            q = q_bf[r0:r0 + seq, c0:c0 + head_dim]
            k = k_bf[r0:r0 + seq, c0:c0 + head_dim]
            v = v_bf[r0:r0 + seq, c0:c0 + head_dim]
            s = jax.lax.dot_general(q, k, (((1,), (1,)), ((), ())),
                                    preferred_element_type=F32) * scale
            if causal:
                s = s + mask
            m = jnp.max(s, axis=-1, keepdims=True)
            p = jnp.exp(s - m)
            denom = jnp.sum(p, axis=-1, keepdims=True)
            p = p * pl.reciprocal(denom, approx=True)      # divide -> EUP slot
            attn_ref[r0:r0 + seq, c0:c0 + head_dim] = jnp.dot(
                p.astype(BF16), v, preferred_element_type=F32)


# --------------------------- fused kernels -----------------------------------


def _vision_proj_kernel(patches_ref, pos_ref,
                        pw_ref, pb_ref, preg_ref, preb_ref,
                        ln1g_ref, ln1b_ref, qkvw_ref, qkvb_ref, ow_ref, ob_ref,
                        ln2g_ref, ln2b_ref, fc1w_ref, fc1b_ref, fc2w_ref, fc2b_ref,
                        pw1_ref, pb1_ref, pw2_ref, pb2_ref,
                        out_ref, attn_ref, *, batch):
    # patch-embedding "conv" as a matmul + learned position embedding
    # (position table passed once; replicated across batch in-kernel).
    x = _mm(patches_ref[...], pw_ref, pb_ref)
    x = x + jnp.concatenate([pos_ref[...]] * batch, axis=0)
    x = _layernorm(x, preg_ref[...], preb_ref[...])

    # one CLIP-style encoder layer, entirely VMEM-resident
    # TODO(synk): real LLaVA uses a CLS token + vision_feature_layer=-2 of a 24-layer tower.
    h = _layernorm(x, ln1g_ref[...], ln1b_ref[...])
    qkv = _mm(h, qkvw_ref, qkvb_ref)                                  # fused QKV
    _attention(qkv, attn_ref, batch=batch, seq=NPATCH, heads=NHV, head_dim=DHV,
               causal=False)
    x = x + _mm(attn_ref[...], ow_ref, ob_ref)
    h = _layernorm(x, ln2g_ref[...], ln2b_ref[...])
    h = _gelu(_mm(h, fc1w_ref, fc1b_ref))
    x = x + _mm(h, fc2w_ref, fc2b_ref)

    # multimodal projector (Linear -> GELU -> Linear), output padded to 128
    # lanes for unmasked stores (wrapper slices the pad off).
    p = _gelu(_mm(x, pw1_ref, pb1_ref))
    out_ref[...] = _mm(p, pw2_ref, pb2_ref)


def _lm_kernel(x_ref, cos_ref, sin_ref, rot_ref,
               ing_ref, qkvw_ref, ow_ref,
               postg_ref, guw_ref, downw_ref,
               fing_ref, headw_ref,
               out_ref, attn_ref, *, batch, seq):
    x = x_ref[...]

    # LLaMA-style decoder layer: RMSNorm -> fused QKV + slab RoPE -> causal MHA -> O-proj
    h = _rmsnorm(x, ing_ref[...])
    qkv = _mm(h, qkvw_ref)                                            # bias-free
    _attention(qkv, attn_ref, batch=batch, seq=seq, heads=NH, head_dim=DH,
               causal=True, cos=cos_ref[...], sin=sin_ref[...], rot_ref=rot_ref)
    x = x + _mm(attn_ref[...], ow_ref)

    # RMSNorm -> fused gate/up -> SwiGLU -> down-proj
    h = _rmsnorm(x, postg_ref[...])
    gu = _mm(h, guw_ref)
    g, u = gu[:, :DI], gu[:, DI:]
    silu = g * (0.5 * (1.0 + jnp.tanh(0.5 * g)))                      # one EUP op
    x = x + _mm(silu * u, downw_ref)

    # final RMSNorm + LM head (padded to 128 lanes -> unmasked stores)
    h = _rmsnorm(x, fing_ref[...])
    out_ref[...] = _mm(h, headw_ref)


# ------------------------------ wrappers -------------------------------------


def _row(v):
    return v.reshape(1, -1).astype(F32)


def rope_tables(seq, head_dim):
    inv = 1.0 / (10000.0 ** (jnp.arange(0, head_dim, 2, dtype=F32) / head_dim))
    ang = jnp.arange(seq, dtype=F32)[:, None] * inv[None, :]          # (seq, head_dim/2)
    cos = jnp.concatenate([jnp.cos(ang), jnp.cos(ang)], axis=-1)      # (seq, head_dim)
    sin = jnp.concatenate([jnp.sin(ang), jnp.sin(ang)], axis=-1)
    return cos, sin


def rope_rotation_matrix(heads, head_dim):
    """Block-diagonal +/-1 permutation R with (x @ R) == rotate_half(x) per head."""
    hd = heads * head_dim
    d2 = head_dim // 2
    col = jnp.arange(hd)
    rel = col % head_dim
    src = jnp.where(rel < d2, col + d2, col - d2)
    sign = jnp.where(rel < d2, -1.0, 1.0).astype(F32)
    r = jnp.zeros((hd, hd), F32).at[src, col].set(sign)
    return r.astype(BF16)


def vision_projector(params, pixel_values):
    """Vision tower + multimodal projector as one gridless pallas_call."""
    bn = pixel_values.shape[0]
    gh = gw = IMG // PATCH
    patches = pixel_values.reshape(bn, C, gh, PATCH, gw, PATCH)
    patches = patches.transpose(0, 2, 4, 1, 3, 5).reshape(bn * gh * gw, C * PATCH * PATCH)
    # lane-dense output: pad the projector's second linear to 128 output lanes
    p_w2 = jnp.pad(params["p_w2"], ((0, 0), (0, D_PAD - D)))
    p_b2 = jnp.pad(_row(params["p_b2"]), ((0, 0), (0, D_PAD - D)))
    args = (
        patches.astype(F32), params["v_pos"],
        params["v_patch_w"], _row(params["v_patch_b"]),
        _row(params["v_pre_g"]), _row(params["v_pre_b"]),
        _row(params["v_ln1_g"]), _row(params["v_ln1_b"]),
        params["v_qkv_w"], _row(params["v_qkv_b"]),
        params["v_o_w"], _row(params["v_o_b"]),
        _row(params["v_ln2_g"]), _row(params["v_ln2_b"]),
        params["v_fc1_w"], _row(params["v_fc1_b"]),
        params["v_fc2_w"], _row(params["v_fc2_b"]),
        params["p_w1"], _row(params["p_b1"]),
        p_w2, p_b2,
    )
    out = pl.pallas_call(
        functools.partial(_vision_proj_kernel, batch=bn),
        out_shape=jax.ShapeDtypeStruct((bn * NPATCH, D_PAD), F32),
        scratch_shapes=[pltpu.VMEM((bn * NPATCH, NHV * DHV), F32)],
    )(*args)
    return out[:, :D]


def lm_decode(params, inputs_embeds):
    """LLaMA-style decoder layer + LM head as one gridless pallas_call."""
    bn, seq, _ = inputs_embeds.shape
    cos, sin = rope_tables(seq, DH)
    cos_hd = jnp.tile(cos, (1, NH))                                   # (seq, NH*DH)
    sin_hd = jnp.tile(sin, (1, NH))
    rot = rope_rotation_matrix(NH, DH)                                # (NH*DH, NH*DH)
    # lane-dense output: pad the LM head to 128 output lanes
    head_w = jnp.pad(params["lm_head_w"], ((0, 0), (0, VOCAB_PAD - VOCAB)))
    args = (
        inputs_embeds.reshape(bn * seq, D).astype(F32), cos_hd, sin_hd, rot,
        _row(params["l_in_g"]),
        params["l_qkv_w"], params["l_o_w"],
        _row(params["l_post_g"]),
        params["l_gateup_w"], params["l_down_w"],
        _row(params["final_g"]), head_w,
    )
    logits = pl.pallas_call(
        functools.partial(_lm_kernel, batch=bn, seq=seq),
        out_shape=jax.ShapeDtypeStruct((bn * seq, VOCAB_PAD), F32),
        scratch_shapes=[pltpu.VMEM((bn * seq, NH * DH), F32)],
    )(*args)
    return logits[:, :VOCAB].reshape(bn, seq, VOCAB)


def llava_forward(params, input_ids, pixel_values):
    """Synthetic LlavaForConditionalGeneration forward: logits (B, NPATCH+T, VOCAB)."""
    proj = vision_projector(params, pixel_values).reshape(-1, NPATCH, D)
    text_embeds = jnp.take(params["embed"], input_ids, axis=0)        # (B, T, D)
    # TODO(synk): real LLaVA splices image features at the <image> token position; we prepend.
    inputs_embeds = jnp.concatenate([proj, text_embeds], axis=1)      # (B, NPATCH+T, D)
    return lm_decode(params, inputs_embeds)


# ----------------------------- parameters ------------------------------------


def init_params(key):
    keys = iter(jax.random.split(key, 32))

    def w(*shape):  # bf16 weights (MXU-native on v6e/v7x; f32 accumulation in-kernel)
        return (0.02 * jax.random.normal(next(keys), shape, F32)).astype(BF16)

    zeros = lambda n: jnp.zeros((n,), F32)
    ones = lambda n: jnp.ones((n,), F32)

    return {
        # vision tower
        "v_patch_w": w(C * PATCH * PATCH, DV), "v_patch_b": zeros(DV),
        "v_pos": 0.02 * jax.random.normal(next(keys), (NPATCH, DV), F32),
        "v_pre_g": ones(DV), "v_pre_b": zeros(DV),
        "v_ln1_g": ones(DV), "v_ln1_b": zeros(DV),
        "v_qkv_w": w(DV, 3 * DV), "v_qkv_b": zeros(3 * DV),
        "v_o_w": w(DV, DV), "v_o_b": zeros(DV),
        "v_ln2_g": ones(DV), "v_ln2_b": zeros(DV),
        "v_fc1_w": w(DV, DV_MLP), "v_fc1_b": zeros(DV_MLP),
        "v_fc2_w": w(DV_MLP, DV), "v_fc2_b": zeros(DV),
        # multimodal projector
        "p_w1": w(DV, D), "p_b1": zeros(D),
        "p_w2": w(D, D), "p_b2": zeros(D),
        # language model
        "embed": 0.02 * jax.random.normal(next(keys), (VOCAB, D), F32),
        "l_in_g": ones(D),
        "l_qkv_w": w(D, 3 * D),
        "l_o_w": w(D, D),
        "l_post_g": ones(D),
        "l_gateup_w": w(D, 2 * DI),
        "l_down_w": w(DI, D),
        "final_g": ones(D),
        "lm_head_w": w(D, VOCAB),
    }


# ------------------------------ main ------------------------------------------

if __name__ == "__main__":
    key = jax.random.PRNGKey(0)
    kp, kids, kpix = jax.random.split(key, 3)
    params = init_params(kp)
    input_ids = jax.random.randint(kids, (B, T), 0, VOCAB, dtype=jnp.int32)
    pixel_values = jax.random.normal(kpix, (B, C, IMG, IMG), F32)   # NCHW like PyTorch

    logits = jax.jit(llava_forward)(params, input_ids, pixel_values)
    jax.block_until_ready(logits)
    assert logits.shape == (B, S_TOTAL, VOCAB)
    assert bool(jnp.all(jnp.isfinite(logits)))
    print("KERNEL_OK")
</pallas_src>

<mosaic_0001>
module attributes {stable_mosaic.version = 11 : i64} {
  func.func @_vision_proj_kernel(%arg0: memref<8x192xf32, #tpu.memory_space<vmem>>, %arg1: memref<4x32xf32, #tpu.memory_space<vmem>>, %arg2: memref<192x32xbf16, #tpu.memory_space<vmem>>, %arg3: memref<1x32xf32, #tpu.memory_space<vmem>>, %arg4: memref<1x32xf32, #tpu.memory_space<vmem>>, %arg5: memref<1x32xf32, #tpu.memory_space<vmem>>, %arg6: memref<1x32xf32, #tpu.memory_space<vmem>>, %arg7: memref<1x32xf32, #tpu.memory_space<vmem>>, %arg8: memref<32x96xbf16, #tpu.memory_space<vmem>>, %arg9: memref<1x96xf32, #tpu.memory_space<vmem>>, %arg10: memref<32x32xbf16, #tpu.memory_space<vmem>>, %arg11: memref<1x32xf32, #tpu.memory_space<vmem>>, %arg12: memref<1x32xf32, #tpu.memory_space<vmem>>, %arg13: memref<1x32xf32, #tpu.memory_space<vmem>>, %arg14: memref<32x64xbf16, #tpu.memory_space<vmem>>, %arg15: memref<1x64xf32, #tpu.memory_space<vmem>>, %arg16: memref<64x32xbf16, #tpu.memory_space<vmem>>, %arg17: memref<1x32xf32, #tpu.memory_space<vmem>>, %arg18: memref<32x32xbf16, #tpu.memory_space<vmem>>, %arg19: memref<1x32xf32, #tpu.memory_space<vmem>>, %arg20: memref<32x128xbf16, #tpu.memory_space<vmem>>, %arg21: memref<1x128xf32, #tpu.memory_space<vmem>>, %arg22: memref<8x128xf32, #tpu.memory_space<vmem>>, %arg23: memref<8x32xf32, #tpu.memory_space<vmem>>) attributes {dimension_semantics = [], scalar_prefetch = 0 : i64, scratch_operands = 1 : i64, tpu.core_type = #tpu.core_type<tc>} {
    %c0 = arith.constant 0 : index
    %c0_0 = arith.constant 0 : index
    %0 = vector.load %arg0[%c0, %c0_0] : memref<8x192xf32, #tpu.memory_space<vmem>>, vector<8x192xf32>
    %1 = arith.truncf %0 : vector<8x192xf32> to vector<8x192xbf16>
    %c0_1 = arith.constant 0 : index
    %c0_2 = arith.constant 0 : index
    %2 = vector.load %arg2[%c0_1, %c0_2] : memref<192x32xbf16, #tpu.memory_space<vmem>>, vector<192x32xbf16>
    %cst = arith.constant dense<0.000000e+00> : vector<8x32xf32>
    %3 = tpu.matmul %1, %2, %cst {dimension_numbers = #tpu.dot_dimension_numbers<[1], [0], [0], [1], [0, 0, 1, 1], [], []>} : vector<8x192xbf16>, vector<192x32xbf16>, vector<8x32xf32> -> vector<8x32xf32>
    %c0_3 = arith.constant 0 : index
    %c0_4 = arith.constant 0 : index
    %4 = vector.load %arg3[%c0_3, %c0_4] : memref<1x32xf32, #tpu.memory_space<vmem>>, vector<1x32xf32>
    %5 = vector.broadcast %4 : vector<1x32xf32> to vector<8x32xf32>
    %6 = arith.addf %3, %5 : vector<8x32xf32>
    %c0_5 = arith.constant 0 : index
    %c0_6 = arith.constant 0 : index
    %7 = vector.load %arg1[%c0_5, %c0_6] : memref<4x32xf32, #tpu.memory_space<vmem>>, vector<4x32xf32>
    %8 = tpu.concatenate %7, %7 in 0 : vector<4x32xf32>, vector<4x32xf32> -> vector<8x32xf32>
    %9 = arith.addf %6, %8 : vector<8x32xf32>
    %c0_7 = arith.constant 0 : index
    %c0_8 = arith.constant 0 : index
    %10 = vector.load %arg4[%c0_7, %c0_8] : memref<1x32xf32, #tpu.memory_space<vmem>>, vector<1x32xf32>
    %c0_9 = arith.constant 0 : index
    %c0_10 = arith.constant 0 : index
    %11 = vector.load %arg5[%c0_9, %c0_10] : memref<1x32xf32, #tpu.memory_space<vmem>>, vector<1x32xf32>
    %cst_11 = arith.constant dense<0.000000e+00> : vector<8xf32>
    %12 = vector.multi_reduction <add>, %9, %cst_11 [1] : vector<8x32xf32> to vector<8xf32>
    %13 = vector.shape_cast %12 : vector<8xf32> to vector<8x1xf32>
    %cst_12 = arith.constant 3.200000e+01 : f32
    %14 = vector.broadcast %cst_12 : f32 to vector<8x1xf32>
    %15 = arith.divf %13, %14 : vector<8x1xf32>
    %16 = vector.broadcast %15 : vector<8x1xf32> to vector<8x32xf32>
    %17 = arith.subf %9, %16 : vector<8x32xf32>
    %18 = vector.broadcast %15 : vector<8x1xf32> to vector<8x32xf32>
    %19 = arith.subf %9, %18 : vector<8x32xf32>
    %20 = arith.mulf %17, %19 : vector<8x32xf32>
    %cst_13 = arith.constant dense<0.000000e+00> : vector<8xf32>
    %21 = vector.multi_reduction <add>, %20, %cst_13 [1] : vector<8x32xf32> to vector<8xf32>
    %22 = vector.shape_cast %21 : vector<8xf32> to vector<8x1xf32>
    %cst_14 = arith.constant 3.200000e+01 : f32
    %23 = vector.broadcast %cst_14 : f32 to vector<8x1xf32>
    %24 = arith.divf %22, %23 : vector<8x1xf32>
    %25 = vector.broadcast %15 : vector<8x1xf32> to vector<8x32xf32>
    %26 = arith.subf %9, %25 : vector<8x32xf32>
    %cst_15 = arith.constant 9.99999974E-6 : f32
    %27 = vector.broadcast %cst_15 : f32 to vector<8x1xf32>
    %28 = arith.addf %24, %27 : vector<8x1xf32>
    %29 = math.rsqrt %28 : vector<8x1xf32>
    %30 = vector.broadcast %29 : vector<8x1xf32> to vector<8x32xf32>
    %31 = arith.mulf %26, %30 : vector<8x32xf32>
    %32 = vector.broadcast %10 : vector<1x32xf32> to vector<8x32xf32>
    %33 = arith.mulf %31, %32 : vector<8x32xf32>
    %34 = vector.broadcast %11 : vector<1x32xf32> to vector<8x32xf32>
    %35 = arith.addf %33, %34 : vector<8x32xf32>
    %c0_16 = arith.constant 0 : index
    %c0_17 = arith.constant 0 : index
    %36 = vector.load %arg6[%c0_16, %c0_17] : memref<1x32xf32, #tpu.memory_space<vmem>>, vector<1x32xf32>
    %c0_18 = arith.constant 0 : index
    %c0_19 = arith.constant 0 : index
    %37 = vector.load %arg7[%c0_18, %c0_19] : memref<1x32xf32, #tpu.memory_space<vmem>>, vector<1x32xf32>
    %cst_20 = arith.constant dense<0.000000e+00> : vector<8xf32>
    %38 = vector.multi_reduction <add>, %35, %cst_20 [1] : vector<8x32xf32> to vector<8xf32>
    %39 = vector.shape_cast %38 : vector<8xf32> to vector<8x1xf32>
    %cst_21 = arith.constant 3.200000e+01 : f32
    %40 = vector.broadcast %cst_21 : f32 to vector<8x1xf32>
    %41 = arith.divf %39, %40 : vector<8x1xf32>
    %42 = vector.broadcast %41 : vector<8x1xf32> to vector<8x32xf32>
    %43 = arith.subf %35, %42 : vector<8x32xf32>
    %44 = vector.broadcast %41 : vector<8x1xf32> to vector<8x32xf32>
    %45 = arith.subf %35, %44 : vector<8x32xf32>
    %46 = arith.mulf %43, %45 : vector<8x32xf32>
    %cst_22 = arith.constant dense<0.000000e+00> : vector<8xf32>
    %47 = vector.multi_reduction <add>, %46, %cst_22 [1] : vector<8x32xf32> to vector<8xf32>
    %48 = vector.shape_cast %47 : vector<8xf32> to vector<8x1xf32>
    %cst_23 = arith.constant 3.200000e+01 : f32
    %49 = vector.broadcast %cst_23 : f32 to vector<8x1xf32>
    %50 = arith.divf %48, %49 : vector<8x1xf32>
    %51 = vector.broadcast %41 : vector<8x1xf32> to vector<8x32xf32>
    %52 = arith.subf %35, %51 : vector<8x32xf32>
    %cst_24 = arith.constant 9.99999974E-6 : f32
    %53 = vector.broadcast %cst_24 : f32 to vector<8x1xf32>
    %54 = arith.addf %50, %53 : vector<8x1xf32>
    %55 = math.rsqrt %54 : vector<8x1xf32>
    %56 = vector.broadcast %55 : vector<8x1xf32> to vector<8x32xf32>
    %57 = arith.mulf %52, %56 : vector<8x32xf32>
    %58 = vector.broadcast %36 : vector<1x32xf32> to vector<8x32xf32>
    %59 = arith.mulf %57, %58 : vector<8x32xf32>
    %60 = vector.broadcast %37 : vector<1x32xf32> to vector<8x32xf32>
    %61 = arith.addf %59, %60 : vector<8x32xf32>
    %62 = arith.truncf %61 : vector<8x32xf32> to vector<8x32xbf16>
    %c0_25 = arith.constant 0 : index
    %c0_26 = arith.constant 0 : index
    %63 = vector.load %arg8[%c0_25, %c0_26] : memref<32x96xbf16, #tpu.memory_space<vmem>>, vector<32x96xbf16>
    %cst_27 = arith.constant dense<0.000000e+00> : vector<8x96xf32>
    %64 = tpu.matmul %62, %63, %cst_27 {dimension_numbers = #tpu.dot_dimension_numbers<[1], [0], [0], [1], [0, 0, 1, 1], [], []>} : vector<8x32xbf16>, vector<32x96xbf16>, vector<8x96xf32> -> vector<8x96xf32>
    %c0_28 = arith.constant 0 : index
    %c0_29 = arith.constant 0 : index
    %65 = vector.load %arg9[%c0_28, %c0_29] : memref<1x96xf32, #tpu.memory_space<vmem>>, vector<1x96xf32>
    %66 = vector.broadcast %65 : vector<1x96xf32> to vector<8x96xf32>
    %67 = arith.addf %64, %66 : vector<8x96xf32>
    %68 = vector.extract_strided_slice %67 {offsets = [0, 0], sizes = [8, 32], strides = [1, 1]} : vector<8x96xf32> to vector<8x32xf32>
    %69 = vector.extract_strided_slice %67 {offsets = [0, 32], sizes = [8, 32], strides = [1, 1]} : vector<8x96xf32> to vector<8x32xf32>
    %70 = vector.extract_strided_slice %67 {offsets = [0, 64], sizes = [8, 32], strides = [1, 1]} : vector<8x96xf32> to vector<8x32xf32>
    %71 = arith.truncf %68 : vector<8x32xf32> to vector<8x32xbf16>
    %72 = arith.truncf %69 : vector<8x32xf32> to vector<8x32xbf16>
    %73 = arith.truncf %70 : vector<8x32xf32> to vector<8x32xbf16>
    %74 = vector.extract_strided_slice %71 {offsets = [0, 0], sizes = [4, 8], strides = [1, 1]} : vector<8x32xbf16> to vector<4x8xbf16>
    %75 = vector.extract_strided_slice %72 {offsets = [0, 0], sizes = [4, 8], strides = [1, 1]} : vector<8x32xbf16> to vector<4x8xbf16>
    %76 = vector.extract_strided_slice %73 {offsets = [0, 0], sizes = [4, 8], strides = [1, 1]} : vector<8x32xbf16> to vector<4x8xbf16>
    %cst_30 = arith.constant dense<0.000000e+00> : vector<4x4xf32>
    %77 = tpu.matmul %74, %75, %cst_30 {dimension_numbers = #tpu.dot_dimension_numbers<[1], [1], [0], [0], [0, 0, 1, 0], [], []>} : vector<4x8xbf16>, vector<4x8xbf16>, vector<4x4xf32> -> vector<4x4xf32>
    %cst_31 = arith.constant 0.353553385 : f32
    %78 = vector.broadcast %cst_31 : f32 to vector<4x4xf32>
    %79 = arith.mulf %77, %78 : vector<4x4xf32>
    %cst_32 = arith.constant dense<0xFF800000> : vector<4xf32>
    %80 = vector.multi_reduction <maximumf>, %79, %cst_32 [1] : vector<4x4xf32> to vector<4xf32>
    %81 = vector.shape_cast %80 : vector<4xf32> to vector<4x1xf32>
    %82 = vector.broadcast %81 : vector<4x1xf32> to vector<4x4xf32>
    %83 = arith.subf %79, %82 : vector<4x4xf32>
    %84 = math.exp %83 : vector<4x4xf32>
    %cst_33 = arith.constant dense<0.000000e+00> : vector<4xf32>
    %85 = vector.multi_reduction <add>, %84, %cst_33 [1] : vector<4x4xf32> to vector<4xf32>
    %86 = vector.shape_cast %85 : vector<4xf32> to vector<4x1xf32>
    %87 = tpu.reciprocal %86 {approx = true} : vector<4x1xf32> -> vector<4x1xf32>
    %88 = vector.broadcast %87 : vector<4x1xf32> to vector<4x4xf32>
    %89 = arith.mulf %84, %88 : vector<4x4xf32>
    %90 = arith.truncf %89 : vector<4x4xf32> to vector<4x4xbf16>
    %cst_34 = arith.constant dense<0.000000e+00> : vector<4x8xf32>
    %91 = tpu.matmul %90, %76, %cst_34 {dimension_numbers = #tpu.dot_dimension_numbers<[1], [0], [0], [1], [0, 0, 1, 1], [], []>} : vector<4x4xbf16>, vector<4x8xbf16>, vector<4x8xf32> -> vector<4x8xf32>
    %c0_35 = arith.constant 0 : index
    %c0_36 = arith.constant 0 : index
    %92 = vector.load %arg23[%c0_35, %c0_36] : memref<8x32xf32, #tpu.memory_space<vmem>>, vector<4x8xf32>
    tpu.vector_store %arg23[%c0_35, %c0_36], %91 {strides = array<i32>} : memref<8x32xf32, #tpu.memory_space<vmem>>, vector<4x8xf32>,
    %93 = vector.extract_strided_slice %71 {offsets = [0, 8], sizes = [4, 8], strides = [1, 1]} : vector<8x32xbf16> to vector<4x8xbf16>
    %94 = vector.extract_strided_slice %72 {offsets = [0, 8], sizes = [4, 8], strides = [1, 1]} : vector<8x32xbf16> to vector<4x8xbf16>
    %95 = vector.extract_strided_slice %73 {offsets = [0, 8], sizes = [4, 8], strides = [1, 1]} : vector<8x32xbf16> to vector<4x8xbf16>
    %cst_37 = arith.constant dense<0.000000e+00> : vector<4x4xf32>
    %96 = tpu.matmul %93, %94, %cst_37 {dimension_numbers = #tpu.dot_dimension_numbers<[1], [1], [0], [0], [0, 0, 1, 0], [], []>} : vector<4x8xbf16>, vector<4x8xbf16>, vector<4x4xf32> -> vector<4x4xf32>
    %cst_38 = arith.constant 0.353553385 : f32
    %97 = vector.broadcast %cst_38 : f32 to vector<4x4xf32>
    %98 = arith.mulf %96, %97 : vector<4x4xf32>
    %cst_39 = arith.constant dense<0xFF800000> : vector<4xf32>
    %99 = vector.multi_reduction <maximumf>, %98, %cst_39 [1] : vector<4x4xf32> to vector<4xf32>
    %100 = vector.shape_cast %99 : vector<4xf32> to vector<4x1xf32>
    %101 = vector.broadcast %100 : vector<4x1xf32> to vector<4x4xf32>
    %102 = arith.subf %98, %101 : vector<4x4xf32>
    %103 = math.exp %102 : vector<4x4xf32>
    %cst_40 = arith.constant dense<0.000000e+00> : vector<4xf32>
    %104 = vector.multi_reduction <add>, %103, %cst_40 [1] : vector<4x4xf32> to vector<4xf32>
    %105 = vector.shape_cast %104 : vector<4xf32> to vector<4x1xf32>
    %106 = tpu.reciprocal %105 {approx = true} : vector<4x1xf32> -> vector<4x1xf32>
    %107 = vector.broadcast %106 : vector<4x1xf32> to vector<4x4xf32>
    %108 = arith.mulf %103, %107 : vector<4x4xf32>
    %109 = arith.truncf %108 : vector<4x4xf32> to vector<4x4xbf16>
    %cst_41 = arith.constant dense<0.000000e+00> : vector<4x8xf32>
    %110 = tpu.matmul %109, %95, %cst_41 {dimension_numbers = #tpu.dot_dimension_numbers<[1], [0], [0], [1], [0, 0, 1, 1], [], []>} : vector<4x4xbf16>, vector<4x8xbf16>, vector<4x8xf32> -> vector<4x8xf32>
    %c0_42 = arith.constant 0 : index
    %c8 = arith.constant 8 : index
    %111 = vector.load %arg23[%c0_42, %c8] : memref<8x32xf32, #tpu.memory_space<vmem>>, vector<4x8xf32>
    tpu.vector_store %arg23[%c0_42, %c8], %110 {strides = array<i32>} : memref<8x32xf32, #tpu.memory_space<vmem>>, vector<4x8xf32>,
    %112 = vector.extract_strided_slice %71 {offsets = [0, 16], sizes = [4, 8], strides = [1, 1]} : vector<8x32xbf16> to vector<4x8xbf16>
    %113 = vector.extract_strided_slice %72 {offsets = [0, 16], sizes = [4, 8], strides = [1, 1]} : vector<8x32xbf16> to vector<4x8xbf16>
    %114 = vector.extract_strided_slice %73 {offsets = [0, 16], sizes = [4, 8], strides = [1, 1]} : vector<8x32xbf16> to vector<4x8xbf16>
    %cst_43 = arith.constant dense<0.000000e+00> : vector<4x4xf32>
    %115 = tpu.matmul %112, %113, %cst_43 {dimension_numbers = #tpu.dot_dimension_numbers<[1], [1], [0], [0], [0, 0, 1, 0], [], []>} : vector<4x8xbf16>, vector<4x8xbf16>, vector<4x4xf32> -> vector<4x4xf32>
    %cst_44 = arith.constant 0.353553385 : f32
    %116 = vector.broadcast %cst_44 : f32 to vector<4x4xf32>
    %117 = arith.mulf %115, %116 : vector<4x4xf32>
    %cst_45 = arith.constant dense<0xFF800000> : vector<4xf32>
    %118 = vector.multi_reduction <maximumf>, %117, %cst_45 [1] : vector<4x4xf32> to vector<4xf32>
    %119 = vector.shape_cast %118 : vector<4xf32> to vector<4x1xf32>
    %120 = vector.broadcast %119 : vector<4x1xf32> to vector<4x4xf32>
    %121 = arith.subf %117, %120 : vector<4x4xf32>
    %122 = math.exp %121 : vector<4x4xf32>
    %cst_46 = arith.constant dense<0.000000e+00> : vector<4xf32>
    %123 = vector.multi_reduction <add>, %122, %cst_46 [1] : vector<4x4xf32> to vector<4xf32>
    %124 = vector.shape_cast %123 : vector<4xf32> to vector<4x1xf32>
    %125 = tpu.reciprocal %124 {approx = true} : vector<4x1xf32> -> vector<4x1xf32>
    %126 = vector.broadcast %125 : vector<4x1xf32> to vector<4x4xf32>
    %127 = arith.mulf %122, %126 : vector<4x4xf32>
    %128 = arith.truncf %127 : vector<4x4xf32> to vector<4x4xbf16>
    %cst_47 = arith.constant dense<0.000000e+00> : vector<4x8xf32>
    %129 = tpu.matmul %128, %114, %cst_47 {dimension_numbers = #tpu.dot_dimension_numbers<[1], [0], [0], [1], [0, 0, 1, 1], [], []>} : vector<4x4xbf16>, vector<4x8xbf16>, vector<4x8xf32> -> vector<4x8xf32>
    %c0_48 = arith.constant 0 : index
    %c16 = arith.constant 16 : index
    %130 = vector.load %arg23[%c0_48, %c16] : memref<8x32xf32, #tpu.memory_space<vmem>>, vector<4x8xf32>
    tpu.vector_store %arg23[%c0_48, %c16], %129 {strides = array<i32>} : memref<8x32xf32, #tpu.memory_space<vmem>>, vector<4x8xf32>,
    %131 = vector.extract_strided_slice %71 {offsets = [0, 24], sizes = [4, 8], strides = [1, 1]} : vector<8x32xbf16> to vector<4x8xbf16>
    %132 = vector.extract_strided_slice %72 {offsets = [0, 24], sizes = [4, 8], strides = [1, 1]} : vector<8x32xbf16> to vector<4x8xbf16>
    %133 = vector.extract_strided_slice %73 {offsets = [0, 24], sizes = [4, 8], strides = [1, 1]} : vector<8x32xbf16> to vector<4x8xbf16>
    %cst_49 = arith.constant dense<0.000000e+00> : vector<4x4xf32>
    %134 = tpu.matmul %131, %132, %cst_49 {dimension_numbers = #tpu.dot_dimension_numbers<[1], [1], [0], [0], [0, 0, 1, 0], [], []>} : vector<4x8xbf16>, vector<4x8xbf16>, vector<4x4xf32> -> vector<4x4xf32>
    %cst_50 = arith.constant 0.353553385 : f32
    %135 = vector.broadcast %cst_50 : f32 to vector<4x4xf32>
    %136 = arith.mulf %134, %135 : vector<4x4xf32>
    %cst_51 = arith.constant dense<0xFF800000> : vector<4xf32>
    %137 = vector.multi_reduction <maximumf>, %136, %cst_51 [1] : vector<4x4xf32> to vector<4xf32>
    %138 = vector.shape_cast %137 : vector<4xf32> to vector<4x1xf32>
    %139 = vector.broadcast %138 : vector<4x1xf32> to vector<4x4xf32>
    %140 = arith.subf %136, %139 : vector<4x4xf32>
    %141 = math.exp %140 : vector<4x4xf32>
    %cst_52 = arith.constant dense<0.000000e+00> : vector<4xf32>
    %142 = vector.multi_reduction <add>, %141, %cst_52 [1] : vector<4x4xf32> to vector<4xf32>
    %143 = vector.shape_cast %142 : vector<4xf32> to vector<4x1xf32>
    %144 = tpu.reciprocal %143 {approx = true} : vector<4x1xf32> -> vector<4x1xf32>
    %145 = vector.broadcast %144 : vector<4x1xf32> to vector<4x4xf32>
    %146 = arith.mulf %141, %145 : vector<4x4xf32>
    %147 = arith.truncf %146 : vector<4x4xf32> to vector<4x4xbf16>
    %cst_53 = arith.constant dense<0.000000e+00> : vector<4x8xf32>
    %148 = tpu.matmul %147, %133, %cst_53 {dimension_numbers = #tpu.dot_dimension_numbers<[1], [0], [0], [1], [0, 0, 1, 1], [], []>} : vector<4x4xbf16>, vector<4x8xbf16>, vector<4x8xf32> -> vector<4x8xf32>
    %c0_54 = arith.constant 0 : index
    %c24 = arith.constant 24 : index
    %149 = vector.load %arg23[%c0_54, %c24] : memref<8x32xf32, #tpu.memory_space<vmem>>, vector<4x8xf32>
    tpu.vector_store %arg23[%c0_54, %c24], %148 {strides = array<i32>} : memref<8x32xf32, #tpu.memory_space<vmem>>, vector<4x8xf32>,
    %150 = vector.extract_strided_slice %71 {offsets = [4, 0], sizes = [4, 8], strides = [1, 1]} : vector<8x32xbf16> to vector<4x8xbf16>
    %151 = vector.extract_strided_slice %72 {offsets = [4, 0], sizes = [4, 8], strides = [1, 1]} : vector<8x32xbf16> to vector<4x8xbf16>
    %152 = vector.extract_strided_slice %73 {offsets = [4, 0], sizes = [4, 8], strides = [1, 1]} : vector<8x32xbf16> to vector<4x8xbf16>
    %cst_55 = arith.constant dense<0.000000e+00> : vector<4x4xf32>
    %153 = tpu.matmul %150, %151, %cst_55 {dimension_numbers = #tpu.dot_dimension_numbers<[1], [1], [0], [0], [0, 0, 1, 0], [], []>} : vector<4x8xbf16>, vector<4x8xbf16>, vector<4x4xf32> -> vector<4x4xf32>
    %cst_56 = arith.constant 0.353553385 : f32
    %154 = vector.broadcast %cst_56 : f32 to vector<4x4xf32>
    %155 = arith.mulf %153, %154 : vector<4x4xf32>
    %cst_57 = arith.constant dense<0xFF800000> : vector<4xf32>
    %156 = vector.multi_reduction <maximumf>, %155, %cst_57 [1] : vector<4x4xf32> to vector<4xf32>
    %157 = vector.shape_cast %156 : vector<4xf32> to vector<4x1xf32>
    %158 = vector.broadcast %157 : vector<4x1xf32> to vector<4x4xf32>
    %159 = arith.subf %155, %158 : vector<4x4xf32>
    %160 = math.exp %159 : vector<4x4xf32>
    %cst_58 = arith.constant dense<0.000000e+00> : vector<4xf32>
    %161 = vector.multi_reduction <add>, %160, %cst_58 [1] : vector<4x4xf32> to vector<4xf32>
    %162 = vector.shape_cast %161 : vector<4xf32> to vector<4x1xf32>
    %163 = tpu.reciprocal %162 {approx = true} : vector<4x1xf32> -> vector<4x1xf32>
    %164 = vector.broadcast %163 : vector<4x1xf32> to vector<4x4xf32>
    %165 = arith.mulf %160, %164 : vector<4x4xf32>
    %166 = arith.truncf %165 : vector<4x4xf32> to vector<4x4xbf16>
    %cst_59 = arith.constant dense<0.000000e+00> : vector<4x8xf32>
    %167 = tpu.matmul %166, %152, %cst_59 {dimension_numbers = #tpu.dot_dimension_numbers<[1], [0], [0], [1], [0, 0, 1, 1], [], []>} : vector<4x4xbf16>, vector<4x8xbf16>, vector<4x8xf32> -> vector<4x8xf32>
    %c4 = arith.constant 4 : index
    %c0_60 = arith.constant 0 : index
    %168 = vector.load %arg23[%c4, %c0_60] : memref<8x32xf32, #tpu.memory_space<vmem>>, vector<4x8xf32>
    tpu.vector_store %arg23[%c4, %c0_60], %167 {strides = array<i32>} : memref<8x32xf32, #tpu.memory_space<vmem>>, vector<4x8xf32>,
    %169 = vector.extract_strided_slice %71 {offsets = [4, 8], sizes = [4, 8], strides = [1, 1]} : vector<8x32xbf16> to vector<4x8xbf16>
    %170 = vector.extract_strided_slice %72 {offsets = [4, 8], sizes = [4, 8], strides = [1, 1]} : vector<8x32xbf16> to vector<4x8xbf16>
    %171 = vector.extract_strided_slice %73 {offsets = [4, 8], sizes = [4, 8], strides = [1, 1]} : vector<8x32xbf16> to vector<4x8xbf16>
    %cst_61 = arith.constant dense<0.000000e+00> : vector<4x4xf32>
    %172 = tpu.matmul %169, %170, %cst_61 {dimension_numbers = #tpu.dot_dimension_numbers<[1], [1], [0], [0], [0, 0, 1, 0], [], []>} : vector<4x8xbf16>, vector<4x8xbf16>, vector<4x4xf32> -> vector<4x4xf32>
    %cst_62 = arith.constant 0.353553385 : f32
    %173 = vector.broadcast %cst_62 : f32 to vector<4x4xf32>
    %174 = arith.mulf %172, %173 : vector<4x4xf32>
    %cst_63 = arith.constant dense<0xFF800000> : vector<4xf32>
    %175 = vector.multi_reduction <maximumf>, %174, %cst_63 [1] : vector<4x4xf32> to vector<4xf32>
    %176 = vector.shape_cast %175 : vector<4xf32> to vector<4x1xf32>
    %177 = vector.broadcast %176 : vector<4x1xf32> to vector<4x4xf32>
    %178 = arith.subf %174, %177 : vector<4x4xf32>
    %179 = math.exp %178 : vector<4x4xf32>
    %cst_64 = arith.constant dense<0.000000e+00> : vector<4xf32>
    %180 = vector.multi_reduction <add>, %179, %cst_64 [1] : vector<4x4xf32> to vector<4xf32>
    %181 = vector.shape_cast %180 : vector<4xf32> to vector<4x1xf32>
    %182 = tpu.reciprocal %181 {approx = true} : vector<4x1xf32> -> vector<4x1xf32>
    %183 = vector.broadcast %182 : vector<4x1xf32> to vector<4x4xf32>
    %184 = arith.mulf %179, %183 : vector<4x4xf32>
    %185 = arith.truncf %184 : vector<4x4xf32> to vector<4x4xbf16>
    %cst_65 = arith.constant dense<0.000000e+00> : vector<4x8xf32>
    %186 = tpu.matmul %185, %171, %cst_65 {dimension_numbers = #tpu.dot_dimension_numbers<[1], [0], [0], [1], [0, 0, 1, 1], [], []>} : vector<4x4xbf16>, vector<4x8xbf16>, vector<4x8xf32> -> vector<4x8xf32>
    %c4_66 = arith.constant 4 : index
    %c8_67 = arith.constant 8 : index
    %187 = vector.load %arg23[%c4_66, %c8_67] : memref<8x32xf32, #tpu.memory_space<vmem>>, vector<4x8xf32>
    tpu.vector_store %arg23[%c4_66, %c8_67], %186 {strides = array<i32>} : memref<8x32xf32, #tpu.memory_space<vmem>>, vector<4x8xf32>,
    %188 = vector.extract_strided_slice %71 {offsets = [4, 16], sizes = [4, 8], strides = [1, 1]} : vector<8x32xbf16> to vector<4x8xbf16>
    %189 = vector.extract_strided_slice %72 {offsets = [4, 16], sizes = [4, 8], strides = [1, 1]} : vector<8x32xbf16> to vector<4x8xbf16>
    %190 = vector.extract_strided_slice %73 {offsets = [4, 16], sizes = [4, 8], strides = [1, 1]} : vector<8x32xbf16> to vector<4x8xbf16>
    %cst_68 = arith.constant dense<0.000000e+00> : vector<4x4xf32>
    %191 = tpu.matmul %188, %189, %cst_68 {dimension_numbers = #tpu.dot_dimension_numbers<[1], [1], [0], [0], [0, 0, 1, 0], [], []>} : vector<4x8xbf16>, vector<4x8xbf16>, vector<4x4xf32> -> vector<4x4xf32>
    %cst_69 = arith.constant 0.353553385 : f32
    %192 = vector.broadcast %cst_69 : f32 to vector<4x4xf32>
    %193 = arith.mulf %191, %192 : vector<4x4xf32>
    %cst_70 = arith.constant dense<0xFF800000> : vector<4xf32>
    %194 = vector.multi_reduction <maximumf>, %193, %cst_70 [1] : vector<4x4xf32> to vector<4xf32>
    %195 = vector.shape_cast %194 : vector<4xf32> to vector<4x1xf32>
    %196 = vector.broadcast %195 : vector<4x1xf32> to vector<4x4xf32>
    %197 = arith.subf %193, %196 : vector<4x4xf32>
    %198 = math.exp %197 : vector<4x4xf32>
    %cst_71 = arith.constant dense<0.000000e+00> : vector<4xf32>
    %199 = vector.multi_reduction <add>, %198, %cst_71 [1] : vector<4x4xf32> to vector<4xf32>
    %200 = vector.shape_cast %199 : vector<4xf32> to vector<4x1xf32>
    %201 = tpu.reciprocal %200 {approx = true} : vector<4x1xf32> -> vector<4x1xf32>
    %202 = vector.broadcast %201 : vector<4x1xf32> to vector<4x4xf32>
    %203 = arith.mulf %198, %202 : vector<4x4xf32>
    %204 = arith.truncf %203 : vector<4x4xf32> to vector<4x4xbf16>
    %cst_72 = arith.constant dense<0.000000e+00> : vector<4x8xf32>
    %205 = tpu.matmul %204, %190, %cst_72 {dimension_numbers = #tpu.dot_dimension_numbers<[1], [0], [0], [1], [0, 0, 1, 1], [], []>} : vector<4x4xbf16>, vector<4x8xbf16>, vector<4x8xf32> -> vector<4x8xf32>
    %c4_73 = arith.constant 4 : index
    %c16_74 = arith.constant 16 : index
    %206 = vector.load %arg23[%c4_73, %c16_74] : memref<8x32xf32, #tpu.memory_space<vmem>>, vector<4x8xf32>
    tpu.vector_store %arg23[%c4_73, %c16_74], %205 {strides = array<i32>} : memref<8x32xf32, #tpu.memory_space<vmem>>, vector<4x8xf32>,
    %207 = vector.extract_strided_slice %71 {offsets = [4, 24], sizes = [4, 8], strides = [1, 1]} : vector<8x32xbf16> to vector<4x8xbf16>
    %208 = vector.extract_strided_slice %72 {offsets = [4, 24], sizes = [4, 8], strides = [1, 1]} : vector<8x32xbf16> to vector<4x8xbf16>
    %209 = vector.extract_strided_slice %73 {offsets = [4, 24], sizes = [4, 8], strides = [1, 1]} : vector<8x32xbf16> to vector<4x8xbf16>
    %cst_75 = arith.constant dense<0.000000e+00> : vector<4x4xf32>
    %210 = tpu.matmul %207, %208, %cst_75 {dimension_numbers = #tpu.dot_dimension_numbers<[1], [1], [0], [0], [0, 0, 1, 0], [], []>} : vector<4x8xbf16>, vector<4x8xbf16>, vector<4x4xf32> -> vector<4x4xf32>
    %cst_76 = arith.constant 0.353553385 : f32
    %211 = vector.broadcast %cst_76 : f32 to vector<4x4xf32>
    %212 = arith.mulf %210, %211 : vector<4x4xf32>
    %cst_77 = arith.constant dense<0xFF800000> : vector<4xf32>
    %213 = vector.multi_reduction <maximumf>, %212, %cst_77 [1] : vector<4x4xf32> to vector<4xf32>
    %214 = vector.shape_cast %213 : vector<4xf32> to vector<4x1xf32>
    %215 = vector.broadcast %214 : vector<4x1xf32> to vector<4x4xf32>
    %216 = arith.subf %212, %215 : vector<4x4xf32>
    %217 = math.exp %216 : vector<4x4xf32>
    %cst_78 = arith.constant dense<0.000000e+00> : vector<4xf32>
    %218 = vector.multi_reduction <add>, %217, %cst_78 [1] : vector<4x4xf32> to vector<4xf32>
    %219 = vector.shape_cast %218 : vector<4xf32> to vector<4x1xf32>
    %220 = tpu.reciprocal %219 {approx = true} : vector<4x1xf32> -> vector<4x1xf32>
    %221 = vector.broadcast %220 : vector<4x1xf32> to vector<4x4xf32>
    %222 = arith.mulf %217, %221 : vector<4x4xf32>
    %223 = arith.truncf %222 : vector<4x4xf32> to vector<4x4xbf16>
    %cst_79 = arith.constant dense<0.000000e+00> : vector<4x8xf32>
    %224 = tpu.matmul %223, %209, %cst_79 {dimension_numbers = #tpu.dot_dimension_numbers<[1], [0], [0], [1], [0, 0, 1, 1], [], []>} : vector<4x4xbf16>, vector<4x8xbf16>, vector<4x8xf32> -> vector<4x8xf32>
    %c4_80 = arith.constant 4 : index
    %c24_81 = arith.constant 24 : index
    %225 = vector.load %arg23[%c4_80, %c24_81] : memref<8x32xf32, #tpu.memory_space<vmem>>, vector<4x8xf32>
    tpu.vector_store %arg23[%c4_80, %c24_81], %224 {strides = array<i32>} : memref<8x32xf32, #tpu.memory_space<vmem>>, vector<4x8xf32>,
    %c0_82 = arith.constant 0 : index
    %c0_83 = arith.constant 0 : index
    %226 = vector.load %arg23[%c0_82, %c0_83] : memref<8x32xf32, #tpu.memory_space<vmem>>, vector<8x32xf32>
    %227 = arith.truncf %226 : vector<8x32xf32> to vector<8x32xbf16>
    %c0_84 = arith.constant 0 : index
    %c0_85 = arith.constant 0 : index
    %228 = vector.load %arg10[%c0_84, %c0_85] : memref<32x32xbf16, #tpu.memory_space<vmem>>, vector<32x32xbf16>
    %cst_86 = arith.constant dense<0.000000e+00> : vector<8x32xf32>
    %229 = tpu.matmul %227, %228, %cst_86 {dimension_numbers = #tpu.dot_dimension_numbers<[1], [0], [0], [1], [0, 0, 1, 1], [], []>} : vector<8x32xbf16>, vector<32x32xbf16>, vector<8x32xf32> -> vector<8x32xf32>
    %c0_87 = arith.constant 0 : index
    %c0_88 = arith.constant 0 : index
    %230 = vector.load %arg11[%c0_87, %c0_88] : memref<1x32xf32, #tpu.memory_space<vmem>>, vector<1x32xf32>
    %231 = vector.broadcast %230 : vector<1x32xf32> to vector<8x32xf32>
    %232 = arith.addf %229, %231 : vector<8x32xf32>
    %233 = arith.addf %35, %232 : vector<8x32xf32>
    %c0_89 = arith.constant 0 : index
    %c0_90 = arith.constant 0 : index
    %234 = vector.load %arg12[%c0_89, %c0_90] : memref<1x32xf32, #tpu.memory_space<vmem>>, vector<1x32xf32>
    %c0_91 = arith.constant 0 : index
    %c0_92 = arith.constant 0 : index
    %235 = vector.load %arg13[%c0_91, %c0_92] : memref<1x32xf32, #tpu.memory_space<vmem>>, vector<1x32xf32>
    %cst_93 = arith.constant dense<0.000000e+00> : vector<8xf32>
    %236 = vector.multi_reduction <add>, %233, %cst_93 [1] : vector<8x32xf32> to vector<8xf32>
    %237 = vector.shape_cast %236 : vector<8xf32> to vector<8x1xf32>
    %cst_94 = arith.constant 3.200000e+01 : f32
    %238 = vector.broadcast %cst_94 : f32 to vector<8x1xf32>
    %239 = arith.divf %237, %238 : vector<8x1xf32>
    %240 = vector.broadcast %239 : vector<8x1xf32> to vector<8x32xf32>
    %241 = arith.subf %233, %240 : vector<8x32xf32>
    %242 = vector.broadcast %239 : vector<8x1xf32> to vector<8x32xf32>
    %243 = arith.subf %233, %242 : vector<8x32xf32>
    %244 = arith.mulf %241, %243 : vector<8x32xf32>
    %cst_95 = arith.constant dense<0.000000e+00> : vector<8xf32>
    %245 = vector.multi_reduction <add>, %244, %cst_95 [1] : vector<8x32xf32> to vector<8xf32>
    %246 = vector.shape_cast %245 : vector<8xf32> to vector<8x1xf32>
    %cst_96 = arith.constant 3.200000e+01 : f32
    %247 = vector.broadcast %cst_96 : f32 to vector<8x1xf32>
    %248 = arith.divf %246, %247 : vector<8x1xf32>
    %249 = vector.broadcast %239 : vector<8x1xf32> to vector<8x32xf32>
    %250 = arith.subf %233, %249 : vector<8x32xf32>
    %cst_97 = arith.constant 9.99999974E-6 : f32
    %251 = vector.broadcast %cst_97 : f32 to vector<8x1xf32>
    %252 = arith.addf %248, %251 : vector<8x1xf32>
    %253 = math.rsqrt %252 : vector<8x1xf32>
    %254 = vector.broadcast %253 : vector<8x1xf32> to vector<8x32xf32>
    %255 = arith.mulf %250, %254 : vector<8x32xf32>
    %256 = vector.broadcast %234 : vector<1x32xf32> to vector<8x32xf32>
    %257 = arith.mulf %255, %256 : vector<8x32xf32>
    %258 = vector.broadcast %235 : vector<1x32xf32> to vector<8x32xf32>
    %259 = arith.addf %257, %258 : vector<8x32xf32>
    %260 = arith.truncf %259 : vector<8x32xf32> to vector<8x32xbf16>
    %c0_98 = arith.constant 0 : index
    %c0_99 = arith.constant 0 : index
    %261 = vector.load %arg14[%c0_98, %c0_99] : memref<32x64xbf16, #tpu.memory_space<vmem>>, vector<32x64xbf16>
    %cst_100 = arith.constant dense<0.000000e+00> : vector<8x64xf32>
    %262 = tpu.matmul %260, %261, %cst_100 {dimension_numbers = #tpu.dot_dimension_numbers<[1], [0], [0], [1], [0, 0, 1, 1], [], []>} : vector<8x32xbf16>, vector<32x64xbf16>, vector<8x64xf32> -> vector<8x64xf32>
    %c0_101 = arith.constant 0 : index
    %c0_102 = arith.constant 0 : index
    %263 = vector.load %arg15[%c0_101, %c0_102] : memref<1x64xf32, #tpu.memory_space<vmem>>, vector<1x64xf32>
    %264 = vector.broadcast %263 : vector<1x64xf32> to vector<8x64xf32>
    %265 = arith.addf %262, %264 : vector<8x64xf32>
    %cst_103 = arith.constant 5.000000e-01 : f32
    %266 = vector.broadcast %cst_103 : f32 to vector<8x64xf32>
    %267 = arith.mulf %266, %265 : vector<8x64xf32>
    %cst_104 = arith.constant 4.471500e-02 : f32
    %268 = vector.broadcast %cst_104 : f32 to vector<8x64xf32>
    %269 = arith.mulf %268, %265 : vector<8x64xf32>
    %270 = arith.mulf %269, %265 : vector<8x64xf32>
    %271 = arith.mulf %270, %265 : vector<8x64xf32>
    %272 = arith.addf %265, %271 : vector<8x64xf32>
    %cst_105 = arith.constant 0.797884583 : f32
    %273 = vector.broadcast %cst_105 : f32 to vector<8x64xf32>
    %274 = arith.mulf %273, %272 : vector<8x64xf32>
    %275 = math.tanh %274 : vector<8x64xf32>
    %cst_106 = arith.constant 1.000000e+00 : f32
    %276 = vector.broadcast %cst_106 : f32 to vector<8x64xf32>
    %277 = arith.addf %276, %275 : vector<8x64xf32>
    %278 = arith.mulf %267, %277 : vector<8x64xf32>
    %279 = arith.truncf %278 : vector<8x64xf32> to vector<8x64xbf16>
    %c0_107 = arith.constant 0 : index
    %c0_108 = arith.constant 0 : index
    %280 = vector.load %arg16[%c0_107, %c0_108] : memref<64x32xbf16, #tpu.memory_space<vmem>>, vector<64x32xbf16>
    %cst_109 = arith.constant dense<0.000000e+00> : vector<8x32xf32>
    %281 = tpu.matmul %279, %280, %cst_109 {dimension_numbers = #tpu.dot_dimension_numbers<[1], [0], [0], [1], [0, 0, 1, 1], [], []>} : vector<8x64xbf16>, vector<64x32xbf16>, vector<8x32xf32> -> vector<8x32xf32>
    %c0_110 = arith.constant 0 : index
    %c0_111 = arith.constant 0 : index
    %282 = vector.load %arg17[%c0_110, %c0_111] : memref<1x32xf32, #tpu.memory_space<vmem>>, vector<1x32xf32>
    %283 = vector.broadcast %282 : vector<1x32xf32> to vector<8x32xf32>
    %284 = arith.addf %281, %283 : vector<8x32xf32>
    %285 = arith.addf %233, %284 : vector<8x32xf32>
    %286 = arith.truncf %285 : vector<8x32xf32> to vector<8x32xbf16>
    %c0_112 = arith.constant 0 : index
    %c0_113 = arith.constant 0 : index
    %287 = vector.load %arg18[%c0_112, %c0_113] : memref<32x32xbf16, #tpu.memory_space<vmem>>, vector<32x32xbf16>
    %cst_114 = arith.constant dense<0.000000e+00> : vector<8x32xf32>
    %288 = tpu.matmul %286, %287, %cst_114 {dimension_numbers = #tpu.dot_dimension_numbers<[1], [0], [0], [1], [0, 0, 1, 1], [], []>} : vector<8x32xbf16>, vector<32x32xbf16>, vector<8x32xf32> -> vector<8x32xf32>
    %c0_115 = arith.constant 0 : index
    %c0_116 = arith.constant 0 : index
    %289 = vector.load %arg19[%c0_115, %c0_116] : memref<1x32xf32, #tpu.memory_space<vmem>>, vector<1x32xf32>
    %290 = vector.broadcast %289 : vector<1x32xf32> to vector<8x32xf32>
    %291 = arith.addf %288, %290 : vector<8x32xf32>
    %cst_117 = arith.constant 5.000000e-01 : f32
    %292 = vector.broadcast %cst_117 : f32 to vector<8x32xf32>
    %293 = arith.mulf %292, %291 : vector<8x32xf32>
    %cst_118 = arith.constant 4.471500e-02 : f32
    %294 = vector.broadcast %cst_118 : f32 to vector<8x32xf32>
    %295 = arith.mulf %294, %291 : vector<8x32xf32>
    %296 = arith.mulf %295, %291 : vector<8x32xf32>
    %297 = arith.mulf %296, %291 : vector<8x32xf32>
    %298 = arith.addf %291, %297 : vector<8x32xf32>
    %cst_119 = arith.constant 0.797884583 : f32
    %299 = vector.broadcast %cst_119 : f32 to vector<8x32xf32>
    %300 = arith.mulf %299, %298 : vector<8x32xf32>
    %301 = math.tanh %300 : vector<8x32xf32>
    %cst_120 = arith.constant 1.000000e+00 : f32
    %302 = vector.broadcast %cst_120 : f32 to vector<8x32xf32>
    %303 = arith.addf %302, %301 : vector<8x32xf32>
    %304 = arith.mulf %293, %303 : vector<8x32xf32>
    %305 = arith.truncf %304 : vector<8x32xf32> to vector<8x32xbf16>
    %c0_121 = arith.constant 0 : index
    %c0_122 = arith.constant 0 : index
    %306 = vector.load %arg20[%c0_121, %c0_122] : memref<32x128xbf16, #tpu.memory_space<vmem>>, vector<32x128xbf16>
    %cst_123 = arith.constant dense<0.000000e+00> : vector<8x128xf32>
    %307 = tpu.matmul %305, %306, %cst_123 {dimension_numbers = #tpu.dot_dimension_numbers<[1], [0], [0], [1], [0, 0, 1, 1], [], []>} : vector<8x32xbf16>, vector<32x128xbf16>, vector<8x128xf32> -> vector<8x128xf32>
    %c0_124 = arith.constant 0 : index
    %c0_125 = arith.constant 0 : index
    %308 = vector.load %arg21[%c0_124, %c0_125] : memref<1x128xf32, #tpu.memory_space<vmem>>, vector<1x128xf32>
    %309 = vector.broadcast %308 : vector<1x128xf32> to vector<8x128xf32>
    %310 = arith.addf %307, %309 : vector<8x128xf32>
    %c0_126 = arith.constant 0 : index
    %c0_127 = arith.constant 0 : index
    %311 = vector.load %arg22[%c0_126, %c0_127] : memref<8x128xf32, #tpu.memory_space<vmem>>, vector<8x128xf32>
    tpu.vector_store %arg22[%c0_126, %c0_127], %310 {strides = array<i32>} : memref<8x128xf32, #tpu.memory_space<vmem>>, vector<8x128xf32>,
    return
  }
}

module attributes {stable_mosaic.version = 11 : i64} {
  func.func @_lm_kernel(%arg0: memref<24x32xf32, #tpu.memory_space<vmem>>, %arg1: memref<12x32xf32, #tpu.memory_space<vmem>>, %arg2: memref<12x32xf32, #tpu.memory_space<vmem>>, %arg3: memref<32x32xbf16, #tpu.memory_space<vmem>>, %arg4: memref<1x32xf32, #tpu.memory_space<vmem>>, %arg5: memref<32x96xbf16, #tpu.memory_space<vmem>>, %arg6: memref<32x32xbf16, #tpu.memory_space<vmem>>, %arg7: memref<1x32xf32, #tpu.memory_space<vmem>>, %arg8: memref<32x128xbf16, #tpu.memory_space<vmem>>, %arg9: memref<64x32xbf16, #tpu.memory_space<vmem>>, %arg10: memref<1x32xf32, #tpu.memory_space<vmem>>, %arg11: memref<32x128xbf16, #tpu.memory_space<vmem>>, %arg12: memref<24x128xf32, #tpu.memory_space<vmem>>, %arg13: memref<24x32xf32, #tpu.memory_space<vmem>>) attributes {dimension_semantics = [], scalar_prefetch = 0 : i64, scratch_operands = 1 : i64, tpu.core_type = #tpu.core_type<tc>} {
    %c0 = arith.constant 0 : index
    %c0_0 = arith.constant 0 : index
    %0 = vector.load %arg0[%c0, %c0_0] : memref<24x32xf32, #tpu.memory_space<vmem>>, vector<24x32xf32>
    %c0_1 = arith.constant 0 : index
    %c0_2 = arith.constant 0 : index
    %1 = vector.load %arg4[%c0_1, %c0_2] : memref<1x32xf32, #tpu.memory_space<vmem>>, vector<1x32xf32>
    %2 = arith.mulf %0, %0 : vector<24x32xf32>
    %cst = arith.constant dense<0.000000e+00> : vector<24xf32>
    %3 = vector.multi_reduction <add>, %2, %cst [1] : vector<24x32xf32> to vector<24xf32>
    %4 = vector.shape_cast %3 : vector<24xf32> to vector<24x1xf32>
    %cst_3 = arith.constant 3.200000e+01 : f32
    %5 = vector.broadcast %cst_3 : f32 to vector<24x1xf32>
    %6 = arith.divf %4, %5 : vector<24x1xf32>
    %cst_4 = arith.constant 9.99999974E-6 : f32
    %7 = vector.broadcast %cst_4 : f32 to vector<24x1xf32>
    %8 = arith.addf %6, %7 : vector<24x1xf32>
    %9 = math.rsqrt %8 : vector<24x1xf32>
    %10 = vector.broadcast %9 : vector<24x1xf32> to vector<24x32xf32>
    %11 = arith.mulf %0, %10 : vector<24x32xf32>
    %12 = vector.broadcast %1 : vector<1x32xf32> to vector<24x32xf32>
    %13 = arith.mulf %11, %12 : vector<24x32xf32>
    %14 = arith.truncf %13 : vector<24x32xf32> to vector<24x32xbf16>
    %c0_5 = arith.constant 0 : index
    %c0_6 = arith.constant 0 : index
    %15 = vector.load %arg5[%c0_5, %c0_6] : memref<32x96xbf16, #tpu.memory_space<vmem>>, vector<32x96xbf16>
    %cst_7 = arith.constant dense<0.000000e+00> : vector<24x96xf32>
    %16 = tpu.matmul %14, %15, %cst_7 {dimension_numbers = #tpu.dot_dimension_numbers<[1], [0], [0], [1], [0, 0, 1, 1], [], []>} : vector<24x32xbf16>, vector<32x96xbf16>, vector<24x96xf32> -> vector<24x96xf32>
    %c0_8 = arith.constant 0 : index
    %c0_9 = arith.constant 0 : index
    %17 = vector.load %arg1[%c0_8, %c0_9] : memref<12x32xf32, #tpu.memory_space<vmem>>, vector<12x32xf32>
    %c0_10 = arith.constant 0 : index
    %c0_11 = arith.constant 0 : index
    %18 = vector.load %arg2[%c0_10, %c0_11] : memref<12x32xf32, #tpu.memory_space<vmem>>, vector<12x32xf32>
    %19 = vector.extract_strided_slice %16 {offsets = [0, 0], sizes = [24, 32], strides = [1, 1]} : vector<24x96xf32> to vector<24x32xf32>
    %20 = vector.extract_strided_slice %16 {offsets = [0, 32], sizes = [24, 32], strides = [1, 1]} : vector<24x96xf32> to vector<24x32xf32>
    %21 = vector.extract_strided_slice %16 {offsets = [0, 64], sizes = [24, 32], strides = [1, 1]} : vector<24x96xf32> to vector<24x32xf32>
    %22 = tpu.concatenate %17, %17 in 0 : vector<12x32xf32>, vector<12x32xf32> -> vector<24x32xf32>
    %23 = tpu.concatenate %18, %18 in 0 : vector<12x32xf32>, vector<12x32xf32> -> vector<24x32xf32>
    %24 = arith.mulf %19, %22 : vector<24x32xf32>
    %25 = arith.truncf %19 : vector<24x32xf32> to vector<24x32xbf16>
    %c0_12 = arith.constant 0 : index
    %c0_13 = arith.constant 0 : index
    %26 = vector.load %arg3[%c0_12, %c0_13] : memref<32x32xbf16, #tpu.memory_space<vmem>>, vector<32x32xbf16>
    %cst_14 = arith.constant dense<0.000000e+00> : vector<24x32xf32>
    %27 = tpu.matmul %25, %26, %cst_14 {dimension_numbers = #tpu.dot_dimension_numbers<[1], [0], [0], [1], [0, 0, 1, 1], [], []>} : vector<24x32xbf16>, vector<32x32xbf16>, vector<24x32xf32> -> vector<24x32xf32>
    %28 = arith.mulf %27, %23 : vector<24x32xf32>
    %29 = arith.addf %24, %28 : vector<24x32xf32>
    %30 = arith.mulf %20, %22 : vector<24x32xf32>
    %31 = arith.truncf %20 : vector<24x32xf32> to vector<24x32xbf16>
    %c0_15 = arith.constant 0 : index
    %c0_16 = arith.constant 0 : index
    %32 = vector.load %arg3[%c0_15, %c0_16] : memref<32x32xbf16, #tpu.memory_space<vmem>>, vector<32x32xbf16>
    %cst_17 = arith.constant dense<0.000000e+00> : vector<24x32xf32>
    %33 = tpu.matmul %31, %32, %cst_17 {dimension_numbers = #tpu.dot_dimension_numbers<[1], [0], [0], [1], [0, 0, 1, 1], [], []>} : vector<24x32xbf16>, vector<32x32xbf16>, vector<24x32xf32> -> vector<24x32xf32>
    %34 = arith.mulf %33, %23 : vector<24x32xf32>
    %35 = arith.addf %30, %34 : vector<24x32xf32>
    %36 = arith.truncf %29 : vector<24x32xf32> to vector<24x32xbf16>
    %37 = arith.truncf %35 : vector<24x32xf32> to vector<24x32xbf16>
    %38 = arith.truncf %21 : vector<24x32xf32> to vector<24x32xbf16>
    %39 = tpu.iota {dimensions = array<i32: 0>} : vector<12x12xi32>
    %40 = tpu.iota {dimensions = array<i32: 1>} : vector<12x12xi32>
    %41 = arith.cmpi sle, %40, %39 : vector<12x12xi32>
    %cst_18 = arith.constant 0.000000e+00 : f32
    %cst_19 = arith.constant -1.000000e+09 : f32
    %42 = vector.broadcast %cst_18 : f32 to vector<12x12xf32>
    %43 = vector.broadcast %cst_19 : f32 to vector<12x12xf32>
    %44 = arith.select %41, %42, %43 : vector<12x12xi1>, vector<12x12xf32>
    %45 = vector.extract_strided_slice %36 {offsets = [0, 0], sizes = [12, 8], strides = [1, 1]} : vector<24x32xbf16> to vector<12x8xbf16>
    %46 = vector.extract_strided_slice %37 {offsets = [0, 0], sizes = [12, 8], strides = [1, 1]} : vector<24x32xbf16> to vector<12x8xbf16>
    %47 = vector.extract_strided_slice %38 {offsets = [0, 0], sizes = [12, 8], strides = [1, 1]} : vector<24x32xbf16> to vector<12x8xbf16>
    %cst_20 = arith.constant dense<0.000000e+00> : vector<12x12xf32>
    %48 = tpu.matmul %45, %46, %cst_20 {dimension_numbers = #tpu.dot_dimension_numbers<[1], [1], [0], [0], [0, 0, 1, 0], [], []>} : vector<12x8xbf16>, vector<12x8xbf16>, vector<12x12xf32> -> vector<12x12xf32>
    %cst_21 = arith.constant 0.353553385 : f32
    %49 = vector.broadcast %cst_21 : f32 to vector<12x12xf32>
    %50 = arith.mulf %48, %49 : vector<12x12xf32>
    %51 = arith.addf %50, %44 : vector<12x12xf32>
    %cst_22 = arith.constant dense<0xFF800000> : vector<12xf32>
    %52 = vector.multi_reduction <maximumf>, %51, %cst_22 [1] : vector<12x12xf32> to vector<12xf32>
    %53 = vector.shape_cast %52 : vector<12xf32> to vector<12x1xf32>
    %54 = vector.broadcast %53 : vector<12x1xf32> to vector<12x12xf32>
    %55 = arith.subf %51, %54 : vector<12x12xf32>
    %56 = math.exp %55 : vector<12x12xf32>
    %cst_23 = arith.constant dense<0.000000e+00> : vector<12xf32>
    %57 = vector.multi_reduction <add>, %56, %cst_23 [1] : vector<12x12xf32> to vector<12xf32>
    %58 = vector.shape_cast %57 : vector<12xf32> to vector<12x1xf32>
    %59 = tpu.reciprocal %58 {approx = true} : vector<12x1xf32> -> vector<12x1xf32>
    %60 = vector.broadcast %59 : vector<12x1xf32> to vector<12x12xf32>
    %61 = arith.mulf %56, %60 : vector<12x12xf32>
    %62 = arith.truncf %61 : vector<12x12xf32> to vector<12x12xbf16>
    %cst_24 = arith.constant dense<0.000000e+00> : vector<12x8xf32>
    %63 = tpu.matmul %62, %47, %cst_24 {dimension_numbers = #tpu.dot_dimension_numbers<[1], [0], [0], [1], [0, 0, 1, 1], [], []>} : vector<12x12xbf16>, vector<12x8xbf16>, vector<12x8xf32> -> vector<12x8xf32>
    %c0_25 = arith.constant 0 : index
    %c0_26 = arith.constant 0 : index
    %64 = vector.load %arg13[%c0_25, %c0_26] : memref<24x32xf32, #tpu.memory_space<vmem>>, vector<12x8xf32>
    tpu.vector_store %arg13[%c0_25, %c0_26], %63 {strides = array<i32>} : memref<24x32xf32, #tpu.memory_space<vmem>>, vector<12x8xf32>,
    %65 = vector.extract_strided_slice %36 {offsets = [0, 8], sizes = [12, 8], strides = [1, 1]} : vector<24x32xbf16> to vector<12x8xbf16>
    %66 = vector.extract_strided_slice %37 {offsets = [0, 8], sizes = [12, 8], strides = [1, 1]} : vector<24x32xbf16> to vector<12x8xbf16>
    %67 = vector.extract_strided_slice %38 {offsets = [0, 8], sizes = [12, 8], strides = [1, 1]} : vector<24x32xbf16> to vector<12x8xbf16>
    %cst_27 = arith.constant dense<0.000000e+00> : vector<12x12xf32>
    %68 = tpu.matmul %65, %66, %cst_27 {dimension_numbers = #tpu.dot_dimension_numbers<[1], [1], [0], [0], [0, 0, 1, 0], [], []>} : vector<12x8xbf16>, vector<12x8xbf16>, vector<12x12xf32> -> vector<12x12xf32>
    %cst_28 = arith.constant 0.353553385 : f32
    %69 = vector.broadcast %cst_28 : f32 to vector<12x12xf32>
    %70 = arith.mulf %68, %69 : vector<12x12xf32>
    %71 = arith.addf %70, %44 : vector<12x12xf32>
    %cst_29 = arith.constant dense<0xFF800000> : vector<12xf32>
    %72 = vector.multi_reduction <maximumf>, %71, %cst_29 [1] : vector<12x12xf32> to vector<12xf32>
    %73 = vector.shape_cast %72 : vector<12xf32> to vector<12x1xf32>
    %74 = vector.broadcast %73 : vector<12x1xf32> to vector<12x12xf32>
    %75 = arith.subf %71, %74 : vector<12x12xf32>
    %76 = math.exp %75 : vector<12x12xf32>
    %cst_30 = arith.constant dense<0.000000e+00> : vector<12xf32>
    %77 = vector.multi_reduction <add>, %76, %cst_30 [1] : vector<12x12xf32> to vector<12xf32>
    %78 = vector.shape_cast %77 : vector<12xf32> to vector<12x1xf32>
    %79 = tpu.reciprocal %78 {approx = true} : vector<12x1xf32> -> vector<12x1xf32>
    %80 = vector.broadcast %79 : vector<12x1xf32> to vector<12x12xf32>
    %81 = arith.mulf %76, %80 : vector<12x12xf32>
    %82 = arith.truncf %81 : vector<12x12xf32> to vector<12x12xbf16>
    %cst_31 = arith.constant dense<0.000000e+00> : vector<12x8xf32>
    %83 = tpu.matmul %82, %67, %cst_31 {dimension_numbers = #tpu.dot_dimension_numbers<[1], [0], [0], [1], [0, 0, 1, 1], [], []>} : vector<12x12xbf16>, vector<12x8xbf16>, vector<12x8xf32> -> vector<12x8xf32>
    %c0_32 = arith.constant 0 : index
    %c8 = arith.constant 8 : index
    %84 = vector.load %arg13[%c0_32, %c8] : memref<24x32xf32, #tpu.memory_space<vmem>>, vector<12x8xf32>
    tpu.vector_store %arg13[%c0_32, %c8], %83 {strides = array<i32>} : memref<24x32xf32, #tpu.memory_space<vmem>>, vector<12x8xf32>,
    %85 = vector.extract_strided_slice %36 {offsets = [0, 16], sizes = [12, 8], strides = [1, 1]} : vector<24x32xbf16> to vector<12x8xbf16>
    %86 = vector.extract_strided_slice %37 {offsets = [0, 16], sizes = [12, 8], strides = [1, 1]} : vector<24x32xbf16> to vector<12x8xbf16>
    %87 = vector.extract_strided_slice %38 {offsets = [0, 16], sizes = [12, 8], strides = [1, 1]} : vector<24x32xbf16> to vector<12x8xbf16>
    %cst_33 = arith.constant dense<0.000000e+00> : vector<12x12xf32>
    %88 = tpu.matmul %85, %86, %cst_33 {dimension_numbers = #tpu.dot_dimension_numbers<[1], [1], [0], [0], [0, 0, 1, 0], [], []>} : vector<12x8xbf16>, vector<12x8xbf16>, vector<12x12xf32> -> vector<12x12xf32>
    %cst_34 = arith.constant 0.353553385 : f32
    %89 = vector.broadcast %cst_34 : f32 to vector<12x12xf32>
    %90 = arith.mulf %88, %89 : vector<12x12xf32>
    %91 = arith.addf %90, %44 : vector<12x12xf32>
    %cst_35 = arith.constant dense<0xFF800000> : vector<12xf32>
    %92 = vector.multi_reduction <maximumf>, %91, %cst_35 [1] : vector<12x12xf32> to vector<12xf32>
    %93 = vector.shape_cast %92 : vector<12xf32> to vector<12x1xf32>
    %94 = vector.broadcast %93 : vector<12x1xf32> to vector<12x12xf32>
    %95 = arith.subf %91, %94 : vector<12x12xf32>
    %96 = math.exp %95 : vector<12x12xf32>
    %cst_36 = arith.constant dense<0.000000e+00> : vector<12xf32>
    %97 = vector.multi_reduction <add>, %96, %cst_36 [1] : vector<12x12xf32> to vector<12xf32>
    %98 = vector.shape_cast %97 : vector<12xf32> to vector<12x1xf32>
    %99 = tpu.reciprocal %98 {approx = true} : vector<12x1xf32> -> vector<12x1xf32>
    %100 = vector.broadcast %99 : vector<12x1xf32> to vector<12x12xf32>
    %101 = arith.mulf %96, %100 : vector<12x12xf32>
    %102 = arith.truncf %101 : vector<12x12xf32> to vector<12x12xbf16>
    %cst_37 = arith.constant dense<0.000000e+00> : vector<12x8xf32>
    %103 = tpu.matmul %102, %87, %cst_37 {dimension_numbers = #tpu.dot_dimension_numbers<[1], [0], [0], [1], [0, 0, 1, 1], [], []>} : vector<12x12xbf16>, vector<12x8xbf16>, vector<12x8xf32> -> vector<12x8xf32>
    %c0_38 = arith.constant 0 : index
    %c16 = arith.constant 16 : index
    %104 = vector.load %arg13[%c0_38, %c16] : memref<24x32xf32, #tpu.memory_space<vmem>>, vector<12x8xf32>
    tpu.vector_store %arg13[%c0_38, %c16], %103 {strides = array<i32>} : memref<24x32xf32, #tpu.memory_space<vmem>>, vector<12x8xf32>,
    %105 = vector.extract_strided_slice %36 {offsets = [0, 24], sizes = [12, 8], strides = [1, 1]} : vector<24x32xbf16> to vector<12x8xbf16>
    %106 = vector.extract_strided_slice %37 {offsets = [0, 24], sizes = [12, 8], strides = [1, 1]} : vector<24x32xbf16> to vector<12x8xbf16>
    %107 = vector.extract_strided_slice %38 {offsets = [0, 24], sizes = [12, 8], strides = [1, 1]} : vector<24x32xbf16> to vector<12x8xbf16>
    %cst_39 = arith.constant dense<0.000000e+00> : vector<12x12xf32>
    %108 = tpu.matmul %105, %106, %cst_39 {dimension_numbers = #tpu.dot_dimension_numbers<[1], [1], [0], [0], [0, 0, 1, 0], [], []>} : vector<12x8xbf16>, vector<12x8xbf16>, vector<12x12xf32> -> vector<12x12xf32>
    %cst_40 = arith.constant 0.353553385 : f32
    %109 = vector.broadcast %cst_40 : f32 to vector<12x12xf32>
    %110 = arith.mulf %108, %109 : vector<12x12xf32>
    %111 = arith.addf %110, %44 : vector<12x12xf32>
    %cst_41 = arith.constant dense<0xFF800000> : vector<12xf32>
    %112 = vector.multi_reduction <maximumf>, %111, %cst_41 [1] : vector<12x12xf32> to vector<12xf32>
    %113 = vector.shape_cast %112 : vector<12xf32> to vector<12x1xf32>
    %114 = vector.broadcast %113 : vector<12x1xf32> to vector<12x12xf32>
    %115 = arith.subf %111, %114 : vector<12x12xf32>
    %116 = math.exp %115 : vector<12x12xf32>
    %cst_42 = arith.constant dense<0.000000e+00> : vector<12xf32>
    %117 = vector.multi_reduction <add>, %116, %cst_42 [1] : vector<12x12xf32> to vector<12xf32>
    %118 = vector.shape_cast %117 : vector<12xf32> to vector<12x1xf32>
    %119 = tpu.reciprocal %118 {approx = true} : vector<12x1xf32> -> vector<12x1xf32>
    %120 = vector.broadcast %119 : vector<12x1xf32> to vector<12x12xf32>
    %121 = arith.mulf %116, %120 : vector<12x12xf32>
    %122 = arith.truncf %121 : vector<12x12xf32> to vector<12x12xbf16>
    %cst_43 = arith.constant dense<0.000000e+00> : vector<12x8xf32>
    %123 = tpu.matmul %122, %107, %cst_43 {dimension_numbers = #tpu.dot_dimension_numbers<[1], [0], [0], [1], [0, 0, 1, 1], [], []>} : vector<12x12xbf16>, vector<12x8xbf16>, vector<12x8xf32> -> vector<12x8xf32>
    %c0_44 = arith.constant 0 : index
    %c24 = arith.constant 24 : index
    %124 = vector.load %arg13[%c0_44, %c24] : memref<24x32xf32, #tpu.memory_space<vmem>>, vector<12x8xf32>
    tpu.vector_store %arg13[%c0_44, %c24], %123 {strides = array<i32>} : memref<24x32xf32, #tpu.memory_space<vmem>>, vector<12x8xf32>,
    %125 = vector.extract_strided_slice %36 {offsets = [12, 0], sizes = [12, 8], strides = [1, 1]} : vector<24x32xbf16> to vector<12x8xbf16>
    %126 = vector.extract_strided_slice %37 {offsets = [12, 0], sizes = [12, 8], strides = [1, 1]} : vector<24x32xbf16> to vector<12x8xbf16>
    %127 = vector.extract_strided_slice %38 {offsets = [12, 0], sizes = [12, 8], strides = [1, 1]} : vector<24x32xbf16> to vector<12x8xbf16>
    %cst_45 = arith.constant dense<0.000000e+00> : vector<12x12xf32>
    %128 = tpu.matmul %125, %126, %cst_45 {dimension_numbers = #tpu.dot_dimension_numbers<[1], [1], [0], [0], [0, 0, 1, 0], [], []>} : vector<12x8xbf16>, vector<12x8xbf16>, vector<12x12xf32> -> vector<12x12xf32>
    %cst_46 = arith.constant 0.353553385 : f32
    %129 = vector.broadcast %cst_46 : f32 to vector<12x12xf32>
    %130 = arith.mulf %128, %129 : vector<12x12xf32>
    %131 = arith.addf %130, %44 : vector<12x12xf32>
    %cst_47 = arith.constant dense<0xFF800000> : vector<12xf32>
    %132 = vector.multi_reduction <maximumf>, %131, %cst_47 [1] : vector<12x12xf32> to vector<12xf32>
    %133 = vector.shape_cast %132 : vector<12xf32> to vector<12x1xf32>
    %134 = vector.broadcast %133 : vector<12x1xf32> to vector<12x12xf32>
    %135 = arith.subf %131, %134 : vector<12x12xf32>
    %136 = math.exp %135 : vector<12x12xf32>
    %cst_48 = arith.constant dense<0.000000e+00> : vector<12xf32>
    %137 = vector.multi_reduction <add>, %136, %cst_48 [1] : vector<12x12xf32> to vector<12xf32>
    %138 = vector.shape_cast %137 : vector<12xf32> to vector<12x1xf32>
    %139 = tpu.reciprocal %138 {approx = true} : vector<12x1xf32> -> vector<12x1xf32>
    %140 = vector.broadcast %139 : vector<12x1xf32> to vector<12x12xf32>
    %141 = arith.mulf %136, %140 : vector<12x12xf32>
    %142 = arith.truncf %141 : vector<12x12xf32> to vector<12x12xbf16>
    %cst_49 = arith.constant dense<0.000000e+00> : vector<12x8xf32>
    %143 = tpu.matmul %142, %127, %cst_49 {dimension_numbers = #tpu.dot_dimension_numbers<[1], [0], [0], [1], [0, 0, 1, 1], [], []>} : vector<12x12xbf16>, vector<12x8xbf16>, vector<12x8xf32> -> vector<12x8xf32>
    %c12 = arith.constant 12 : index
    %c0_50 = arith.constant 0 : index
    %144 = vector.load %arg13[%c12, %c0_50] : memref<24x32xf32, #tpu.memory_space<vmem>>, vector<12x8xf32>
    tpu.vector_store %arg13[%c12, %c0_50], %143 {strides = array<i32>} : memref<24x32xf32, #tpu.memory_space<vmem>>, vector<12x8xf32>,
    %145 = vector.extract_strided_slice %36 {offsets = [12, 8], sizes = [12, 8], strides = [1, 1]} : vector<24x32xbf16> to vector<12x8xbf16>
    %146 = vector.extract_strided_slice %37 {offsets = [12, 8], sizes = [12, 8], strides = [1, 1]} : vector<24x32xbf16> to vector<12x8xbf16>
    %147 = vector.extract_strided_slice %38 {offsets = [12, 8], sizes = [12, 8], strides = [1, 1]} : vector<24x32xbf16> to vector<12x8xbf16>
    %cst_51 = arith.constant dense<0.000000e+00> : vector<12x12xf32>
    %148 = tpu.matmul %145, %146, %cst_51 {dimension_numbers = #tpu.dot_dimension_numbers<[1], [1], [0], [0], [0, 0, 1, 0], [], []>} : vector<12x8xbf16>, vector<12x8xbf16>, vector<12x12xf32> -> vector<12x12xf32>
    %cst_52 = arith.constant 0.353553385 : f32
    %149 = vector.broadcast %cst_52 : f32 to vector<12x12xf32>
    %150 = arith.mulf %148, %149 : vector<12x12xf32>
    %151 = arith.addf %150, %44 : vector<12x12xf32>
    %cst_53 = arith.constant dense<0xFF800000> : vector<12xf32>
    %152 = vector.multi_reduction <maximumf>, %151, %cst_53 [1] : vector<12x12xf32> to vector<12xf32>
    %153 = vector.shape_cast %152 : vector<12xf32> to vector<12x1xf32>
    %154 = vector.broadcast %153 : vector<12x1xf32> to vector<12x12xf32>
    %155 = arith.subf %151, %154 : vector<12x12xf32>
    %156 = math.exp %155 : vector<12x12xf32>
    %cst_54 = arith.constant dense<0.000000e+00> : vector<12xf32>
    %157 = vector.multi_reduction <add>, %156, %cst_54 [1] : vector<12x12xf32> to vector<12xf32>
    %158 = vector.shape_cast %157 : vector<12xf32> to vector<12x1xf32>
    %159 = tpu.reciprocal %158 {approx = true} : vector<12x1xf32> -> vector<12x1xf32>
    %160 = vector.broadcast %159 : vector<12x1xf32> to vector<12x12xf32>
    %161 = arith.mulf %156, %160 : vector<12x12xf32>
    %162 = arith.truncf %161 : vector<12x12xf32> to vector<12x12xbf16>
    %cst_55 = arith.constant dense<0.000000e+00> : vector<12x8xf32>
    %163 = tpu.matmul %162, %147, %cst_55 {dimension_numbers = #tpu.dot_dimension_numbers<[1], [0], [0], [1], [0, 0, 1, 1], [], []>} : vector<12x12xbf16>, vector<12x8xbf16>, vector<12x8xf32> -> vector<12x8xf32>
    %c12_56 = arith.constant 12 : index
    %c8_57 = arith.constant 8 : index
    %164 = vector.load %arg13[%c12_56, %c8_57] : memref<24x32xf32, #tpu.memory_space<vmem>>, vector<12x8xf32>
    tpu.vector_store %arg13[%c12_56, %c8_57], %163 {strides = array<i32>} : memref<24x32xf32, #tpu.memory_space<vmem>>, vector<12x8xf32>,
    %165 = vector.extract_strided_slice %36 {offsets = [12, 16], sizes = [12, 8], strides = [1, 1]} : vector<24x32xbf16> to vector<12x8xbf16>
    %166 = vector.extract_strided_slice %37 {offsets = [12, 16], sizes = [12, 8], strides = [1, 1]} : vector<24x32xbf16> to vector<12x8xbf16>
    %167 = vector.extract_strided_slice %38 {offsets = [12, 16], sizes = [12, 8], strides = [1, 1]} : vector<24x32xbf16> to vector<12x8xbf16>
    %cst_58 = arith.constant dense<0.000000e+00> : vector<12x12xf32>
    %168 = tpu.matmul %165, %166, %cst_58 {dimension_numbers = #tpu.dot_dimension_numbers<[1], [1], [0], [0], [0, 0, 1, 0], [], []>} : vector<12x8xbf16>, vector<12x8xbf16>, vector<12x12xf32> -> vector<12x12xf32>
    %cst_59 = arith.constant 0.353553385 : f32
    %169 = vector.broadcast %cst_59 : f32 to vector<12x12xf32>
    %170 = arith.mulf %168, %169 : vector<12x12xf32>
    %171 = arith.addf %170, %44 : vector<12x12xf32>
    %cst_60 = arith.constant dense<0xFF800000> : vector<12xf32>
    %172 = vector.multi_reduction <maximumf>, %171, %cst_60 [1] : vector<12x12xf32> to vector<12xf32>
    %173 = vector.shape_cast %172 : vector<12xf32> to vector<12x1xf32>
    %174 = vector.broadcast %173 : vector<12x1xf32> to vector<12x12xf32>
    %175 = arith.subf %171, %174 : vector<12x12xf32>
    %176 = math.exp %175 : vector<12x12xf32>
    %cst_61 = arith.constant dense<0.000000e+00> : vector<12xf32>
    %177 = vector.multi_reduction <add>, %176, %cst_61 [1] : vector<12x12xf32> to vector<12xf32>
    %178 = vector.shape_cast %177 : vector<12xf32> to vector<12x1xf32>
    %179 = tpu.reciprocal %178 {approx = true} : vector<12x1xf32> -> vector<12x1xf32>
    %180 = vector.broadcast %179 : vector<12x1xf32> to vector<12x12xf32>
    %181 = arith.mulf %176, %180 : vector<12x12xf32>
    %182 = arith.truncf %181 : vector<12x12xf32> to vector<12x12xbf16>
    %cst_62 = arith.constant dense<0.000000e+00> : vector<12x8xf32>
    %183 = tpu.matmul %182, %167, %cst_62 {dimension_numbers = #tpu.dot_dimension_numbers<[1], [0], [0], [1], [0, 0, 1, 1], [], []>} : vector<12x12xbf16>, vector<12x8xbf16>, vector<12x8xf32> -> vector<12x8xf32>
    %c12_63 = arith.constant 12 : index
    %c16_64 = arith.constant 16 : index
    %184 = vector.load %arg13[%c12_63, %c16_64] : memref<24x32xf32, #tpu.memory_space<vmem>>, vector<12x8xf32>
    tpu.vector_store %arg13[%c12_63, %c16_64], %183 {strides = array<i32>} : memref<24x32xf32, #tpu.memory_space<vmem>>, vector<12x8xf32>,
    %185 = vector.extract_strided_slice %36 {offsets = [12, 24], sizes = [12, 8], strides = [1, 1]} : vector<24x32xbf16> to vector<12x8xbf16>
    %186 = vector.extract_strided_slice %37 {offsets = [12, 24], sizes = [12, 8], strides = [1, 1]} : vector<24x32xbf16> to vector<12x8xbf16>
    %187 = vector.extract_strided_slice %38 {offsets = [12, 24], sizes = [12, 8], strides = [1, 1]} : vector<24x32xbf16> to vector<12x8xbf16>
    %cst_65 = arith.constant dense<0.000000e+00> : vector<12x12xf32>
    %188 = tpu.matmul %185, %186, %cst_65 {dimension_numbers = #tpu.dot_dimension_numbers<[1], [1], [0], [0], [0, 0, 1, 0], [], []>} : vector<12x8xbf16>, vector<12x8xbf16>, vector<12x12xf32> -> vector<12x12xf32>
    %cst_66 = arith.constant 0.353553385 : f32
    %189 = vector.broadcast %cst_66 : f32 to vector<12x12xf32>
    %190 = arith.mulf %188, %189 : vector<12x12xf32>
    %191 = arith.addf %190, %44 : vector<12x12xf32>
    %cst_67 = arith.constant dense<0xFF800000> : vector<12xf32>
    %192 = vector.multi_reduction <maximumf>, %191, %cst_67 [1] : vector<12x12xf32> to vector<12xf32>
    %193 = vector.shape_cast %192 : vector<12xf32> to vector<12x1xf32>
    %194 = vector.broadcast %193 : vector<12x1xf32> to vector<12x12xf32>
    %195 = arith.subf %191, %194 : vector<12x12xf32>
    %196 = math.exp %195 : vector<12x12xf32>
    %cst_68 = arith.constant dense<0.000000e+00> : vector<12xf32>
    %197 = vector.multi_reduction <add>, %196, %cst_68 [1] : vector<12x12xf32> to vector<12xf32>
    %198 = vector.shape_cast %197 : vector<12xf32> to vector<12x1xf32>
    %199 = tpu.reciprocal %198 {approx = true} : vector<12x1xf32> -> vector<12x1xf32>
    %200 = vector.broadcast %199 : vector<12x1xf32> to vector<12x12xf32>
    %201 = arith.mulf %196, %200 : vector<12x12xf32>
    %202 = arith.truncf %201 : vector<12x12xf32> to vector<12x12xbf16>
    %cst_69 = arith.constant dense<0.000000e+00> : vector<12x8xf32>
    %203 = tpu.matmul %202, %187, %cst_69 {dimension_numbers = #tpu.dot_dimension_numbers<[1], [0], [0], [1], [0, 0, 1, 1], [], []>} : vector<12x12xbf16>, vector<12x8xbf16>, vector<12x8xf32> -> vector<12x8xf32>
    %c12_70 = arith.constant 12 : index
    %c24_71 = arith.constant 24 : index
    %204 = vector.load %arg13[%c12_70, %c24_71] : memref<24x32xf32, #tpu.memory_space<vmem>>, vector<12x8xf32>
    tpu.vector_store %arg13[%c12_70, %c24_71], %203 {strides = array<i32>} : memref<24x32xf32, #tpu.memory_space<vmem>>, vector<12x8xf32>,
    %c0_72 = arith.constant 0 : index
    %c0_73 = arith.constant 0 : index
    %205 = vector.load %arg13[%c0_72, %c0_73] : memref<24x32xf32, #tpu.memory_space<vmem>>, vector<24x32xf32>
    %206 = arith.truncf %205 : vector<24x32xf32> to vector<24x32xbf16>
    %c0_74 = arith.constant 0 : index
    %c0_75 = arith.constant 0 : index
    %207 = vector.load %arg6[%c0_74, %c0_75] : memref<32x32xbf16, #tpu.memory_space<vmem>>, vector<32x32xbf16>
    %cst_76 = arith.constant dense<0.000000e+00> : vector<24x32xf32>
    %208 = tpu.matmul %206, %207, %cst_76 {dimension_numbers = #tpu.dot_dimension_numbers<[1], [0], [0], [1], [0, 0, 1, 1], [], []>} : vector<24x32xbf16>, vector<32x32xbf16>, vector<24x32xf32> -> vector<24x32xf32>
    %209 = arith.addf %0, %208 : vector<24x32xf32>
    %c0_77 = arith.constant 0 : index
    %c0_78 = arith.constant 0 : index
    %210 = vector.load %arg7[%c0_77, %c0_78] : memref<1x32xf32, #tpu.memory_space<vmem>>, vector<1x32xf32>
    %211 = arith.mulf %209, %209 : vector<24x32xf32>
    %cst_79 = arith.constant dense<0.000000e+00> : vector<24xf32>
    %212 = vector.multi_reduction <add>, %211, %cst_79 [1] : vector<24x32xf32> to vector<24xf32>
    %213 = vector.shape_cast %212 : vector<24xf32> to vector<24x1xf32>
    %cst_80 = arith.constant 3.200000e+01 : f32
    %214 = vector.broadcast %cst_80 : f32 to vector<24x1xf32>
    %215 = arith.divf %213, %214 : vector<24x1xf32>
    %cst_81 = arith.constant 9.99999974E-6 : f32
    %216 = vector.broadcast %cst_81 : f32 to vector<24x1xf32>
    %217 = arith.addf %215, %216 : vector<24x1xf32>
    %218 = math.rsqrt %217 : vector<24x1xf32>
    %219 = vector.broadcast %218 : vector<24x1xf32> to vector<24x32xf32>
    %220 = arith.mulf %209, %219 : vector<24x32xf32>
    %221 = vector.broadcast %210 : vector<1x32xf32> to vector<24x32xf32>
    %222 = arith.mulf %220, %221 : vector<24x32xf32>
    %223 = arith.truncf %222 : vector<24x32xf32> to vector<24x32xbf16>
    %c0_82 = arith.constant 0 : index
    %c0_83 = arith.constant 0 : index
    %224 = vector.load %arg8[%c0_82, %c0_83] : memref<32x128xbf16, #tpu.memory_space<vmem>>, vector<32x128xbf16>
    %cst_84 = arith.constant dense<0.000000e+00> : vector<24x128xf32>
    %225 = tpu.matmul %223, %224, %cst_84 {dimension_numbers = #tpu.dot_dimension_numbers<[1], [0], [0], [1], [0, 0, 1, 1], [], []>} : vector<24x32xbf16>, vector<32x128xbf16>, vector<24x128xf32> -> vector<24x128xf32>
    %226 = vector.extract_strided_slice %225 {offsets = [0, 0], sizes = [24, 64], strides = [1, 1]} : vector<24x128xf32> to vector<24x64xf32>
    %227 = vector.extract_strided_slice %225 {offsets = [0, 64], sizes = [24, 64], strides = [1, 1]} : vector<24x128xf32> to vector<24x64xf32>
    %cst_85 = arith.constant 5.000000e-01 : f32
    %228 = vector.broadcast %cst_85 : f32 to vector<24x64xf32>
    %229 = arith.mulf %228, %226 : vector<24x64xf32>
    %230 = math.tanh %229 : vector<24x64xf32>
    %cst_86 = arith.constant 1.000000e+00 : f32
    %231 = vector.broadcast %cst_86 : f32 to vector<24x64xf32>
    %232 = arith.addf %231, %230 : vector<24x64xf32>
    %cst_87 = arith.constant 5.000000e-01 : f32
    %233 = vector.broadcast %cst_87 : f32 to vector<24x64xf32>
    %234 = arith.mulf %233, %232 : vector<24x64xf32>
    %235 = arith.mulf %226, %234 : vector<24x64xf32>
    %236 = arith.mulf %235, %227 : vector<24x64xf32>
    %237 = arith.truncf %236 : vector<24x64xf32> to vector<24x64xbf16>
    %c0_88 = arith.constant 0 : index
    %c0_89 = arith.constant 0 : index
    %238 = vector.load %arg9[%c0_88, %c0_89] : memref<64x32xbf16, #tpu.memory_space<vmem>>, vector<64x32xbf16>
    %cst_90 = arith.constant dense<0.000000e+00> : vector<24x32xf32>
    %239 = tpu.matmul %237, %238, %cst_90 {dimension_numbers = #tpu.dot_dimension_numbers<[1], [0], [0], [1], [0, 0, 1, 1], [], []>} : vector<24x64xbf16>, vector<64x32xbf16>, vector<24x32xf32> -> vector<24x32xf32>
    %240 = arith.addf %209, %239 : vector<24x32xf32>
    %c0_91 = arith.constant 0 : index
    %c0_92 = arith.constant 0 : index
    %241 = vector.load %arg10[%c0_91, %c0_92] : memref<1x32xf32, #tpu.memory_space<vmem>>, vector<1x32xf32>
    %242 = arith.mulf %240, %240 : vector<24x32xf32>
    %cst_93 = arith.constant dense<0.000000e+00> : vector<24xf32>
    %243 = vector.multi_reduction <add>, %242, %cst_93 [1] : vector<24x32xf32> to vector<24xf32>
    %244 = vector.shape_cast %243 : vector<24xf32> to vector<24x1xf32>
    %cst_94 = arith.constant 3.200000e+01 : f32
    %245 = vector.broadcast %cst_94 : f32 to vector<24x1xf32>
    %246 = arith.divf %244, %245 : vector<24x1xf32>
    %cst_95 = arith.constant 9.99999974E-6 : f32
    %247 = vector.broadcast %cst_95 : f32 to vector<24x1xf32>
    %248 = arith.addf %246, %247 : vector<24x1xf32>
    %249 = math.rsqrt %248 : vector<24x1xf32>
    %250 = vector.broadcast %249 : vector<24x1xf32> to vector<24x32xf32>
    %251 = arith.mulf %240, %250 : vector<24x32xf32>
    %252 = vector.broadcast %241 : vector<1x32xf32> to vector<24x32xf32>
    %253 = arith.mulf %251, %252 : vector<24x32xf32>
    %254 = arith.truncf %253 : vector<24x32xf32> to vector<24x32xbf16>
    %c0_96 = arith.constant 0 : index
    %c0_97 = arith.constant 0 : index
    %255 = vector.load %arg11[%c0_96, %c0_97] : memref<32x128xbf16, #tpu.memory_space<vmem>>, vector<32x128xbf16>
    %cst_98 = arith.constant dense<0.000000e+00> : vector<24x128xf32>
    %256 = tpu.matmul %254, %255, %cst_98 {dimension_numbers = #tpu.dot_dimension_numbers<[1], [0], [0], [1], [0, 0, 1, 1], [], []>} : vector<24x32xbf16>, vector<32x128xbf16>, vector<24x128xf32> -> vector<24x128xf32>
    %c0_99 = arith.constant 0 : index
    %c0_100 = arith.constant 0 : index
    %257 = vector.load %arg12[%c0_99, %c0_100] : memref<24x128xf32, #tpu.memory_space<vmem>>, vector<24x128xf32>
    tpu.vector_store %arg12[%c0_99, %c0_100], %256 {strides = array<i32>} : memref<24x128xf32, #tpu.memory_space<vmem>>, vector<24x128xf32>,
    return
  }
}

</mosaic_0001>

<llo_original>
// kernel: llava_forward.2
$region0: #{llava_forward.2}
  #allocation0 [shape = 'u32[]', space=smem, size = 0x4, offset = 0x4, fixed_abs, tag = 'smem constant byte address 0x4 - core index']
  #allocation1 [shape = 'u32[144,128]{1,0:T(1,128)}', space=vmem, size = 0x12000, scoped, tag = 'internal scratch']
  #allocation2 [shape = 'f32[8,32]{1,0:T(8,128)}', space=vmem, size = 0x1000, scoped, tag = 'scratch operand']
  %s0 = inlined_call_operand.vmem [shape: f32[8,192], index: 0, kind: input, shape index: {}]
  %s1 = inlined_call_operand.vmem [shape: f32[4,32], index: 1, kind: input, shape index: {}]
  %s2 = inlined_call_operand.vmem [shape: bf16[192,32], index: 2, kind: input, shape index: {}]
  %s3 = inlined_call_operand.vmem [shape: f32[1,32], index: 3, kind: input, shape index: {}]
  %s4 = inlined_call_operand.vmem [shape: f32[1,32], index: 4, kind: input, shape index: {}]
  %s5 = inlined_call_operand.vmem [shape: f32[1,32], index: 5, kind: input, shape index: {}]
  %s6 = inlined_call_operand.vmem [shape: f32[1,32], index: 6, kind: input, shape index: {}]
  %s7 = inlined_call_operand.vmem [shape: f32[1,32], index: 7, kind: input, shape index: {}]
  %s8 = inlined_call_operand.vmem [shape: bf16[32,96], index: 8, kind: input, shape index: {}]
  %s9 = inlined_call_operand.vmem [shape: f32[1,96], index: 9, kind: input, shape index: {}]
  %s10 = inlined_call_operand.vmem [shape: bf16[32,32], index: 10, kind: input, shape index: {}]
  %s11 = inlined_call_operand.vmem [shape: f32[1,32], index: 11, kind: input, shape index: {}]
  %s12 = inlined_call_operand.vmem [shape: f32[1,32], index: 12, kind: input, shape index: {}]
  %s13 = inlined_call_operand.vmem [shape: f32[1,32], index: 13, kind: input, shape index: {}]
  %s14 = inlined_call_operand.vmem [shape: bf16[32,64], index: 14, kind: input, shape index: {}]
  %s15 = inlined_call_operand.vmem [shape: f32[1,64], index: 15, kind: input, shape index: {}]
  %s16 = inlined_call_operand.vmem [shape: bf16[64,32], index: 16, kind: input, shape index: {}]
  %s17 = inlined_call_operand.vmem [shape: f32[1,32], index: 17, kind: input, shape index: {}]
  %s18 = inlined_call_operand.vmem [shape: bf16[32,32], index: 18, kind: input, shape index: {}]
  %s19 = inlined_call_operand.vmem [shape: f32[1,32], index: 19, kind: input, shape index: {}]
  %s20 = inlined_call_operand.vmem [shape: bf16[32,128], index: 20, kind: input, shape index: {}]
  %s21 = inlined_call_operand.vmem [shape: f32[1,128], index: 21, kind: input, shape index: {}]
  %s22 = inlined_call_operand.vmem [shape: f32[8,128], index: 22, kind: output, shape index: {}]
  %s23 = sld [smem:[#allocation0]]
  $region98: #{llava_forward.2} parent=0
    _
  %s25 = ssub.s32 1, %s23
  %s26 = scalar_select 0, %s25, %s23
  // Predicated region
  $region2: #{llava_forward.2} parent=0 // pred_check
    _
  $region3: #{llava_forward.2} parent=0 // pred_check_branch
    %28 = sbr.rel (0) target = $region5
  $region4: #{llava_forward.2} parent=0 // pred_region
    _
  $region5: #{llava_forward.2} parent=0 // pred_fallthru
    _
  // Predicated region
  $region6: #{llava_forward.2} parent=0 // pred_check
    _
  $region7: #{llava_forward.2} parent=0 // pred_check_branch
    %30 = sbr.rel (0) target = $region9
  $region8: #{llava_forward.2} parent=0 // pred_region
    _
  $region9: #{llava_forward.2} parent=0 // pred_fallthru
    _
  // Predicated region
  $region10: #{llava_forward.2} parent=0 // pred_check
    _
  $region11: #{llava_forward.2} parent=0 // pred_check_branch
    %32 = sbr.rel (0) target = $region13
  $region12: #{llava_forward.2} parent=0 // pred_region
    _
  $region13: #{llava_forward.2} parent=0 // pred_fallthru
    _
  // Predicated region
  $region14: #{llava_forward.2} parent=0 // pred_check
    _
  $region15: #{llava_forward.2} parent=0 // pred_check_branch
    %34 = sbr.rel (0) target = $region17
  $region16: #{llava_forward.2} parent=0 // pred_region
    _
  $region17: #{llava_forward.2} parent=0 // pred_fallthru
    _
  // Predicated region
  $region18: #{llava_forward.2} parent=0 // pred_check
    _
  $region19: #{llava_forward.2} parent=0 // pred_check_branch
    %36 = sbr.rel (0) target = $region21
  $region20: #{llava_forward.2} parent=0 // pred_region
    _
  $region21: #{llava_forward.2} parent=0 // pred_fallthru
    _
  // Predicated region
  $region22: #{llava_forward.2} parent=0 // pred_check
    _
  $region23: #{llava_forward.2} parent=0 // pred_check_branch
    %38 = sbr.rel (0) target = $region25
  $region24: #{llava_forward.2} parent=0 // pred_region
    _
  $region25: #{llava_forward.2} parent=0 // pred_fallthru
    _
  // Predicated region
  $region26: #{llava_forward.2} parent=0 // pred_check
    _
  $region27: #{llava_forward.2} parent=0 // pred_check_branch
    %40 = sbr.rel (0) target = $region29
  $region28: #{llava_forward.2} parent=0 // pred_region
    _
  $region29: #{llava_forward.2} parent=0 // pred_fallthru
    _
  // Predicated region
  $region30: #{llava_forward.2} parent=0 // pred_check
    _
  $region31: #{llava_forward.2} parent=0 // pred_check_branch
    %42 = sbr.rel (0) target = $region33
  $region32: #{llava_forward.2} parent=0 // pred_region
    _
  $region33: #{llava_forward.2} parent=0 // pred_fallthru
    _
  // Predicated region
  $region34: #{llava_forward.2} parent=0 // pred_check
    _
  $region35: #{llava_forward.2} parent=0 // pred_check_branch
    %44 = sbr.rel (0) target = $region37
  $region36: #{llava_forward.2} parent=0 // pred_region
    _
  $region37: #{llava_forward.2} parent=0 // pred_fallthru
    _
  // Predicated region
  $region38: #{llava_forward.2} parent=0 // pred_check
    _
  $region39: #{llava_forward.2} parent=0 // pred_check_branch
    %46 = sbr.rel (0) target = $region41
  $region40: #{llava_forward.2} parent=0 // pred_region
    _
  $region41: #{llava_forward.2} parent=0 // pred_fallthru
    _
  // Predicated region
  $region42: #{llava_forward.2} parent=0 // pred_check
    _
  $region43: #{llava_forward.2} parent=0 // pred_check_branch
    %48 = sbr.rel (0) target = $region45
  $region44: #{llava_forward.2} parent=0 // pred_region
    _
  $region45: #{llava_forward.2} parent=0 // pred_fallthru
    _
  // Predicated region
  $region46: #{llava_forward.2} parent=0 // pred_check
    _
  $region47: #{llava_forward.2} parent=0 // pred_check_branch
    %50 = sbr.rel (0) target = $region49
  $region48: #{llava_forward.2} parent=0 // pred_region
    _
  $region49: #{llava_forward.2} parent=0 // pred_fallthru
    _
  // Predicated region
  $region50: #{llava_forward.2} parent=0 // pred_check
    _
  $region51: #{llava_forward.2} parent=0 // pred_check_branch
    %52 = sbr.rel (0) target = $region53
  $region52: #{llava_forward.2} parent=0 // pred_region
    _
  $region53: #{llava_forward.2} parent=0 // pred_fallthru
    _
  // Predicated region
  $region54: #{llava_forward.2} parent=0 // pred_check
    _
  $region55: #{llava_forward.2} parent=0 // pred_check_branch
    %54 = sbr.rel (0) target = $region57
  $region56: #{llava_forward.2} parent=0 // pred_region
    _
  $region57: #{llava_forward.2} parent=0 // pred_fallthru
    _
  // Predicated region
  $region58: #{llava_forward.2} parent=0 // pred_check
    _
  $region59: #{llava_forward.2} parent=0 // pred_check_branch
    %56 = sbr.rel (0) target = $region61
  $region60: #{llava_forward.2} parent=0 // pred_region
    _
  $region61: #{llava_forward.2} parent=0 // pred_fallthru
    _
  // Predicated region
  $region62: #{llava_forward.2} parent=0 // pred_check
    _
  $region63: #{llava_forward.2} parent=0 // pred_check_branch
    %58 = sbr.rel (0) target = $region65
  $region64: #{llava_forward.2} parent=0 // pred_region
    _
  $region65: #{llava_forward.2} parent=0 // pred_fallthru
    _
  // Predicated region
  $region66: #{llava_forward.2} parent=0 // pred_check
    _
  $region67: #{llava_forward.2} parent=0 // pred_check_branch
    %60 = sbr.rel (0) target = $region69
  $region68: #{llava_forward.2} parent=0 // pred_region
    _
  $region69: #{llava_forward.2} parent=0 // pred_fallthru
    _
  // Predicated region
  $region70: #{llava_forward.2} parent=0 // pred_check
    _
  $region71: #{llava_forward.2} parent=0 // pred_check_branch
    %62 = sbr.rel (0) target = $region73
  $region72: #{llava_forward.2} parent=0 // pred_region
    _
  $region73: #{llava_forward.2} parent=0 // pred_fallthru
    _
  // Predicated region
  $region74: #{llava_forward.2} parent=0 // pred_check
    _
  $region75: #{llava_forward.2} parent=0 // pred_check_branch
    %64 = sbr.rel (0) target = $region77
  $region76: #{llava_forward.2} parent=0 // pred_region
    _
  $region77: #{llava_forward.2} parent=0 // pred_fallthru
    _
  // Predicated region
  $region78: #{llava_forward.2} parent=0 // pred_check
    _
  $region79: #{llava_forward.2} parent=0 // pred_check_branch
    %66 = sbr.rel (0) target = $region81
  $region80: #{llava_forward.2} parent=0 // pred_region
    _
  $region81: #{llava_forward.2} parent=0 // pred_fallthru
    _
  // Predicated region
  $region82: #{llava_forward.2} parent=0 // pred_check
    _
  $region83: #{llava_forward.2} parent=0 // pred_check_branch
    %68 = sbr.rel (0) target = $region85
  $region84: #{llava_forward.2} parent=0 // pred_region
    _
  $region85: #{llava_forward.2} parent=0 // pred_fallthru
    _
  // Predicated region
  $region86: #{llava_forward.2} parent=0 // pred_check
    _
  $region87: #{llava_forward.2} parent=0 // pred_check_branch
    %70 = sbr.rel (0) target = $region89
  $region88: #{llava_forward.2} parent=0 // pred_region
    _
  $region89: #{llava_forward.2} parent=0 // pred_fallthru
    _
  %v72 = vld [vmem:[%s0] sm:$0xff]
  %v73 = vld [vmem:[%s0 + $0x8] sm:$0xff]
  %v74 = vpack.c.bf16 %v72, %v72
  %v75 = vpack.c.bf16 %v73, %v73
  %v76 = vld [vmem:[%s2] sm:$0xf]
  %v77 = vld [vmem:[%s2 + $0x4] sm:$0xf]
  %v78 = vld [vmem:[%s2 + $0x8] sm:$0xf]
  %v79 = vld [vmem:[%s2 + $0xc] sm:$0xf]
  %v80 = vld [vmem:[%s2 + $0x10] sm:$0xf]
  %v81 = vld [vmem:[%s2 + $0x14] sm:$0xf]
  %v82 = vld [vmem:[%s2 + $0x18] sm:$0xf]
  %v83 = vld [vmem:[%s2 + $0x1c] sm:$0xf]
  %v84 = vld [vmem:[%s2 + $0x20] sm:$0xf]
  %v85 = vld [vmem:[%s2 + $0x24] sm:$0xf]
  %v86 = vld [vmem:[%s2 + $0x28] sm:$0xf]
  %v87 = vld [vmem:[%s2 + $0x2c] sm:$0xf]
  %v88 = vld [vmem:[%s2 + $0x30] sm:$0xf]
  %v89 = vld [vmem:[%s2 + $0x34] sm:$0xf]
  %v90 = vld [vmem:[%s2 + $0x38] sm:$0xf]
  %v91 = vld [vmem:[%s2 + $0x3c] sm:$0xf]
  %v92 = vld [vmem:[%s2 + $0x40] sm:$0xf]
  %v93 = vld [vmem:[%s2 + $0x44] sm:$0xf]
  %v94 = vld [vmem:[%s2 + $0x48] sm:$0xf]
  %v95 = vld [vmem:[%s2 + $0x4c] sm:$0xf]
  %v96 = vld [vmem:[%s2 + $0x50] sm:$0xf]
  %v97 = vld [vmem:[%s2 + $0x54] sm:$0xf]
  %v98 = vld [vmem:[%s2 + $0x58] sm:$0xf]
  %v99 = vld [vmem:[%s2 + $0x5c] sm:$0xf]
  %v100 = vld [vmem:[%s3] sm:$0x1]
  %v102 = vlaneseq
  %v103 = vshrl.u32 %v102, 7
  %v104 = vsub.s32 0, %v103
  %v105 = vrot.slane %v100, %v104
  %v131 = vunpack.c.l.b16 %v76
  %v132 = vunpack.c.l.b16 %v77
  %v133 = vunpack.c.l.b16 %v78
  %v134 = vunpack.c.l.b16 %v79
  %v135 = vunpack.c.l.b16 %v80
  %v136 = vunpack.c.l.b16 %v81
  %v137 = vunpack.c.l.b16 %v82
  %v138 = vunpack.c.l.b16 %v83
  %v139 = vunpack.c.l.b16 %v84
  %v140 = vunpack.c.l.b16 %v85
  %v141 = vunpack.c.l.b16 %v86
  %v142 = vunpack.c.l.b16 %v87
  %v143 = vunpack.c.l.b16 %v88
  %v144 = vunpack.c.l.b16 %v89
  %v145 = vunpack.c.l.b16 %v90
  %v146 = vunpack.c.l.b16 %v91
  %v147 = vunpack.c.l.b16 %v92
  %v148 = vunpack.c.l.b16 %v93
  %v149 = vunpack.c.l.b16 %v94
  %v150 = vunpack.c.l.b16 %v95
  %v151 = vunpack.c.l.b16 %v96
  %v152 = vunpack.c.l.b16 %v97
  %v153 = vunpack.c.l.b16 %v98
  %v154 = vunpack.c.l.b16 %v99
  %v155 = vpack.c.b16 %v132, %v131
  %v156 = vpack.c.b16 %v134, %v133
  %v157 = vpack.c.b16 %v136, %v135
  %v158 = vpack.c.b16 %v138, %v137
  %v159 = vpack.c.b16 %v140, %v139
  %v160 = vpack.c.b16 %v142, %v141
  %v161 = vpack.c.b16 %v144, %v143
  %v162 = vpack.c.b16 %v146, %v145
  %v163 = vpack.c.b16 %v148, %v147
  %v164 = vpack.c.b16 %v150, %v149
  %v165 = vpack.c.b16 %v152, %v151
  %v166 = vpack.c.b16 %v154, %v153
  %vm179 = vcmask 523264
  %v181 = vsel %vm179, %v75, 0
  %183 = vmatprep.subr.bf16.mxu0 0
  %184 = vmatpush1.bf16.msra.mxu0 %v155
  %185 = vmatprep.subr.bf16.mxu0 0
  %186 = vmatpush1.bf16.msra.mxu0 %v156
  %187 = vmatprep.subr.bf16.mxu0 0
  %188 = vmatpush1.bf16.msra.mxu0 %v157
  %189 = vmatprep.subr.bf16.mxu0 0
  %190 = vmatpush1.bf16.msra.mxu0 %v158
  %191 = vmatprep.subr.bf16.mxu0 0
  %192 = vmatpush1.bf16.msra.mxu0 %v159
  %193 = vmatprep.subr.bf16.mxu0 0
  %194 = vmatpush1.bf16.msra.mxu0 %v160
  %195 = vmatprep.subr.bf16.mxu0 0
  %196 = vmatpush1.bf16.msra.mxu0 %v161
  %197 = vmatprep.subr.bf16.mxu0 0
  %198 = vmatpush1.bf16.msra.mxu0 %v162
  %199 = vmatprep.subr.bf16.mxu0 0
  %200 = vmatpush1.bf16.msra.mxu0 %v163
  %201 = vmatprep.subr.bf16.mxu0 0
  %202 = vmatpush1.bf16.msra.mxu0 %v164
  %203 = vmatprep.subr.bf16.mxu0 0
  %204 = vmatpush1.bf16.msra.mxu0 %v165
  %205 = vmatprep.subr.bf16.mxu0 0
  %206 = vmatpush1.bf16.msra.mxu0 %v166
  %207 = vmatprep.subr.bf16.mxu0 0
  %208 = vmatpush1.bf16.msra.mxu0 0
  %209 = vmatprep.subr.bf16.mxu0 0
  %210 = vmatpush1.bf16.msra.mxu0 0
  %211 = vmatprep.subr.bf16.mxu0 0
  %212 = vmatpush1.bf16.msra.mxu0 0
  %213 = vmatprep.subr.bf16.mxu0 0
  %214 = vmatpush1.bf16.msra.mxu0 0
  %215 = vmatprep.mubr.bf16.mxu0 %v181
  %216 = vmatmul.mubr.bf16.gmra.mrb[0].mxu0 %v74
  %v217 = vpop.f32.mrb[0].mxu0
  %v218 = vadd.f32 %v105, %v217
  %v219 = vpop.f32.mrb[0].mxu0
  %v220 = vpop.f32.mrb[0].mxu0
  %v221 = vpop.f32.mrb[0].mxu0
  %222 = vdwg.mxu0
  %v223 = vld [vmem:[%s1] sm:$0xf]
  %v225 = vrot.slane %v223, 4
  %vm227 = vcmask 1043456
  %v228 = vsel %vm227, %v223, %v225
  %v229 = vadd.f32 %v218, %v228
  %v230 = vld [vmem:[%s4] sm:$0x1]
  %v231 = vld [vmem:[%s5] sm:$0x1]
  %vm232 = vcmask 261120
  %v233 = vsel %vm232, %v229, 0.0
  %234 = vadd.xlane.f32.xlu0 %v233
  %v235 = vpop.xlane.xlu0 %234
  %v236 = vrcp.pop 32.0
  %v237 = vmul.f32 %v235, %v236
  %v238 = vsub.f32 %v229, %v237
  %v239 = vmul.f32 %v238, %v238
  %v240 = vsel %vm232, %v239, 0.0
  %241 = vadd.xlane.f32.xlu0 %v240
  %v242 = vpop.xlane.xlu0 %241
  %v243 = vmul.f32 %v242, %v236
  %v244 = vadd.f32 %v243, 1e-05
  %v245 = vrsqrt.pop %v244
  %v246 = vmul.f32 %v238, %v245
  %v248 = vlaneseq
  %v249 = vshrl.u32 %v248, 7
  %v250 = vsub.s32 0, %v249
  %v251 = vrot.slane %v230, %v250
  %v253 = vmul.f32 %v246, %v251
  %v255 = vlaneseq
  %v256 = vshrl.u32 %v255, 7
  %v257 = vsub.s32 0, %v256
  %v258 = vrot.slane %v231, %v257
  %v260 = vadd.f32 %v253, %v258
  %v261 = vld [vmem:[%s6] sm:$0x1]
  %v262 = vld [vmem:[%s7] sm:$0x1]
  %v263 = vsel %vm232, %v260, 0.0
  %264 = vadd.xlane.f32.xlu0 %v263
  %v265 = vpop.xlane.xlu0 %264
  %v266 = vmul.f32 %v265, %v236
  %v267 = vsub.f32 %v260, %v266
  %v268 = vmul.f32 %v267, %v267
  %v269 = vsel %vm232, %v268, 0.0
  %270 = vadd.xlane.f32.xlu0 %v269
  %v271 = vpop.xlane.xlu0 %270
  %v272 = vmul.f32 %v271, %v236
  %v273 = vadd.f32 %v272, 1e-05
  %v274 = vrsqrt.pop %v273
  %v275 = vmul.f32 %v267, %v274
  %v277 = vlaneseq
  %v278 = vshrl.u32 %v277, 7
  %v279 = vsub.s32 0, %v278
  %v280 = vrot.slane %v261, %v279
  %v282 = vmul.f32 %v275, %v280
  %v284 = vlaneseq
  %v285 = vshrl.u32 %v284, 7
  %v286 = vsub.s32 0, %v285
  %v287 = vrot.slane %v262, %v286
  %v289 = vadd.f32 %v282, %v287
  %v290 = vpack.c.bf16 %v289, %v289
  %v291 = vld [vmem:[%s8] sm:$0xf]
  %v292 = vld [vmem:[%s8 + $0x4] sm:$0xf]
  %v293 = vld [vmem:[%s8 + $0x8] sm:$0xf]
  %v294 = vld [vmem:[%s8 + $0xc] sm:$0xf]
  %v295 = vld [vmem:[%s9] sm:$0x1]
  %v297 = vlaneseq
  %v298 = vshrl.u32 %v297, 7
  %v299 = vsub.s32 0, %v298
  %v300 = vrot.slane %v295, %v299
  %v306 = vunpack.c.l.b16 %v291
  %v307 = vunpack.c.l.b16 %v292
  %v308 = vunpack.c.l.b16 %v293
  %v309 = vunpack.c.l.b16 %v294
  %v310 = vpack.c.b16 %v307, %v306
  %v311 = vpack.c.b16 %v309, %v308
  %v315 = vsel %vm232, %v290, 0
  %317 = vmatprep.subr.bf16.mxu0 0
  %318 = vmatpush1.bf16.msra.mxu0 %v310
  %319 = vmatprep.subr.bf16.mxu0 0
  %320 = vmatpush1.bf16.msra.mxu0 %v311
  %321 = vmatprep.subr.bf16.mxu0 0
  %322 = vmatpush1.bf16.msra.mxu0 0
  %323 = vmatprep.subr.bf16.mxu0 0
  %324 = vmatpush1.bf16.msra.mxu0 0
  %325 = vmatprep.subr.bf16.mxu0 0
  %326 = vmatpush1.bf16.msra.mxu0 0
  %327 = vmatprep.subr.bf16.mxu0 0
  %328 = vmatpush1.bf16.msra.mxu0 0
  %329 = vmatprep.subr.bf16.mxu0 0
  %330 = vmatpush1.bf16.msra.mxu0 0
  %331 = vmatprep.subr.bf16.mxu0 0
  %332 = vmatpush1.bf16.msra.mxu0 0
  %333 = vmatprep.subr.bf16.mxu0 0
  %334 = vmatpush1.bf16.msra.mxu0 0
  %335 = vmatprep.subr.bf16.mxu0 0
  %336 = vmatpush1.bf16.msra.mxu0 0
  %337 = vmatprep.subr.bf16.mxu0 0
  %338 = vmatpush1.bf16.msra.mxu0 0
  %339 = vmatprep.subr.bf16.mxu0 0
  %340 = vmatpush1.bf16.msra.mxu0 0
  %341 = vmatprep.subr.bf16.mxu0 0
  %342 = vmatpush1.bf16.msra.mxu0 0
  %343 = vmatprep.subr.bf16.mxu0 0
  %344 = vmatpush1.bf16.msra.mxu0 0
  %345 = vmatprep.subr.bf16.mxu0 0
  %346 = vmatpush1.bf16.msra.mxu0 0
  %347 = vmatprep.subr.bf16.mxu0 0
  %348 = vmatpush1.bf16.msra.mxu0 0
  %349 = vmatprep.mubr.bf16.mxu0 0
  %350 = vmatmul.mubr.bf16.gmra.mrb[0].mxu0 %v315
  %v351 = vpop.f32.mrb[0].mxu0
  %v352 = vadd.f32 %v300, %v351
  %v353 = vpop.f32.mrb[0].mxu0
  %v354 = vpop.f32.mrb[0].mxu0
  %v355 = vpop.f32.mrb[0].mxu0
  %356 = vdwg.mxu0
  %v357 = vpack.c.bf16 %v352, %v352
  %359 = vrot.lane.b32.xlu0 %v357, 96
  %v360 = vpop.permute.xlu0 %359
  %vm361 = vcmask 64512
  %v363 = vsel %vm361, %v357, 0
  %v366 = vsel %vm361, %v360, 0
  %368 = vmatprep.subr.bf16.mxu0 0
  %369 = vmatpush1.bf16.xpose.msra.mxu0 %v366
  %370 = vmatprep.subr.bf16.mxu0 0
  %371 = vmatpush1.bf16.xpose.msra.mxu0 0
  %372 = vmatprep.subr.bf16.mxu0 0
  %373 = vmatpush1.bf16.xpose.msra.mxu0 0
  %374 = vmatprep.subr.bf16.mxu0 0
  %375 = vmatpush1.bf16.xpose.msra.mxu0 0
  %376 = vmatprep.subr.bf16.mxu0 0
  %377 = vmatpush1.bf16.xpose.msra.mxu0 0
  %378 = vmatprep.subr.bf16.mxu0 0
  %379 = vmatpush1.bf16.xpose.msra.mxu0 0
  %380 = vmatprep.subr.bf16.mxu0 0
  %381 = vmatpush1.bf16.xpose.msra.mxu0 0
  %382 = vmatprep.subr.bf16.mxu0 0
  %383 = vmatpush1.bf16.xpose.msra.mxu0 0
  %384 = vmatprep.subr.bf16.mxu0 0
  %385 = vmatpush1.bf16.xpose.msra.mxu0 0
  %386 = vmatprep.subr.bf16.mxu0 0
  %387 = vmatpush1.bf16.xpose.msra.mxu0 0
  %388 = vmatprep.subr.bf16.mxu0 0
  %389 = vmatpush1.bf16.xpose.msra.mxu0 0
  %390 = vmatprep.subr.bf16.mxu0 0
  %391 = vmatpush1.bf16.xpose.msra.mxu0 0
  %392 = vmatprep.subr.bf16.mxu0 0
  %393 = vmatpush1.bf16.xpose.msra.mxu0 0
  %394 = vmatprep.subr.bf16.mxu0 0
  %395 = vmatpush1.bf16.xpose.msra.mxu0 0
  %396 = vmatprep.subr.bf16.mxu0 0
  %397 = vmatpush1.bf16.xpose.msra.mxu0 0
  %398 = vmatprep.subr.bf16.mxu0 0
  %399 = vmatpush1.bf16.xpose.msra.mxu0 0
  %400 = vmatprep.mubr.bf16.mxu0 0
  %401 = vmatmul.mubr.bf16.gmra.mrb[0].mxu0 %v363
  %v402 = vpop.f32.mrb[0].mxu0
  %v403 = vadd.f32 0.0, %v402
  %v404 = vpop.f32.mrb[0].mxu0
  %v405 = vpop.f32.mrb[0].mxu0
  %v406 = vpop.f32.mrb[0].mxu0
  %407 = vdwg.mxu0
  %v408 = vmul.f32 %v403, 0.35355338
  %vm409 = vcmask 27648
  %v410 = vsel %vm409, %v408, -inf
  %411 = vmax.xlane.f32.xlu0 %v410
  %v412 = vpop.xlane.xlu0 %411
  %v413 = vsub.f32 %v408, %v412
  %v414 = vmul.f32 %v413, 1.442695
  %v415 = vpow.pop %v414
  %v416 = vsel %vm409, %v415, 0.0
  %417 = vadd.xlane.f32.xlu0 %v416
  %v418 = vpop.xlane.xlu0 %417
  %v419 = vrcp.pop %v418
  %v420 = vmul.f32 %v415, %v419
  %v421 = vpack.c.bf16 %v420, %v420
  %422 = vrot.lane.b32.xlu0 %v357, 64
  %v423 = vpop.permute.xlu0 %422
  %vm424 = vcmask 31744
  %v426 = vsel %vm424, %v421, 0
  %vm428 = vcmask 1041408
  %v430 = vsel %vm428, %v423, 0
  %432 = vmatprep.subr.bf16.mxu0 0
  %433 = vmatpush1.bf16.msra.mxu0 %v430
  %434 = vmatprep.subr.bf16.mxu0 0
  %435 = vmatpush1.bf16.msra.mxu0 0
  %436 = vmatprep.subr.bf16.mxu0 0
  %437 = vmatpush1.bf16.msra.mxu0 0
  %438 = vmatprep.subr.bf16.mxu0 0
  %439 = vmatpush1.bf16.msra.mxu0 0
  %440 = vmatprep.subr.bf16.mxu0 0
  %441 = vmatpush1.bf16.msra.mxu0 0
  %442 = vmatprep.subr.bf16.mxu0 0
  %443 = vmatpush1.bf16.msra.mxu0 0
  %444 = vmatprep.subr.bf16.mxu0 0
  %445 = vmatpush1.bf16.msra.mxu0 0
  %446 = vmatprep.subr.bf16.mxu0 0
  %447 = vmatpush1.bf16.msra.mxu0 0
  %448 = vmatprep.subr.bf16.mxu0 0
  %449 = vmatpush1.bf16.msra.mxu0 0
  %450 = vmatprep.subr.bf16.mxu0 0
  %451 = vmatpush1.bf16.msra.mxu0 0
  %452 = vmatprep.subr.bf16.mxu0 0
  %453 = vmatpush1.bf16.msra.mxu0 0
  %454 = vmatprep.subr.bf16.mxu0 0
  %455 = vmatpush1.bf16.msra.mxu0 0
  %456 = vmatprep.subr.bf16.mxu0 0
  %457 = vmatpush1.bf16.msra.mxu0 0
  %458 = vmatprep.subr.bf16.mxu0 0
  %459 = vmatpush1.bf16.msra.mxu0 0
  %460 = vmatprep.subr.bf16.mxu0 0
  %461 = vmatpush1.bf16.msra.mxu0 0
  %462 = vmatprep.subr.bf16.mxu0 0
  %463 = vmatpush1.bf16.msra.mxu0 0
  %464 = vmatprep.mubr.bf16.mxu0 0
  %465 = vmatmul.mubr.bf16.gmra.mrb[0].mxu0 %v426
  %v466 = vpop.f32.mrb[0].mxu0
  %v467 = vadd.f32 0.0, %v466
  %v468 = vpop.f32.mrb[0].mxu0
  %v469 = vpop.f32.mrb[0].mxu0
  %v470 = vpop.f32.mrb[0].mxu0
  %471 = vdwg.mxu0
  %vm472 = vcmask 60416
  %473 = vst.msk [vmem:[#allocation2] sm:$0xf] %vm472, %v467
  %474 = vrot.lane.b32.xlu0 %v357, 120
  %v475 = vpop.permute.xlu0 %474
  %476 = vrot.lane.b32.xlu0 %v357, 88
  %v477 = vpop.permute.xlu0 %476
  %v479 = vsel %vm361, %v475, 0
  %v482 = vsel %vm361, %v477, 0
  %484 = vmatprep.subr.bf16.mxu0 0
  %485 = vmatpush1.bf16.xpose.msra.mxu0 %v482
  %486 = vmatprep.subr.bf16.mxu0 0
  %487 = vmatpush1.bf16.xpose.msra.mxu0 0
  %488 = vmatprep.subr.bf16.mxu0 0
  %489 = vmatpush1.bf16.xpose.msra.mxu0 0
  %490 = vmatprep.subr.bf16.mxu0 0
  %491 = vmatpush1.bf16.xpose.msra.mxu0 0
  %492 = vmatprep.subr.bf16.mxu0 0
  %493 = vmatpush1.bf16.xpose.msra.mxu0 0
  %494 = vmatprep.subr.bf16.mxu0 0
  %495 = vmatpush1.bf16.xpose.msra.mxu0 0
  %496 = vmatprep.subr.bf16.mxu0 0
  %497 = vmatpush1.bf16.xpose.msra.mxu0 0
  %498 = vmatprep.subr.bf16.mxu0 0
  %499 = vmatpush1.bf16.xpose.msra.mxu0 0
  %500 = vmatprep.subr.bf16.mxu0 0
  %501 = vmatpush1.bf16.xpose.msra.mxu0 0
  %502 = vmatprep.subr.bf16.mxu0 0
  %503 = vmatpush1.bf16.xpose.msra.mxu0 0
  %504 = vmatprep.subr.bf16.mxu0 0
  %505 = vmatpush1.bf16.xpose.msra.mxu0 0
  %506 = vmatprep.subr.bf16.mxu0 0
  %507 = vmatpush1.bf16.xpose.msra.mxu0 0
  %508 = vmatprep.subr.bf16.mxu0 0
  %509 = vmatpush1.bf16.xpose.msra.mxu0 0
  %510 = vmatprep.subr.bf16.mxu0 0
  %511 = vmatpush1.bf16.xpose.msra.mxu0 0
  %512 = vmatprep.subr.bf16.mxu0 0
  %513 = vmatpush1.bf16.xpose.msra.mxu0 0
  %514 = vmatprep.subr.bf16.mxu0 0
  %515 = vmatpush1.bf16.xpose.msra.mxu0 0
  %516 = vmatprep.mubr.bf16.mxu0 0
  %517 = vmatmul.mubr.bf16.gmra.mrb[0].mxu0 %v479
  %v518 = vpop.f32.mrb[0].mxu0
  %v519 = vadd.f32 0.0, %v518
  %v520 = vpop.f32.mrb[0].mxu0
  %v521 = vpop.f32.mrb[0].mxu0
  %v522 = vpop.f32.mrb[0].mxu0
  %523 = vdwg.mxu0
  %v524 = vmul.f32 %v519, 0.35355338
  %v525 = vsel %vm409, %v524, -inf
  %526 = vmax.xlane.f32.xlu0 %v525
  %v527 = vpop.xlane.xlu0 %526
  %v528 = vsub.f32 %v524, %v527
  %v529 = vmul.f32 %v528, 1.442695
  %v530 = vpow.pop %v529
  %v531 = vsel %vm409, %v530, 0.0
  %532 = vadd.xlane.f32.xlu0 %v531
  %v533 = vpop.xlane.xlu0 %532
  %v534 = vrcp.pop %v533
  %v535 = vmul.f32 %v530, %v534
  %v536 = vpack.c.bf16 %v535, %v535
  %537 = vrot.lane.b32.xlu0 %v357, 56
  %v538 = vpop.permute.xlu0 %537
  %v540 = vsel %vm424, %v536, 0
  %v543 = vsel %vm428, %v538, 0
  %545 = vmatprep.subr.bf16.mxu0 0
  %546 = vmatpush1.bf16.msra.mxu0 %v543
  %547 = vmatprep.subr.bf16.mxu0 0
  %548 = vmatpush1.bf16.msra.mxu0 0
  %549 = vmatprep.subr.bf16.mxu0 0
  %550 = vmatpush1.bf16.msra.mxu0 0
  %551 = vmatprep.subr.bf16.mxu0 0
  %552 = vmatpush1.bf16.msra.mxu0 0
  %553 = vmatprep.subr.bf16.mxu0 0
  %554 = vmatpush1.bf16.msra.mxu0 0
  %555 = vmatprep.subr.bf16.mxu0 0
  %556 = vmatpush1.bf16.msra.mxu0 0
  %557 = vmatprep.subr.bf16.mxu0 0
  %558 = vmatpush1.bf16.msra.mxu0 0
  %559 = vmatprep.subr.bf16.mxu0 0
  %560 = vmatpush1.bf16.msra.mxu0 0
  %561 = vmatprep.subr.bf16.mxu0 0
  %562 = vmatpush1.bf16.msra.mxu0 0
  %563 = vmatprep.subr.bf16.mxu0 0
  %564 = vmatpush1.bf16.msra.mxu0 0
  %565 = vmatprep.subr.bf16.mxu0 0
  %566 = vmatpush1.bf16.msra.mxu0 0
  %567 = vmatprep.subr.bf16.mxu0 0
  %568 = vmatpush1.bf16.msra.mxu0 0
  %569 = vmatprep.subr.bf16.mxu0 0
  %570 = vmatpush1.bf16.msra.mxu0 0
  %571 = vmatprep.subr.bf16.mxu0 0
  %572 = vmatpush1.bf16.msra.mxu0 0
  %573 = vmatprep.subr.bf16.mxu0 0
  %574 = vmatpush1.bf16.msra.mxu0 0
  %575 = vmatprep.subr.bf16.mxu0 0
  %576 = vmatpush1.bf16.msra.mxu0 0
  %577 = vmatprep.mubr.bf16.mxu0 0
  %578 = vmatmul.mubr.bf16.gmra.mrb[0].mxu0 %v540
  %v579 = vpop.f32.mrb[0].mxu0
  %v580 = vadd.f32 0.0, %v579
  %v581 = vpop.f32.mrb[0].mxu0
  %v582 = vpop.f32.mrb[0].mxu0
  %v583 = vpop.f32.mrb[0].mxu0
  %584 = vdwg.mxu0
  %586 = vrot.lane.b32.xlu0 %v580, 8
  %v587 = vpop.permute.xlu0 %586
  %vm589 = vcmask 126016
  %590 = vst.msk [vmem:[#allocation2] sm:$0xf] %vm589, %v587
  %591 = vrot.lane.b32.xlu0 %v357, 112
  %v592 = vpop.permute.xlu0 %591
  %593 = vrot.lane.b32.xlu0 %v357, 80
  %v594 = vpop.permute.xlu0 %593
  %v596 = vsel %vm361, %v592, 0
  %v599 = vsel %vm361, %v594, 0
  %601 = vmatprep.subr.bf16.mxu0 0
  %602 = vmatpush1.bf16.xpose.msra.mxu0 %v599
  %603 = vmatprep.subr.bf16.mxu0 0
  %604 = vmatpush1.bf16.xpose.msra.mxu0 0
  %605 = vmatprep.subr.bf16.mxu0 0
  %606 = vmatpush1.bf16.xpose.msra.mxu0 0
  %607 = vmatprep.subr.bf16.mxu0 0
  %608 = vmatpush1.bf16.xpose.msra.mxu0 0
  %609 = vmatprep.subr.bf16.mxu0 0
  %610 = vmatpush1.bf16.xpose.msra.mxu0 0
  %611 = vmatprep.subr.bf16.mxu0 0
  %612 = vmatpush1.bf16.xpose.msra.mxu0 0
  %613 = vmatprep.subr.bf16.mxu0 0
  %614 = vmatpush1.bf16.xpose.msra.mxu0 0
  %615 = vmatprep.subr.bf16.mxu0 0
  %616 = vmatpush1.bf16.xpose.msra.mxu0 0
  %617 = vmatprep.subr.bf16.mxu0 0
  %618 = vmatpush1.bf16.xpose.msra.mxu0 0
  %619 = vmatprep.subr.bf16.mxu0 0
  %620 = vmatpush1.bf16.xpose.msra.mxu0 0
  %621 = vmatprep.subr.bf16.mxu0 0
  %622 = vmatpush1.bf16.xpose.msra.mxu0 0
  %623 = vmatprep.subr.bf16.mxu0 0
  %624 = vmatpush1.bf16.xpose.msra.mxu0 0
  %625 = vmatprep.subr.bf16.mxu0 0
  %626 = vmatpush1.bf16.xpose.msra.mxu0 0
  %627 = vmatprep.subr.bf16.mxu0 0
  %628 = vmatpush1.bf16.xpose.msra.mxu0 0
  %629 = vmatprep.subr.bf16.mxu0 0
  %630 = vmatpush1.bf16.xpose.msra.mxu0 0
  %631 = vmatprep.subr.bf16.mxu0 0
  %632 = vmatpush1.bf16.xpose.msra.mxu0 0
  %633 = vmatprep.mubr.bf16.mxu0 0
  %634 = vmatmul.mubr.bf16.gmra.mrb[0].mxu0 %v596
  %v635 = vpop.f32.mrb[0].mxu0
  %v636 = vadd.f32 0.0, %v635
  %v637 = vpop.f32.mrb[0].mxu0
  %v638 = vpop.f32.mrb[0].mxu0
  %v639 = vpop.f32.mrb[0].mxu0
  %640 = vdwg.mxu0
  %v641 = vmul.f32 %v636, 0.35355338
  %v642 = vsel %vm409, %v641, -inf
  %643 = vmax.xlane.f32.xlu0 %v642
  %v644 = vpop.xlane.xlu0 %643
  %v645 = vsub.f32 %v641, %v644
  %v646 = vmul.f32 %v645, 1.442695
  %v647 = vpow.pop %v646
  %v648 = vsel %vm409, %v647, 0.0
  %649 = vadd.xlane.f32.xlu0 %v648
  %v650 = vpop.xlane.xlu0 %649
  %v651 = vrcp.pop %v650
  %v652 = vmul.f32 %v647, %v651
  %v653 = vpack.c.bf16 %v652, %v652
  %654 = vrot.lane.b32.xlu0 %v357, 48
  %v655 = vpop.permute.xlu0 %654
  %v657 = vsel %vm424, %v653, 0
  %v660 = vsel %vm428, %v655, 0
  %662 = vmatprep.subr.bf16.mxu0 0
  %663 = vmatpush1.bf16.msra.mxu0 %v660
  %664 = vmatprep.subr.bf16.mxu0 0
  %665 = vmatpush1.bf16.msra.mxu0 0
  %666 = vmatprep.subr.bf16.mxu0 0
  %667 = vmatpush1.bf16.msra.mxu0 0
  %668 = vmatprep.subr.bf16.mxu0 0
  %669 = vmatpush1.bf16.msra.mxu0 0
  %670 = vmatprep.subr.bf16.mxu0 0
  %671 = vmatpush1.bf16.msra.mxu0 0
  %672 = vmatprep.subr.bf16.mxu0 0
  %673 = vmatpush1.bf16.msra.mxu0 0
  %674 = vmatprep.subr.bf16.mxu0 0
  %675 = vmatpush1.bf16.msra.mxu0 0
  %676 = vmatprep.subr.bf16.mxu0 0
  %677 = vmatpush1.bf16.msra.mxu0 0
  %678 = vmatprep.subr.bf16.mxu0 0
  %679 = vmatpush1.bf16.msra.mxu0 0
  %680 = vmatprep.subr.bf16.mxu0 0
  %681 = vmatpush1.bf16.msra.mxu0 0
  %682 = vmatprep.subr.bf16.mxu0 0
  %683 = vmatpush1.bf16.msra.mxu0 0
  %684 = vmatprep.subr.bf16.mxu0 0
  %685 = vmatpush1.bf16.msra.mxu0 0
  %686 = vmatprep.subr.bf16.mxu0 0
  %687 = vmatpush1.bf16.msra.mxu0 0
  %688 = vmatprep.subr.bf16.mxu0 0
  %689 = vmatpush1.bf16.msra.mxu0 0
  %690 = vmatprep.subr.bf16.mxu0 0
  %691 = vmatpush1.bf16.msra.mxu0 0
  %692 = vmatprep.subr.bf16.mxu0 0
  %693 = vmatpush1.bf16.msra.mxu0 0
  %694 = vmatprep.mubr.bf16.mxu0 0
  %695 = vmatmul.mubr.bf16.gmra.mrb[0].mxu0 %v657
  %v696 = vpop.f32.mrb[0].mxu0
  %v697 = vadd.f32 0.0, %v696
  %v698 = vpop.f32.mrb[0].mxu0
  %v699 = vpop.f32.mrb[0].mxu0
  %v700 = vpop.f32.mrb[0].mxu0
  %701 = vdwg.mxu0
  %703 = vrot.lane.b32.xlu0 %v697, 16
  %v704 = vpop.permute.xlu0 %703
  %vm706 = vcmask 191616
  %707 = vst.msk [vmem:[#allocation2] sm:$0xf] %vm706, %v704
  %708 = vrot.lane.b32.xlu0 %v357, 104
  %v709 = vpop.permute.xlu0 %708
  %710 = vrot.lane.b32.xlu0 %v357, 72
  %v711 = vpop.permute.xlu0 %710
  %v713 = vsel %vm361, %v709, 0
  %v716 = vsel %vm361, %v711, 0
  %718 = vmatprep.subr.bf16.mxu0 0
  %719 = vmatpush1.bf16.xpose.msra.mxu0 %v716
  %720 = vmatprep.subr.bf16.mxu0 0
  %721 = vmatpush1.bf16.xpose.msra.mxu0 0
  %722 = vmatprep.subr.bf16.mxu0 0
  %723 = vmatpush1.bf16.xpose.msra.mxu0 0
  %724 = vmatprep.subr.bf16.mxu0 0
  %725 = vmatpush1.bf16.xpose.msra.mxu0 0
  %726 = vmatprep.subr.bf16.mxu0 0
  %727 = vmatpush1.bf16.xpose.msra.mxu0 0
  %728 = vmatprep.subr.bf16.mxu0 0
  %729 = vmatpush1.bf16.xpose.msra.mxu0 0
  %730 = vmatprep.subr.bf16.mxu0 0
  %731 = vmatpush1.bf16.xpose.msra.mxu0 0
  %732 = vmatprep.subr.bf16.mxu0 0
  %733 = vmatpush1.bf16.xpose.msra.mxu0 0
  %734 = vmatprep.subr.bf16.mxu0 0
  %735 = vmatpush1.bf16.xpose.msra.mxu0 0
  %736 = vmatprep.subr.bf16.mxu0 0
  %737 = vmatpush1.bf16.xpose.msra.mxu0 0
  %738 = vmatprep.subr.bf16.mxu0 0
  %739 = vmatpush1.bf16.xpose.msra.mxu0 0
  %740 = vmatprep.subr.bf16.mxu0 0
  %741 = vmatpush1.bf16.xpose.msra.mxu0 0
  %742 = vmatprep.subr.bf16.mxu0 0
  %743 = vmatpush1.bf16.xpose.msra.mxu0 0
  %744 = vmatprep.subr.bf16.mxu0 0
  %745 = vmatpush1.bf16.xpose.msra.mxu0 0
  %746 = vmatprep.subr.bf16.mxu0 0
  %747 = vmatpush1.bf16.xpose.msra.mxu0 0
  %748 = vmatprep.subr.bf16.mxu0 0
  %749 = vmatpush1.bf16.xpose.msra.mxu0 0
  %750 = vmatprep.mubr.bf16.mxu0 0
  %751 = vmatmul.mubr.bf16.gmra.mrb[0].mxu0 %v713
  %v752 = vpop.f32.mrb[0].mxu0
  %v753 = vadd.f32 0.0, %v752
  %v754 = vpop.f32.mrb[0].mxu0
  %v755 = vpop.f32.mrb[0].mxu0
  %v756 = vpop.f32.mrb[0].mxu0
  %757 = vdwg.mxu0
  %v758 = vmul.f32 %v753, 0.35355338
  %v759 = vsel %vm409, %v758, -inf
  %760 = vmax.xlane.f32.xlu0 %v759
  %v761 = vpop.xlane.xlu0 %760
  %v762 = vsub.f32 %v758, %v761
  %v763 = vmul.f32 %v762, 1.442695
  %v764 = vpow.pop %v763
  %v765 = vsel %vm409, %v764, 0.0
  %766 = vadd.xlane.f32.xlu0 %v765
  %v767 = vpop.xlane.xlu0 %766
  %v768 = vrcp.pop %v767
  %v769 = vmul.f32 %v764, %v768
  %v770 = vpack.c.bf16 %v769, %v769
  %771 = vrot.lane.b32.xlu0 %v357, 40
  %v772 = vpop.permute.xlu0 %771
  %v774 = vsel %vm424, %v770, 0
  %v777 = vsel %vm428, %v772, 0
  %779 = vmatprep.subr.bf16.mxu0 0
  %780 = vmatpush1.bf16.msra.mxu0 %v777
  %781 = vmatprep.subr.bf16.mxu0 0
  %782 = vmatpush1.bf16.msra.mxu0 0
  %783 = vmatprep.subr.bf16.mxu0 0
  %784 = vmatpush1.bf16.msra.mxu0 0
  %785 = vmatprep.subr.bf16.mxu0 0
  %786 = vmatpush1.bf16.msra.mxu0 0
  %787 = vmatprep.subr.bf16.mxu0 0
  %788 = vmatpush1.bf16.msra.mxu0 0
  %789 = vmatprep.subr.bf16.mxu0 0
  %790 = vmatpush1.bf16.msra.mxu0 0
  %791 = vmatprep.subr.bf16.mxu0 0
  %792 = vmatpush1.bf16.msra.mxu0 0
  %793 = vmatprep.subr.bf16.mxu0 0
  %794 = vmatpush1.bf16.msra.mxu0 0
  %795 = vmatprep.subr.bf16.mxu0 0
  %796 = vmatpush1.bf16.msra.mxu0 0
  %797 = vmatprep.subr.bf16.mxu0 0
  %798 = vmatpush1.bf16.msra.mxu0 0
  %799 = vmatprep.subr.bf16.mxu0 0
  %800 = vmatpush1.bf16.msra.mxu0 0
  %801 = vmatprep.subr.bf16.mxu0 0
  %802 = vmatpush1.bf16.msra.mxu0 0
  %803 = vmatprep.subr.bf16.mxu0 0
  %804 = vmatpush1.bf16.msra.mxu0 0
  %805 = vmatprep.subr.bf16.mxu0 0
  %806 = vmatpush1.bf16.msra.mxu0 0
  %807 = vmatprep.subr.bf16.mxu0 0
  %808 = vmatpush1.bf16.msra.mxu0 0
  %809 = vmatprep.subr.bf16.mxu0 0
  %810 = vmatpush1.bf16.msra.mxu0 0
  %811 = vmatprep.mubr.bf16.mxu0 0
  %812 = vmatmul.mubr.bf16.gmra.mrb[0].mxu0 %v774
  %v813 = vpop.f32.mrb[0].mxu0
  %v814 = vadd.f32 0.0, %v813
  %v815 = vpop.f32.mrb[0].mxu0
  %v816 = vpop.f32.mrb[0].mxu0
  %v817 = vpop.f32.mrb[0].mxu0
  %818 = vdwg.mxu0
  %820 = vrot.lane.b32.xlu0 %v814, 24
  %v821 = vpop.permute.xlu0 %820
  %vm823 = vcmask 257216
  %824 = vst.msk [vmem:[#allocation2] sm:$0xf] %vm823, %v821
  %v825 = vrot.slane %v357, 2
  %826 = vrot.lane.b32.xlu0 %v825, 96
  %v827 = vpop.permute.xlu0 %826
  %v829 = vsel %vm361, %v825, 0
  %v832 = vsel %vm361, %v827, 0
  %834 = vmatprep.subr.bf16.mxu0 0
  %835 = vmatpush1.bf16.xpose.msra.mxu0 %v832
  %836 = vmatprep.subr.bf16.mxu0 0
  %837 = vmatpush1.bf16.xpose.msra.mxu0 0
  %838 = vmatprep.subr.bf16.mxu0 0
  %839 = vmatpush1.bf16.xpose.msra.mxu0 0
  %840 = vmatprep.subr.bf16.mxu0 0
  %841 = vmatpush1.bf16.xpose.msra.mxu0 0
  %842 = vmatprep.subr.bf16.mxu0 0
  %843 = vmatpush1.bf16.xpose.msra.mxu0 0
  %844 = vmatprep.subr.bf16.mxu0 0
  %845 = vmatpush1.bf16.xpose.msra.mxu0 0
  %846 = vmatprep.subr.bf16.mxu0 0
  %847 = vmatpush1.bf16.xpose.msra.mxu0 0
  %848 = vmatprep.subr.bf16.mxu0 0
  %849 = vmatpush1.bf16.xpose.msra.mxu0 0
  %850 = vmatprep.subr.bf16.mxu0 0
  %851 = vmatpush1.bf16.xpose.msra.mxu0 0
  %852 = vmatprep.subr.bf16.mxu0 0
  %853 = vmatpush1.bf16.xpose.msra.mxu0 0
  %854 = vmatprep.subr.bf16.mxu0 0
  %855 = vmatpush1.bf16.xpose.msra.mxu0 0
  %856 = vmatprep.subr.bf16.mxu0 0
  %857 = vmatpush1.bf16.xpose.msra.mxu0 0
  %858 = vmatprep.subr.bf16.mxu0 0
  %859 = vmatpush1.bf16.xpose.msra.mxu0 0
  %860 = vmatprep.subr.bf16.mxu0 0
  %861 = vmatpush1.bf16.xpose.msra.mxu0 0
  %862 = vmatprep.subr.bf16.mxu0 0
  %863 = vmatpush1.bf16.xpose.msra.mxu0 0
  %864 = vmatprep.subr.bf16.mxu0 0
  %865 = vmatpush1.bf16.xpose.msra.mxu0 0
  %866 = vmatprep.mubr.bf16.mxu0 0
  %867 = vmatmul.mubr.bf16.gmra.mrb[0].mxu0 %v829
  %v868 = vpop.f32.mrb[0].mxu0
  %v869 = vadd.f32 0.0, %v868
  %v870 = vpop.f32.mrb[0].mxu0
  %v871 = vpop.f32.mrb[0].mxu0
  %v872 = vpop.f32.mrb[0].mxu0
  %873 = vdwg.mxu0
  %v874 = vmul.f32 %v869, 0.35355338
  %v875 = vsel %vm409, %v874, -inf
  %876 = vmax.xlane.f32.xlu0 %v875
  %v877 = vpop.xlane.xlu0 %876
  %v878 = vsub.f32 %v874, %v877
  %v879 = vmul.f32 %v878, 1.442695
  %v880 = vpow.pop %v879
  %v881 = vsel %vm409, %v880, 0.0
  %882 = vadd.xlane.f32.xlu0 %v881
  %v883 = vpop.xlane.xlu0 %882
  %v884 = vrcp.pop %v883
  %v885 = vmul.f32 %v880, %v884
  %v886 = vpack.c.bf16 %v885, %v885
  %887 = vrot.lane.b32.xlu0 %v825, 64
  %v888 = vpop.permute.xlu0 %887
  %v890 = vsel %vm424, %v886, 0
  %v893 = vsel %vm428, %v888, 0
  %895 = vmatprep.subr.bf16.mxu0 0
  %896 = vmatpush1.bf16.msra.mxu0 %v893
  %897 = vmatprep.subr.bf16.mxu0 0
  %898 = vmatpush1.bf16.msra.mxu0 0
  %899 = vmatprep.subr.bf16.mxu0 0
  %900 = vmatpush1.bf16.msra.mxu0 0
  %901 = vmatprep.subr.bf16.mxu0 0
  %902 = vmatpush1.bf16.msra.mxu0 0
  %903 = vmatprep.subr.bf16.mxu0 0
  %904 = vmatpush1.bf16.msra.mxu0 0
  %905 = vmatprep.subr.bf16.mxu0 0
  %906 = vmatpush1.bf16.msra.mxu0 0
  %907 = vmatprep.subr.bf16.mxu0 0
  %908 = vmatpush1.bf16.msra.mxu0 0
  %909 = vmatprep.subr.bf16.mxu0 0
  %910 = vmatpush1.bf16.msra.mxu0 0
  %911 = vmatprep.subr.bf16.mxu0 0
  %912 = vmatpush1.bf16.msra.mxu0 0
  %913 = vmatprep.subr.bf16.mxu0 0
  %914 = vmatpush1.bf16.msra.mxu0 0
  %915 = vmatprep.subr.bf16.mxu0 0
  %916 = vmatpush1.bf16.msra.mxu0 0
  %917 = vmatprep.subr.bf16.mxu0 0
  %918 = vmatpush1.bf16.msra.mxu0 0
  %919 = vmatprep.subr.bf16.mxu0 0
  %920 = vmatpush1.bf16.msra.mxu0 0
  %921 = vmatprep.subr.bf16.mxu0 0
  %922 = vmatpush1.bf16.msra.mxu0 0
  %923 = vmatprep.subr.bf16.mxu0 0
  %924 = vmatpush1.bf16.msra.mxu0 0
  %925 = vmatprep.subr.bf16.mxu0 0
  %926 = vmatpush1.bf16.msra.mxu0 0
  %927 = vmatprep.mubr.bf16.mxu0 0
  %928 = vmatmul.mubr.bf16.gmra.mrb[0].mxu0 %v890
  %v929 = vpop.f32.mrb[0].mxu0
  %v930 = vadd.f32 0.0, %v929
  %v931 = vpop.f32.mrb[0].mxu0
  %v932 = vpop.f32.mrb[0].mxu0
  %v933 = vpop.f32.mrb[0].mxu0
  %934 = vdwg.mxu0
  %935 = vst.msk [vmem:[#allocation2 + $0x4] sm:$0xf] %vm472, %v930
  %936 = vrot.lane.b32.xlu0 %v825, 120
  %v937 = vpop.permute.xlu0 %936
  %938 = vrot.lane.b32.xlu0 %v825, 88
  %v939 = vpop.permute.xlu0 %938
  %v941 = vsel %vm361, %v937, 0
  %v944 = vsel %vm361, %v939, 0
  %946 = vmatprep.subr.bf16.mxu0 0
  %947 = vmatpush1.bf16.xpose.msra.mxu0 %v944
  %948 = vmatprep.subr.bf16.mxu0 0
  %949 = vmatpush1.bf16.xpose.msra.mxu0 0
  %950 = vmatprep.subr.bf16.mxu0 0
  %951 = vmatpush1.bf16.xpose.msra.mxu0 0
  %952 = vmatprep.subr.bf16.mxu0 0
  %953 = vmatpush1.bf16.xpose.msra.mxu0 0
  %954 = vmatprep.subr.bf16.mxu0 0
  %955 = vmatpush1.bf16.xpose.msra.mxu0 0
  %956 = vmatprep.subr.bf16.mxu0 0
  %957 = vmatpush1.bf16.xpose.msra.mxu0 0
  %958 = vmatprep.subr.bf16.mxu0 0
  %959 = vmatpush1.bf16.xpose.msra.mxu0 0
  %960 = vmatprep.subr.bf16.mxu0 0
  %961 = vmatpush1.bf16.xpose.msra.mxu0 0
  %962 = vmatprep.subr.bf16.mxu0 0
  %963 = vmatpush1.bf16.xpose.msra.mxu0 0
  %964 = vmatprep.subr.bf16.mxu0 0
  %965 = vmatpush1.bf16.xpose.msra.mxu0 0
  %966 = vmatprep.subr.bf16.mxu0 0
  %967 = vmatpush1.bf16.xpose.msra.mxu0 0
  %968 = vmatprep.subr.bf16.mxu0 0
  %969 = vmatpush1.bf16.xpose.msra.mxu0 0
  %970 = vmatprep.subr.bf16.mxu0 0
  %971 = vmatpush1.bf16.xpose.msra.mxu0 0
  %972 = vmatprep.subr.bf16.mxu0 0
  %973 = vmatpush1.bf16.xpose.msra.mxu0 0
  %974 = vmatprep.subr.bf16.mxu0 0
  %975 = vmatpush1.bf16.xpose.msra.mxu0 0
  %976 = vmatprep.subr.bf16.mxu0 0
  %977 = vmatpush1.bf16.xpose.msra.mxu0 0
  %978 = vmatprep.mubr.bf16.mxu0 0
  %979 = vmatmul.mubr.bf16.gmra.mrb[0].mxu0 %v941
  %v980 = vpop.f32.mrb[0].mxu0
  %v981 = vadd.f32 0.0, %v980
  %v982 = vpop.f32.mrb[0].mxu0
  %v983 = vpop.f32.mrb[0].mxu0
  %v984 = vpop.f32.mrb[0].mxu0
  %985 = vdwg.mxu0
  %v986 = vmul.f32 %v981, 0.35355338
  %v987 = vsel %vm409, %v986, -inf
  %988 = vmax.xlane.f32.xlu0 %v987
  %v989 = vpop.xlane.xlu0 %988
  %v990 = vsub.f32 %v986, %v989
  %v991 = vmul.f32 %v990, 1.442695
  %v992 = vpow.pop %v991
  %v993 = vsel %vm409, %v992, 0.0
  %994 = vadd.xlane.f32.xlu0 %v993
  %v995 = vpop.xlane.xlu0 %994
  %v996 = vrcp.pop %v995
  %v997 = vmul.f32 %v992, %v996
  %v998 = vpack.c.bf16 %v997, %v997
  %999 = vrot.lane.b32.xlu0 %v825, 56
  %v1000 = vpop.permute.xlu0 %999
  %v1002 = vsel %vm424, %v998, 0
  %v1005 = vsel %vm428, %v1000, 0
  %1007 = vmatprep.subr.bf16.mxu0 0
  %1008 = vmatpush1.bf16.msra.mxu0 %v1005
  %1009 = vmatprep.subr.bf16.mxu0 0
  %1010 = vmatpush1.bf16.msra.mxu0 0
  %1011 = vmatprep.subr.bf16.mxu0 0
  %1012 = vmatpush1.bf16.msra.mxu0 0
  %1013 = vmatprep.subr.bf16.mxu0 0
  %1014 = vmatpush1.bf16.msra.mxu0 0
  %1015 = vmatprep.subr.bf16.mxu0 0
  %1016 = vmatpush1.bf16.msra.mxu0 0
  %1017 = vmatprep.subr.bf16.mxu0 0
  %1018 = vmatpush1.bf16.msra.mxu0 0
  %1019 = vmatprep.subr.bf16.mxu0 0
  %1020 = vmatpush1.bf16.msra.mxu0 0
  %1021 = vmatprep.subr.bf16.mxu0 0
  %1022 = vmatpush1.bf16.msra.mxu0 0
  %1023 = vmatprep.subr.bf16.mxu0 0
  %1024 = vmatpush1.bf16.msra.mxu0 0
  %1025 = vmatprep.subr.bf16.mxu0 0
  %1026 = vmatpush1.bf16.msra.mxu0 0
  %1027 = vmatprep.subr.bf16.mxu0 0
  %1028 = vmatpush1.bf16.msra.mxu0 0
  %1029 = vmatprep.subr.bf16.mxu0 0
  %1030 = vmatpush1.bf16.msra.mxu0 0
  %1031 = vmatprep.subr.bf16.mxu0 0
  %1032 = vmatpush1.bf16.msra.mxu0 0
  %1033 = vmatprep.subr.bf16.mxu0 0
  %1034 = vmatpush1.bf16.msra.mxu0 0
  %1035 = vmatprep.subr.bf16.mxu0 0
  %1036 = vmatpush1.bf16.msra.mxu0 0
  %1037 = vmatprep.subr.bf16.mxu0 0
  %1038 = vmatpush1.bf16.msra.mxu0 0
  %1039 = vmatprep.mubr.bf16.mxu0 0
  %1040 = vmatmul.mubr.bf16.gmra.mrb[0].mxu0 %v1002
  %v1041 = vpop.f32.mrb[0].mxu0
  %v1042 = vadd.f32 0.0, %v1041
  %v1043 = vpop.f32.mrb[0].mxu0
  %v1044 = vpop.f32.mrb[0].mxu0
  %v1045 = vpop.f32.mrb[0].mxu0
  %1046 = vdwg.mxu0
  %1048 = vrot.lane.b32.xlu0 %v1042, 8
  %v1049 = vpop.permute.xlu0 %1048
  %1051 = vst.msk [vmem:[#allocation2 + $0x4] sm:$0xf] %vm589, %v1049
  %1052 = vrot.lane.b32.xlu0 %v825, 112
  %v1053 = vpop.permute.xlu0 %1052
  %1054 = vrot.lane.b32.xlu0 %v825, 80
  %v1055 = vpop.permute.xlu0 %1054
  %v1057 = vsel %vm361, %v1053, 0
  %v1060 = vsel %vm361, %v1055, 0
  %1062 = vmatprep.subr.bf16.mxu0 0
  %1063 = vmatpush1.bf16.xpose.msra.mxu0 %v1060
  %1064 = vmatprep.subr.bf16.mxu0 0
  %1065 = vmatpush1.bf16.xpose.msra.mxu0 0
  %1066 = vmatprep.subr.bf16.mxu0 0
  %1067 = vmatpush1.bf16.xpose.msra.mxu0 0
  %1068 = vmatprep.subr.bf16.mxu0 0
  %1069 = vmatpush1.bf16.xpose.msra.mxu0 0
  %1070 = vmatprep.subr.bf16.mxu0 0
  %1071 = vmatpush1.bf16.xpose.msra.mxu0 0
  %1072 = vmatprep.subr.bf16.mxu0 0
  %1073 = vmatpush1.bf16.xpose.msra.mxu0 0
  %1074 = vmatprep.subr.bf16.mxu0 0
  %1075 = vmatpush1.bf16.xpose.msra.mxu0 0
  %1076 = vmatprep.subr.bf16.mxu0 0
  %1077 = vmatpush1.bf16.xpose.msra.mxu0 0
  %1078 = vmatprep.subr.bf16.mxu0 0
  %1079 = vmatpush1.bf16.xpose.msra.mxu0 0
  %1080 = vmatprep.subr.bf16.mxu0 0
  %1081 = vmatpush1.bf16.xpose.msra.mxu0 0
  %1082 = vmatprep.subr.bf16.mxu0 0
  %1083 = vmatpush1.bf16.xpose.msra.mxu0 0
  %1084 = vmatprep.subr.bf16.mxu0 0
  %1085 = vmatpush1.bf16.xpose.msra.mxu0 0
  %1086 = vmatprep.subr.bf16.mxu0 0
  %1087 = vmatpush1.bf16.xpose.msra.mxu0 0
  %1088 = vmatprep.subr.bf16.mxu0 0
  %1089 = vmatpush1.bf16.xpose.msra.mxu0 0
  %1090 = vmatprep.subr.bf16.mxu0 0
  %1091 = vmatpush1.bf16.xpose.msra.mxu0 0
  %1092 = vmatprep.subr.bf16.mxu0 0
  %1093 = vmatpush1.bf16.xpose.msra.mxu0 0
  %1094 = vmatprep.mubr.bf16.mxu0 0
  %1095 = vmatmul.mubr.bf16.gmra.mrb[0].mxu0 %v1057
  %v1096 = vpop.f32.mrb[0].mxu0
  %v1097 = vadd.f32 0.0, %v1096
  %v1098 = vpop.f32.mrb[0].mxu0
  %v1099 = vpop.f32.mrb[0].mxu0
  %v1100 = vpop.f32.mrb[0].mxu0
  %1101 = vdwg.mxu0
  %v1102 = vmul.f32 %v1097, 0.35355338
  %v1103 = vsel %vm409, %v1102, -inf
  %1104 = vmax.xlane.f32.xlu0 %v1103
  %v1105 = vpop.xlane.xlu0 %1104
  %v1106 = vsub.f32 %v1102, %v1105
  %v1107 = vmul.f32 %v1106, 1.442695
  %v1108 = vpow.pop %v1107
  %v1109 = vsel %vm409, %v1108, 0.0
  %1110 = vadd.xlane.f32.xlu0 %v1109
  %v1111 = vpop.xlane.xlu0 %1110
  %v1112 = vrcp.pop %v1111
  %v1113 = vmul.f32 %v1108, %v1112
  %v1114 = vpack.c.bf16 %v1113, %v1113
  %1115 = vrot.lane.b32.xlu0 %v825, 48
  %v1116 = vpop.permute.xlu0 %1115
  %v1118 = vsel %vm424, %v1114, 0
  %v1121 = vsel %vm428, %v1116, 0
  %1123 = vmatprep.subr.bf16.mxu0 0
  %1124 = vmatpush1.bf16.msra.mxu0 %v1121
  %1125 = vmatprep.subr.bf16.mxu0 0
  %1126 = vmatpush1.bf16.msra.mxu0 0
  %1127 = vmatprep.subr.bf16.mxu0 0
  %1128 = vmatpush1.bf16.msra.mxu0 0
  %1129 = vmatprep.subr.bf16.mxu0 0
  %1130 = vmatpush1.bf16.msra.mxu0 0
  %1131 = vmatprep.subr.bf16.mxu0 0
  %1132 = vmatpush1.bf16.msra.mxu0 0
  %1133 = vmatprep.subr.bf16.mxu0 0
  %1134 = vmatpush1.bf16.msra.mxu0 0
  %1135 = vmatprep.subr.bf16.mxu0 0
  %1136 = vmatpush1.bf16.msra.mxu0 0
  %1137 = vmatprep.subr.bf16.mxu0 0
  %1138 = vmatpush1.bf16.msra.mxu0 0
  %1139 = vmatprep.subr.bf16.mxu0 0
  %1140 = vmatpush1.bf16.msra.mxu0 0
  %1141 = vmatprep.subr.bf16.mxu0 0
  %1142 = vmatpush1.bf16.msra.mxu0 0
  %1143 = vmatprep.subr.bf16.mxu0 0
  %1144 = vmatpush1.bf16.msra.mxu0 0
  %1145 = vmatprep.subr.bf16.mxu0 0
  %1146 = vmatpush1.bf16.msra.mxu0 0
  %1147 = vmatprep.subr.bf16.mxu0 0
  %1148 = vmatpush1.bf16.msra.mxu0 0
  %1149 = vmatprep.subr.bf16.mxu0 0
  %1150 = vmatpush1.bf16.msra.mxu0 0
  %1151 = vmatprep.subr.bf16.mxu0 0
  %1152 = vmatpush1.bf16.msra.mxu0 0
  %1153 = vmatprep.subr.bf16.mxu0 0
  %1154 = vmatpush1.bf16.msra.mxu0 0
  %1155 = vmatprep.mubr.bf16.mxu0 0
  %1156 = vmatmul.mubr.bf16.gmra.mrb[0].mxu0 %v1118
  %v1157 = vpop.f32.mrb[0].mxu0
  %v1158 = vadd.f32 0.0, %v1157
  %v1159 = vpop.f32.mrb[0].mxu0
  %v1160 = vpop.f32.mrb[0].mxu0
  %v1161 = vpop.f32.mrb[0].mxu0
  %1162 = vdwg.mxu0
  %1164 = vrot.lane.b32.xlu0 %v1158, 16
  %v1165 = vpop.permute.xlu0 %1164
  %1167 = vst.msk [vmem:[#allocation2 + $0x4] sm:$0xf] %vm706, %v1165
  %1168 = vrot.lane.b32.xlu0 %v825, 104
  %v1169 = vpop.permute.xlu0 %1168
  %1170 = vrot.lane.b32.xlu0 %v825, 72
  %v1171 = vpop.permute.xlu0 %1170
  %v1173 = vsel %vm361, %v1169, 0
  %v1176 = vsel %vm361, %v1171, 0
  %1178 = vmatprep.subr.bf16.mxu0 0
  %1179 = vmatpush1.bf16.xpose.msra.mxu0 %v1176
  %1180 = vmatprep.subr.bf16.mxu0 0
  %1181 = vmatpush1.bf16.xpose.msra.mxu0 0
  %1182 = vmatprep.subr.bf16.mxu0 0
  %1183 = vmatpush1.bf16.xpose.msra.mxu0 0
  %1184 = vmatprep.subr.bf16.mxu0 0
  %1185 = vmatpush1.bf16.xpose.msra.mxu0 0
  %1186 = vmatprep.subr.bf16.mxu0 0
  %1187 = vmatpush1.bf16.xpose.msra.mxu0 0
  %1188 = vmatprep.subr.bf16.mxu0 0
  %1189 = vmatpush1.bf16.xpose.msra.mxu0 0
  %1190 = vmatprep.subr.bf16.mxu0 0
  %1191 = vmatpush1.bf16.xpose.msra.mxu0 0
  %1192 = vmatprep.subr.bf16.mxu0 0
  %1193 = vmatpush1.bf16.xpose.msra.mxu0 0
  %1194 = vmatprep.subr.bf16.mxu0 0
  %1195 = vmatpush1.bf16.xpose.msra.mxu0 0
  %1196 = vmatprep.subr.bf16.mxu0 0
  %1197 = vmatpush1.bf16.xpose.msra.mxu0 0
  %1198 = vmatprep.subr.bf16.mxu0 0
  %1199 = vmatpush1.bf16.xpose.msra.mxu0 0
  %1200 = vmatprep.subr.bf16.mxu0 0
  %1201 = vmatpush1.bf16.xpose.msra.mxu0 0
  %1202 = vmatprep.subr.bf16.mxu0 0
  %1203 = vmatpush1.bf16.xpose.msra.mxu0 0
  %1204 = vmatprep.subr.bf16.mxu0 0
  %1205 = vmatpush1.bf16.xpose.msra.mxu0 0
  %1206 = vmatprep.subr.bf16.mxu0 0
  %1207 = vmatpush1.bf16.xpose.msra.mxu0 0
  %1208 = vmatprep.subr.bf16.mxu0 0
  %1209 = vmatpush1.bf16.xpose.msra.mxu0 0
  %1210 = vmatprep.mubr.bf16.mxu0 0
  %1211 = vmatmul.mubr.bf16.gmra.mrb[0].mxu0 %v1173
  %v1212 = vpop.f32.mrb[0].mxu0
  %v1213 = vadd.f32 0.0, %v1212
  %v1214 = vpop.f32.mrb[0].mxu0
  %v1215 = vpop.f32.mrb[0].mxu0
  %v1216 = vpop.f32.mrb[0].mxu0
  %1217 = vdwg.mxu0
  %v1218 = vmul.f32 %v1213, 0.35355338
  %v1219 = vsel %vm409, %v1218, -inf
  %1220 = vmax.xlane.f32.xlu0 %v1219
  %v1221 = vpop.xlane.xlu0 %1220
  %v1222 = vsub.f32 %v1218, %v1221
  %v1223 = vmul.f32 %v1222, 1.442695
  %v1224 = vpow.pop %v1223
  %v1225 = vsel %vm409, %v1224, 0.0
  %1226 = vadd.xlane.f32.xlu0 %v1225
  %v1227 = vpop.xlane.xlu0 %1226
  %v1228 = vrcp.pop %v1227
  %v1229 = vmul.f32 %v1224, %v1228
  %v1230 = vpack.c.bf16 %v1229, %v1229
  %1231 = vrot.lane.b32.xlu0 %v825, 40
  %v1232 = vpop.permute.xlu0 %1231
  %v1234 = vsel %vm424, %v1230, 0
  %v1237 = vsel %vm428, %v1232, 0
  %1239 = vmatprep.subr.bf16.mxu0 0
  %1240 = vmatpush1.bf16.msra.mxu0 %v1237
  %1241 = vmatprep.subr.bf16.mxu0 0
  %1242 = vmatpush1.bf16.msra.mxu0 0
  %1243 = vmatprep.subr.bf16.mxu0 0
  %1244 = vmatpush1.bf16.msra.mxu0 0
  %1245 = vmatprep.subr.bf16.mxu0 0
  %1246 = vmatpush1.bf16.msra.mxu0 0
  %1247 = vmatprep.subr.bf16.mxu0 0
  %1248 = vmatpush1.bf16.msra.mxu0 0
  %1249 = vmatprep.subr.bf16.mxu0 0
  %1250 = vmatpush1.bf16.msra.mxu0 0
  %1251 = vmatprep.subr.bf16.mxu0 0
  %1252 = vmatpush1.bf16.msra.mxu0 0
  %1253 = vmatprep.subr.bf16.mxu0 0
  %1254 = vmatpush1.bf16.msra.mxu0 0
  %1255 = vmatprep.subr.bf16.mxu0 0
  %1256 = vmatpush1.bf16.msra.mxu0 0
  %1257 = vmatprep.subr.bf16.mxu0 0
  %1258 = vmatpush1.bf16.msra.mxu0 0
  %1259 = vmatprep.subr.bf16.mxu0 0
  %1260 = vmatpush1.bf16.msra.mxu0 0
  %1261 = vmatprep.subr.bf16.mxu0 0
  %1262 = vmatpush1.bf16.msra.mxu0 0
  %1263 = vmatprep.subr.bf16.mxu0 0
  %1264 = vmatpush1.bf16.msra.mxu0 0
  %1265 = vmatprep.subr.bf16.mxu0 0
  %1266 = vmatpush1.bf16.msra.mxu0 0
  %1267 = vmatprep.subr.bf16.mxu0 0
  %1268 = vmatpush1.bf16.msra.mxu0 0
  %1269 = vmatprep.subr.bf16.mxu0 0
  %1270 = vmatpush1.bf16.msra.mxu0 0
  %1271 = vmatprep.mubr.bf16.mxu0 0
  %1272 = vmatmul.mubr.bf16.gmra.mrb[0].mxu0 %v1234
  %v1273 = vpop.f32.mrb[0].mxu0
  %v1274 = vadd.f32 0.0, %v1273
  %v1275 = vpop.f32.mrb[0].mxu0
  %v1276 = vpop.f32.mrb[0].mxu0
  %v1277 = vpop.f32.mrb[0].mxu0
  %1278 = vdwg.mxu0
  %1280 = vrot.lane.b32.xlu0 %v1274, 24
  %v1281 = vpop.permute.xlu0 %1280
  %1283 = vst.msk [vmem:[#allocation2 + $0x4] sm:$0xf] %vm823, %v1281
  %v1284 = vld [vmem:[#allocation2] sm:$0xff]
  %v1285 = vpack.c.bf16 %v1284, %v1284
  %v1286 = vld [vmem:[%s10] sm:$0xf]
  %v1287 = vld [vmem:[%s10 + $0x4] sm:$0xf]
  %v1288 = vld [vmem:[%s10 + $0x8] sm:$0xf]
  %v1289 = vld [vmem:[%s10 + $0xc] sm:$0xf]
  %v1290 = vld [vmem:[%s11] sm:$0x1]
  %v1292 = vlaneseq
  %v1293 = vshrl.u32 %v1292, 7
  %v1294 = vsub.s32 0, %v1293
  %v1295 = vrot.slane %v1290, %v1294
  %v1301 = vunpack.c.l.b16 %v1286
  %v1302 = vunpack.c.l.b16 %v1287
  %v1303 = vunpack.c.l.b16 %v1288
  %v1304 = vunpack.c.l.b16 %v1289
  %v1305 = vpack.c.b16 %v1302, %v1301
  %v1306 = vpack.c.b16 %v1304, %v1303
  %v1310 = vsel %vm232, %v1285, 0
  %1312 = vmatprep.subr.bf16.mxu0 0
  %1313 = vmatpush1.bf16.msra.mxu0 %v1305
  %1314 = vmatprep.subr.bf16.mxu0 0
  %1315 = vmatpush1.bf16.msra.mxu0 %v1306
  %1316 = vmatprep.subr.bf16.mxu0 0
  %1317 = vmatpush1.bf16.msra.mxu0 0
  %1318 = vmatprep.subr.bf16.mxu0 0
  %1319 = vmatpush1.bf16.msra.mxu0 0
  %1320 = vmatprep.subr.bf16.mxu0 0
  %1321 = vmatpush1.bf16.msra.mxu0 0
  %1322 = vmatprep.subr.bf16.mxu0 0
  %1323 = vmatpush1.bf16.msra.mxu0 0
  %1324 = vmatprep.subr.bf16.mxu0 0
  %1325 = vmatpush1.bf16.msra.mxu0 0
  %1326 = vmatprep.subr.bf16.mxu0 0
  %1327 = vmatpush1.bf16.msra.mxu0 0
  %1328 = vmatprep.subr.bf16.mxu0 0
  %1329 = vmatpush1.bf16.msra.mxu0 0
  %1330 = vmatprep.subr.bf16.mxu0 0
  %1331 = vmatpush1.bf16.msra.mxu0 0
  %1332 = vmatprep.subr.bf16.mxu0 0
  %1333 = vmatpush1.bf16.msra.mxu0 0
  %1334 = vmatprep.subr.bf16.mxu0 0
  %1335 = vmatpush1.bf16.msra.mxu0 0
  %1336 = vmatprep.subr.bf16.mxu0 0
  %1337 = vmatpush1.bf16.msra.mxu0 0
  %1338 = vmatprep.subr.bf16.mxu0 0
  %1339 = vmatpush1.bf16.msra.mxu0 0
  %1340 = vmatprep.subr.bf16.mxu0 0
  %1341 = vmatpush1.bf16.msra.mxu0 0
  %1342 = vmatprep.subr.bf16.mxu0 0
  %1343 = vmatpush1.bf16.msra.mxu0 0
  %1344 = vmatprep.mubr.bf16.mxu0 0
  %1345 = vmatmul.mubr.bf16.gmra.mrb[0].mxu0 %v1310
  %v1346 = vpop.f32.mrb[0].mxu0
  %v1347 = vadd.f32 %v1295, %v1346
  %v1348 = vpop.f32.mrb[0].mxu0
  %v1349 = vpop.f32.mrb[0].mxu0
  %v1350 = vpop.f32.mrb[0].mxu0
  %1351 = vdwg.mxu0
  %v1352 = vadd.f32 %v260, %v1347
  %v1353 = vld [vmem:[%s12] sm:$0x1]
  %v1354 = vld [vmem:[%s13] sm:$0x1]
  %v1355 = vsel %vm232, %v1352, 0.0
  %1356 = vadd.xlane.f32.xlu0 %v1355
  %v1357 = vpop.xlane.xlu0 %1356
  %v1358 = vmul.f32 %v1357, %v236
  %v1359 = vsub.f32 %v1352, %v1358
  %v1360 = vmul.f32 %v1359, %v1359
  %v1361 = vsel %vm232, %v1360, 0.0
  %1362 = vadd.xlane.f32.xlu0 %v1361
  %v1363 = vpop.xlane.xlu0 %1362
  %v1364 = vmul.f32 %v1363, %v236
  %v1365 = vadd.f32 %v1364, 1e-05
  %v1366 = vrsqrt.pop %v1365
  %v1367 = vmul.f32 %v1359, %v1366
  %v1369 = vlaneseq
  %v1370 = vshrl.u32 %v1369, 7
  %v1371 = vsub.s32 0, %v1370
  %v1372 = vrot.slane %v1353, %v1371
  %v1374 = vmul.f32 %v1367, %v1372
  %v1376 = vlaneseq
  %v1377 = vshrl.u32 %v1376, 7
  %v1378 = vsub.s32 0, %v1377
  %v1379 = vrot.slane %v1354, %v1378
  %v1381 = vadd.f32 %v1374, %v1379
  %v1382 = vpack.c.bf16 %v1381, %v1381
  %v1383 = vld [vmem:[%s14] sm:$0xf]
  %v1384 = vld [vmem:[%s14 + $0x4] sm:$0xf]
  %v1385 = vld [vmem:[%s14 + $0x8] sm:$0xf]
  %v1386 = vld [vmem:[%s14 + $0xc] sm:$0xf]
  %v1387 = vld [vmem:[%s15] sm:$0x1]
  %v1389 = vlaneseq
  %v1390 = vshrl.u32 %v1389, 7
  %v1391 = vsub.s32 0, %v1390
  %v1392 = vrot.slane %v1387, %v1391
  %v1398 = vunpack.c.l.b16 %v1383
  %v1399 = vunpack.c.l.b16 %v1384
  %v1400 = vunpack.c.l.b16 %v1385
  %v1401 = vunpack.c.l.b16 %v1386
  %v1402 = vpack.c.b16 %v1399, %v1398
  %v1403 = vpack.c.b16 %v1401, %v1400
  %v1407 = vsel %vm232, %v1382, 0
  %1409 = vmatprep.subr.bf16.mxu0 0
  %1410 = vmatpush1.bf16.msra.mxu0 %v1402
  %1411 = vmatprep.subr.bf16.mxu0 0
  %1412 = vmatpush1.bf16.msra.mxu0 %v1403
  %1413 = vmatprep.subr.bf16.mxu0 0
  %1414 = vmatpush1.bf16.msra.mxu0 0
  %1415 = vmatprep.subr.bf16.mxu0 0
  %1416 = vmatpush1.bf16.msra.mxu0 0
  %1417 = vmatprep.subr.bf16.mxu0 0
  %1418 = vmatpush1.bf16.msra.mxu0 0
  %1419 = vmatprep.subr.bf16.mxu0 0
  %1420 = vmatpush1.bf16.msra.mxu0 0
  %1421 = vmatprep.subr.bf16.mxu0 0
  %1422 = vmatpush1.bf16.msra.mxu0 0
  %1423 = vmatprep.subr.bf16.mxu0 0
  %1424 = vmatpush1.bf16.msra.mxu0 0
  %1425 = vmatprep.subr.bf16.mxu0 0
  %1426 = vmatpush1.bf16.msra.mxu0 0
  %1427 = vmatprep.subr.bf16.mxu0 0
  %1428 = vmatpush1.bf16.msra.mxu0 0
  %1429 = vmatprep.subr.bf16.mxu0 0
  %1430 = vmatpush1.bf16.msra.mxu0 0
  %1431 = vmatprep.subr.bf16.mxu0 0
  %1432 = vmatpush1.bf16.msra.mxu0 0
  %1433 = vmatprep.subr.bf16.mxu0 0
  %1434 = vmatpush1.bf16.msra.mxu0 0
  %1435 = vmatprep.subr.bf16.mxu0 0
  %1436 = vmatpush1.bf16.msra.mxu0 0
  %1437 = vmatprep.subr.bf16.mxu0 0
  %1438 = vmatpush1.bf16.msra.mxu0 0
  %1439 = vmatprep.subr.bf16.mxu0 0
  %1440 = vmatpush1.bf16.msra.mxu0 0
  %1441 = vmatprep.mubr.bf16.mxu0 0
  %1442 = vmatmul.mubr.bf16.gmra.mrb[0].mxu0 %v1407
  %v1443 = vpop.f32.mrb[0].mxu0
  %v1444 = vadd.f32 %v1392, %v1443
  %v1445 = vpop.f32.mrb[0].mxu0
  %v1446 = vpop.f32.mrb[0].mxu0
  %v1447 = vpop.f32.mrb[0].mxu0
  %1448 = vdwg.mxu0
  %v1449 = vmul.f32 %v1444, 0.5
  %v1450 = vmul.f32 %v1444, 0.044715
  %v1451 = vmul.f32 %v1450, %v1444
  %v1452 = vmul.f32 %v1451, %v1444
  %v1453 = vadd.f32 %v1444, %v1452
  %v1454 = vmul.f32 %v1453, 0.7978846
  %v1455 = vtanh.pop %v1454
  %v1456 = vadd.f32 %v1455, 1.0
  %v1457 = vmul.f32 %v1449, %v1456
  %v1458 = vpack.c.bf16 %v1457, %v1457
  %v1459 = vld [vmem:[%s16] sm:$0xf]
  %v1460 = vld [vmem:[%s16 + $0x4] sm:$0xf]
  %v1461 = vld [vmem:[%s16 + $0x8] sm:$0xf]
  %v1462 = vld [vmem:[%s16 + $0xc] sm:$0xf]
  %v1463 = vld [vmem:[%s16 + $0x10] sm:$0xf]
  %v1464 = vld [vmem:[%s16 + $0x14] sm:$0xf]
  %v1465 = vld [vmem:[%s16 + $0x18] sm:$0xf]
  %v1466 = vld [vmem:[%s16 + $0x1c] sm:$0xf]
  %v1467 = vld [vmem:[%s17] sm:$0x1]
  %v1469 = vlaneseq
  %v1470 = vshrl.u32 %v1469, 7
  %v1471 = vsub.s32 0, %v1470
  %v1472 = vrot.slane %v1467, %v1471
  %v1482 = vunpack.c.l.b16 %v1459
  %v1483 = vunpack.c.l.b16 %v1460
  %v1484 = vunpack.c.l.b16 %v1461
  %v1485 = vunpack.c.l.b16 %v1462
  %v1486 = vunpack.c.l.b16 %v1463
  %v1487 = vunpack.c.l.b16 %v1464
  %v1488 = vunpack.c.l.b16 %v1465
  %v1489 = vunpack.c.l.b16 %v1466
  %v1490 = vpack.c.b16 %v1483, %v1482
  %v1491 = vpack.c.b16 %v1485, %v1484
  %v1492 = vpack.c.b16 %v1487, %v1486
  %v1493 = vpack.c.b16 %v1489, %v1488
  %v1499 = vsel %vm179, %v1458, 0
  %1501 = vmatprep.subr.bf16.mxu0 0
  %1502 = vmatpush1.bf16.msra.mxu0 %v1490
  %1503 = vmatprep.subr.bf16.mxu0 0
  %1504 = vmatpush1.bf16.msra.mxu0 %v1491
  %1505 = vmatprep.subr.bf16.mxu0 0
  %1506 = vmatpush1.bf16.msra.mxu0 %v1492
  %1507 = vmatprep.subr.bf16.mxu0 0
  %1508 = vmatpush1.bf16.msra.mxu0 %v1493
  %1509 = vmatprep.subr.bf16.mxu0 0
  %1510 = vmatpush1.bf16.msra.mxu0 0
  %1511 = vmatprep.subr.bf16.mxu0 0
  %1512 = vmatpush1.bf16.msra.mxu0 0
  %1513 = vmatprep.subr.bf16.mxu0 0
  %1514 = vmatpush1.bf16.msra.mxu0 0
  %1515 = vmatprep.subr.bf16.mxu0 0
  %1516 = vmatpush1.bf16.msra.mxu0 0
  %1517 = vmatprep.subr.bf16.mxu0 0
  %1518 = vmatpush1.bf16.msra.mxu0 0
  %1519 = vmatprep.subr.bf16.mxu0 0
  %1520 = vmatpush1.bf16.msra.mxu0 0
  %1521 = vmatprep.subr.bf16.mxu0 0
  %1522 = vmatpush1.bf16.msra.mxu0 0
  %1523 = vmatprep.subr.bf16.mxu0 0
  %1524 = vmatpush1.bf16.msra.mxu0 0
  %1525 = vmatprep.subr.bf16.mxu0 0
  %1526 = vmatpush1.bf16.msra.mxu0 0
  %1527 = vmatprep.subr.bf16.mxu0 0
  %1528 = vmatpush1.bf16.msra.mxu0 0
  %1529 = vmatprep.subr.bf16.mxu0 0
  %1530 = vmatpush1.bf16.msra.mxu0 0
  %1531 = vmatprep.subr.bf16.mxu0 0
  %1532 = vmatpush1.bf16.msra.mxu0 0
  %1533 = vmatprep.mubr.bf16.mxu0 0
  %1534 = vmatmul.mubr.bf16.gmra.mrb[0].mxu0 %v1499
  %v1535 = vpop.f32.mrb[0].mxu0
  %v1536 = vadd.f32 %v1472, %v1535
  %v1537 = vpop.f32.mrb[0].mxu0
  %v1538 = vpop.f32.mrb[0].mxu0
  %v1539 = vpop.f32.mrb[0].mxu0
  %1540 = vdwg.mxu0
  %v1541 = vadd.f32 %v1352, %v1536
  %v1542 = vpack.c.bf16 %v1541, %v1541
  %v1543 = vld [vmem:[%s18] sm:$0xf]
  %v1544 = vld [vmem:[%s18 + $0x4] sm:$0xf]
  %v1545 = vld [vmem:[%s18 + $0x8] sm:$0xf]
  %v1546 = vld [vmem:[%s18 + $0xc] sm:$0xf]
  %v1547 = vld [vmem:[%s19] sm:$0x1]
  %v1549 = vlaneseq
  %v1550 = vshrl.u32 %v1549, 7
  %v1551 = vsub.s32 0, %v1550
  %v1552 = vrot.slane %v1547, %v1551
  %v1558 = vunpack.c.l.b16 %v1543
  %v1559 = vunpack.c.l.b16 %v1544
  %v1560 = vunpack.c.l.b16 %v1545
  %v1561 = vunpack.c.l.b16 %v1546
  %v1562 = vpack.c.b16 %v1559, %v1558
  %v1563 = vpack.c.b16 %v1561, %v1560
  %v1567 = vsel %vm232, %v1542, 0
  %1569 = vmatprep.subr.bf16.mxu0 0
  %1570 = vmatpush1.bf16.msra.mxu0 %v1562
  %1571 = vmatprep.subr.bf16.mxu0 0
  %1572 = vmatpush1.bf16.msra.mxu0 %v1563
  %1573 = vmatprep.subr.bf16.mxu0 0
  %1574 = vmatpush1.bf16.msra.mxu0 0
  %1575 = vmatprep.subr.bf16.mxu0 0
  %1576 = vmatpush1.bf16.msra.mxu0 0
  %1577 = vmatprep.subr.bf16.mxu0 0
  %1578 = vmatpush1.bf16.msra.mxu0 0
  %1579 = vmatprep.subr.bf16.mxu0 0
  %1580 = vmatpush1.bf16.msra.mxu0 0
  %1581 = vmatprep.subr.bf16.mxu0 0
  %1582 = vmatpush1.bf16.msra.mxu0 0
  %1583 = vmatprep.subr.bf16.mxu0 0
  %1584 = vmatpush1.bf16.msra.mxu0 0
  %1585 = vmatprep.subr.bf16.mxu0 0
  %1586 = vmatpush1.bf16.msra.mxu0 0
  %1587 = vmatprep.subr.bf16.mxu0 0
  %1588 = vmatpush1.bf16.msra.mxu0 0
  %1589 = vmatprep.subr.bf16.mxu0 0
  %1590 = vmatpush1.bf16.msra.mxu0 0
  %1591 = vmatprep.subr.bf16.mxu0 0
  %1592 = vmatpush1.bf16.msra.mxu0 0
  %1593 = vmatprep.subr.bf16.mxu0 0
  %1594 = vmatpush1.bf16.msra.mxu0 0
  %1595 = vmatprep.subr.bf16.mxu0 0
  %1596 = vmatpush1.bf16.msra.mxu0 0
  %1597 = vmatprep.subr.bf16.mxu0 0
  %1598 = vmatpush1.bf16.msra.mxu0 0
  %1599 = vmatprep.subr.bf16.mxu0 0
  %1600 = vmatpush1.bf16.msra.mxu0 0
  %1601 = vmatprep.mubr.bf16.mxu0 0
  %1602 = vmatmul.mubr.bf16.gmra.mrb[0].mxu0 %v1567
  %v1603 = vpop.f32.mrb[0].mxu0
  %v1604 = vadd.f32 %v1552, %v1603
  %v1605 = vpop.f32.mrb[0].mxu0
  %v1606 = vpop.f32.mrb[0].mxu0
  %v1607 = vpop.f32.mrb[0].mxu0
  %1608 = vdwg.mxu0
  %v1609 = vmul.f32 %v1604, 0.5
  %v1610 = vmul.f32 %v1604, 0.044715
  %v1611 = vmul.f32 %v1610, %v1604
  %v1612 = vmul.f32 %v1611, %v1604
  %v1613 = vadd.f32 %v1604, %v1612
  %v1614 = vmul.f32 %v1613, 0.7978846
  %v1615 = vtanh.pop %v1614
  %v1616 = vadd.f32 %v1615, 1.0
  %v1617 = vmul.f32 %v1609, %v1616
  %v1618 = vpack.c.bf16 %v1617, %v1617
  %v1619 = vld [vmem:[%s20] sm:$0xf]
  %v1620 = vld [vmem:[%s20 + $0x4] sm:$0xf]
  %v1621 = vld [vmem:[%s20 + $0x8] sm:$0xf]
  %v1622 = vld [vmem:[%s20 + $0xc] sm:$0xf]
  %v1623 = vld [vmem:[%s21] sm:$0x1]
  %v1625 = vlaneseq
  %v1626 = vshrl.u32 %v1625, 7
  %v1627 = vsub.s32 0, %v1626
  %v1628 = vrot.slane %v1623, %v1627
  %v1634 = vunpack.c.l.b16 %v1619
  %v1635 = vunpack.c.l.b16 %v1620
  %v1636 = vunpack.c.l.b16 %v1621
  %v1637 = vunpack.c.l.b16 %v1622
  %v1638 = vpack.c.b16 %v1635, %v1634
  %v1639 = vpack.c.b16 %v1637, %v1636
  %v1643 = vsel %vm232, %v1618, 0
  %1645 = vmatprep.subr.bf16.mxu0 0
  %1646 = vmatpush1.bf16.msra.mxu0 %v1638
  %1647 = vmatprep.subr.bf16.mxu0 0
  %1648 = vmatpush1.bf16.msra.mxu0 %v1639
  %1649 = vmatprep.subr.bf16.mxu0 0
  %1650 = vmatpush1.bf16.msra.mxu0 0
  %1651 = vmatprep.subr.bf16.mxu0 0
  %1652 = vmatpush1.bf16.msra.mxu0 0
  %1653 = vmatprep.subr.bf16.mxu0 0
  %1654 = vmatpush1.bf16.msra.mxu0 0
  %1655 = vmatprep.subr.bf16.mxu0 0
  %1656 = vmatpush1.bf16.msra.mxu0 0
  %1657 = vmatprep.subr.bf16.mxu0 0
  %1658 = vmatpush1.bf16.msra.mxu0 0
  %1659 = vmatprep.subr.bf16.mxu0 0
  %1660 = vmatpush1.bf16.msra.mxu0 0
  %1661 = vmatprep.subr.bf16.mxu0 0
  %1662 = vmatpush1.bf16.msra.mxu0 0
  %1663 = vmatprep.subr.bf16.mxu0 0
  %1664 = vmatpush1.bf16.msra.mxu0 0
  %1665 = vmatprep.subr.bf16.mxu0 0
  %1666 = vmatpush1.bf16.msra.mxu0 0
  %1667 = vmatprep.subr.bf16.mxu0 0
  %1668 = vmatpush1.bf16.msra.mxu0 0
  %1669 = vmatprep.subr.bf16.mxu0 0
  %1670 = vmatpush1.bf16.msra.mxu0 0
  %1671 = vmatprep.subr.bf16.mxu0 0
  %1672 = vmatpush1.bf16.msra.mxu0 0
  %1673 = vmatprep.subr.bf16.mxu0 0
  %1674 = vmatpush1.bf16.msra.mxu0 0
  %1675 = vmatprep.subr.bf16.mxu0 0
  %1676 = vmatpush1.bf16.msra.mxu0 0
  %1677 = vmatprep.mubr.bf16.mxu0 0
  %1678 = vmatmul.mubr.bf16.gmra.mrb[0].mxu0 %v1643
  %v1679 = vpop.f32.mrb[0].mxu0
  %v1680 = vadd.f32 %v1628, %v1679
  %v1681 = vpop.f32.mrb[0].mxu0
  %v1682 = vpop.f32.mrb[0].mxu0
  %v1683 = vpop.f32.mrb[0].mxu0
  %1684 = vdwg.mxu0
  %1685 = vst [vmem:[%s22] sm:$0xff] %v1680
  // Predicated region
  $region90: #{llava_forward.2} parent=0 // pred_check
    _
  $region91: #{llava_forward.2} parent=0 // pred_check_branch
    %1687 = sbr.rel (0) target = $region93
  $region92: #{llava_forward.2} parent=0 // pred_region
    _
  $region93: #{llava_forward.2} parent=0 // pred_fallthru
    _
  // Predicated region
  $region94: #{llava_forward.2} parent=0 // pred_check
    _
  $region95: #{llava_forward.2} parent=0 // pred_check_branch
    %1689 = sbr.rel (0) target = $region97
  $region96: #{llava_forward.2} parent=0 // pred_region
    _
  $region97: #{llava_forward.2} parent=0 // pred_fallthru
    _

// kernel: llava_forward.3
$region0: #{llava_forward.3}
  #allocation0 [shape = 'u32[]', space=smem, size = 0x4, offset = 0x4, fixed_abs, tag = 'smem constant byte address 0x4 - core index']
  #allocation1 [shape = 'u32[144,128]{1,0:T(1,128)}', space=vmem, size = 0x12000, scoped, tag = 'internal scratch']
  #allocation2 [shape = 'f32[24,32]{1,0:T(8,128)}', space=vmem, size = 0x3000, scoped, tag = 'scratch operand']
  %s0 = inlined_call_operand.vmem [shape: f32[24,32], index: 0, kind: input, shape index: {}]
  %s1 = inlined_call_operand.vmem [shape: f32[12,32], index: 1, kind: input, shape index: {}]
  %s2 = inlined_call_operand.vmem [shape: f32[12,32], index: 2, kind: input, shape index: {}]
  %s3 = inlined_call_operand.vmem [shape: bf16[32,32], index: 3, kind: input, shape index: {}]
  %s4 = inlined_call_operand.vmem [shape: f32[1,32], index: 4, kind: input, shape index: {}]
  %s5 = inlined_call_operand.vmem [shape: bf16[32,96], index: 5, kind: input, shape index: {}]
  %s6 = inlined_call_operand.vmem [shape: bf16[32,32], index: 6, kind: input, shape index: {}]
  %s7 = inlined_call_operand.vmem [shape: f32[1,32], index: 7, kind: input, shape index: {}]
  %s8 = inlined_call_operand.vmem [shape: bf16[32,128], index: 8, kind: input, shape index: {}]
  %s9 = inlined_call_operand.vmem [shape: bf16[64,32], index: 9, kind: input, shape index: {}]
  %s10 = inlined_call_operand.vmem [shape: f32[1,32], index: 10, kind: input, shape index: {}]
  %s11 = inlined_call_operand.vmem [shape: bf16[32,128], index: 11, kind: input, shape index: {}]
  %s12 = inlined_call_operand.vmem [shape: f32[24,128], index: 12, kind: output, shape index: {}]
  %s13 = sld [smem:[#allocation0]]
  $region58: #{llava_forward.3} parent=0
    _
  %s15 = ssub.s32 1, %s13
  %s16 = scalar_select 0, %s15, %s13
  // Predicated region
  $region2: #{llava_forward.3} parent=0 // pred_check
    _
  $region3: #{llava_forward.3} parent=0 // pred_check_branch
    %18 = sbr.rel (0) target = $region5
  $region4: #{llava_forward.3} parent=0 // pred_region
    _
  $region5: #{llava_forward.3} parent=0 // pred_fallthru
    _
  // Predicated region
  $region6: #{llava_forward.3} parent=0 // pred_check
    _
  $region7: #{llava_forward.3} parent=0 // pred_check_branch
    %20 = sbr.rel (0) target = $region9
  $region8: #{llava_forward.3} parent=0 // pred_region
    _
  $region9: #{llava_forward.3} parent=0 // pred_fallthru
    _
  // Predicated region
  $region10: #{llava_forward.3} parent=0 // pred_check
    _
  $region11: #{llava_forward.3} parent=0 // pred_check_branch
    %22 = sbr.rel (0) target = $region13
  $region12: #{llava_forward.3} parent=0 // pred_region
    _
  $region13: #{llava_forward.3} parent=0 // pred_fallthru
    _
  // Predicated region
  $region14: #{llava_forward.3} parent=0 // pred_check
    _
  $region15: #{llava_forward.3} parent=0 // pred_check_branch
    %24 = sbr.rel (0) target = $region17
  $region16: #{llava_forward.3} parent=0 // pred_region
    _
  $region17: #{llava_forward.3} parent=0 // pred_fallthru
    _
  // Predicated region
  $region18: #{llava_forward.3} parent=0 // pred_check
    _
  $region19: #{llava_forward.3} parent=0 // pred_check_branch
    %26 = sbr.rel (0) target = $region21
  $region20: #{llava_forward.3} parent=0 // pred_region
    _
  $region21: #{llava_forward.3} parent=0 // pred_fallthru
    _
  // Predicated region
  $region22: #{llava_forward.3} parent=0 // pred_check
    _
  $region23: #{llava_forward.3} parent=0 // pred_check_branch
    %28 = sbr.rel (0) target = $region25
  $region24: #{llava_forward.3} parent=0 // pred_region
    _
  $region25: #{llava_forward.3} parent=0 // pred_fallthru
    _
  // Predicated region
  $region26: #{llava_forward.3} parent=0 // pred_check
    _
  $region27: #{llava_forward.3} parent=0 // pred_check_branch
    %30 = sbr.rel (0) target = $region29
  $region28: #{llava_forward.3} parent=0 // pred_region
    _
  $region29: #{llava_forward.3} parent=0 // pred_fallthru
    _
  // Predicated region
  $region30: #{llava_forward.3} parent=0 // pred_check
    _
  $region31: #{llava_forward.3} parent=0 // pred_check_branch
    %32 = sbr.rel (0) target = $region33
  $region32: #{llava_forward.3} parent=0 // pred_region
    _
  $region33: #{llava_forward.3} parent=0 // pred_fallthru
    _
  // Predicated region
  $region34: #{llava_forward.3} parent=0 // pred_check
    _
  $region35: #{llava_forward.3} parent=0 // pred_check_branch
    %34 = sbr.rel (0) target = $region37
  $region36: #{llava_forward.3} parent=0 // pred_region
    _
  $region37: #{llava_forward.3} parent=0 // pred_fallthru
    _
  // Predicated region
  $region38: #{llava_forward.3} parent=0 // pred_check
    _
  $region39: #{llava_forward.3} parent=0 // pred_check_branch
    %36 = sbr.rel (0) target = $region41
  $region40: #{llava_forward.3} parent=0 // pred_region
    _
  $region41: #{llava_forward.3} parent=0 // pred_fallthru
    _
  // Predicated region
  $region42: #{llava_forward.3} parent=0 // pred_check
    _
  $region43: #{llava_forward.3} parent=0 // pred_check_branch
    %38 = sbr.rel (0) target = $region45
  $region44: #{llava_forward.3} parent=0 // pred_region
    _
  $region45: #{llava_forward.3} parent=0 // pred_fallthru
    _
  // Predicated region
  $region46: #{llava_forward.3} parent=0 // pred_check
    _
  $region47: #{llava_forward.3} parent=0 // pred_check_branch
    %40 = sbr.rel (0) target = $region49
  $region48: #{llava_forward.3} parent=0 // pred_region
    _
  $region49: #{llava_forward.3} parent=0 // pred_fallthru
    _
  %v42 = vld [vmem:[%s0] sm:$0xff]
  %v43 = vld [vmem:[%s0 + $0x8] sm:$0xff]
  %v44 = vld [vmem:[%s0 + $0x10] sm:$0xff]
  %v45 = vld [vmem:[%s4] sm:$0x1]
  %v46 = vmul.f32 %v42, %v42
  %v47 = vmul.f32 %v43, %v43
  %v48 = vmul.f32 %v44, %v44
  %vm49 = vcmask 261120
  %v50 = vsel %vm49, %v46, 0.0
  %51 = vadd.xlane.f32.xlu0 %v50
  %v52 = vpop.xlane.xlu0 %51
  %v53 = vsel %vm49, %v47, 0.0
  %54 = vadd.xlane.f32.xlu0 %v53
  %v55 = vpop.xlane.xlu0 %54
  %v56 = vsel %vm49, %v48, 0.0
  %57 = vadd.xlane.f32.xlu0 %v56
  %v58 = vpop.xlane.xlu0 %57
  %v59 = vrcp.pop 32.0
  %v60 = vmul.f32 %v52, %v59
  %v61 = vmul.f32 %v55, %v59
  %v62 = vmul.f32 %v58, %v59
  %v63 = vadd.f32 %v60, 1e-05
  %v64 = vadd.f32 %v61, 1e-05
  %v65 = vadd.f32 %v62, 1e-05
  %v66 = vrsqrt.pop %v63
  %v67 = vrsqrt.pop %v64
  %v68 = vrsqrt.pop %v65
  %v69 = vmul.f32 %v42, %v66
  %v70 = vmul.f32 %v43, %v67
  %v71 = vmul.f32 %v44, %v68
  %v73 = vlaneseq
  %v74 = vshrl.u32 %v73, 7
  %v75 = vsub.s32 0, %v74
  %v76 = vrot.slane %v45, %v75
  %v78 = vmul.f32 %v69, %v76
  %v79 = vmul.f32 %v70, %v76
  %v80 = vmul.f32 %v71, %v76
  %v81 = vpack.c.bf16 %v79, %v78
  %v82 = vpack.c.bf16 %v80, %v80
  %v83 = vld [vmem:[%s5] sm:$0xf]
  %v84 = vld [vmem:[%s5 + $0x4] sm:$0xf]
  %v85 = vld [vmem:[%s5 + $0x8] sm:$0xf]
  %v86 = vld [vmem:[%s5 + $0xc] sm:$0xf]
  %v91 = vunpack.c.l.b16 %v83
  %v92 = vunpack.c.l.b16 %v84
  %v93 = vunpack.c.l.b16 %v85
  %v94 = vunpack.c.l.b16 %v86
  %v95 = vpack.c.b16 %v92, %v91
  %v96 = vpack.c.b16 %v94, %v93
  %v100 = vsel %vm49, %v81, 0
  %v103 = vsel %vm49, %v82, 0
  %105 = vmatprep.subr.bf16.mxu0 0
  %106 = vmatpush1.bf16.msra.mxu0 %v95
  %107 = vmatprep.subr.bf16.mxu0 0
  %108 = vmatpush1.bf16.msra.mxu0 %v96
  %109 = vmatprep.subr.bf16.mxu0 0
  %110 = vmatpush1.bf16.msra.mxu0 0
  %111 = vmatprep.subr.bf16.mxu0 0
  %112 = vmatpush1.bf16.msra.mxu0 0
  %113 = vmatprep.subr.bf16.mxu0 0
  %114 = vmatpush1.bf16.msra.mxu0 0
  %115 = vmatprep.subr.bf16.mxu0 0
  %116 = vmatpush1.bf16.msra.mxu0 0
  %117 = vmatprep.subr.bf16.mxu0 0
  %118 = vmatpush1.bf16.msra.mxu0 0
  %119 = vmatprep.subr.bf16.mxu0 0
  %120 = vmatpush1.bf16.msra.mxu0 0
  %121 = vmatprep.subr.bf16.mxu0 0
  %122 = vmatpush1.bf16.msra.mxu0 0
  %123 = vmatprep.subr.bf16.mxu0 0
  %124 = vmatpush1.bf16.msra.mxu0 0
  %125 = vmatprep.subr.bf16.mxu0 0
  %126 = vmatpush1.bf16.msra.mxu0 0
  %127 = vmatprep.subr.bf16.mxu0 0
  %128 = vmatpush1.bf16.msra.mxu0 0
  %129 = vmatprep.subr.bf16.mxu0 0
  %130 = vmatpush1.bf16.msra.mxu0 0
  %131 = vmatprep.subr.bf16.mxu0 0
  %132 = vmatpush1.bf16.msra.mxu0 0
  %133 = vmatprep.subr.bf16.mxu0 0
  %134 = vmatpush1.bf16.msra.mxu0 0
  %135 = vmatprep.subr.bf16.mxu0 0
  %136 = vmatpush1.bf16.msra.mxu0 0
  %137 = vmatprep.mubr.bf16.mxu0 0
  %138 = vmatmul.mubr.bf16.gmra.mrb[0].mxu0 %v100
  %v139 = vpop.f32.mrb[0].mxu0
  %v140 = vadd.f32 0.0, %v139
  %v141 = vpop.f32.mrb[0].mxu0
  %v142 = vpop.f32.mrb[0].mxu0
  %v143 = vadd.f32 0.0, %v142
  %v144 = vpop.f32.mrb[0].mxu0
  %145 = vmatprep.mubr.bf16.mxu0 0
  %146 = vmatmul.mubr.bf16.gmra.mrb[0].mxu0 %v103
  %v147 = vpop.f32.mrb[0].mxu0
  %v148 = vadd.f32 0.0, %v147
  %v149 = vpop.f32.mrb[0].mxu0
  %v150 = vpop.f32.mrb[0].mxu0
  %v151 = vpop.f32.mrb[0].mxu0
  %152 = vdwg.mxu0
  %v153 = vld [vmem:[%s1] sm:$0xff]
  %v154 = vld [vmem:[%s1 + $0x8] sm:$0xf]
  %v155 = vld [vmem:[%s2] sm:$0xff]
  %v156 = vld [vmem:[%s2 + $0x8] sm:$0xf]
  %vm159 = vcmask 1043456
  %v160 = vrot.slane %v153, 4
  %v161 = vrot.slane %v154, 4
  %v162 = vsel %vm159, %v160, %v161
  %v165 = vsel %vm159, %v154, %v160
  %v168 = vrot.slane %v155, 4
  %v169 = vrot.slane %v156, 4
  %v170 = vsel %vm159, %v168, %v169
  %v173 = vsel %vm159, %v156, %v168
  %v174 = vmul.f32 %v140, %v153
  %v175 = vmul.f32 %v143, %v165
  %v176 = vmul.f32 %v148, %v162
  %v177 = vpack.c.bf16 %v143, %v140
  %v178 = vpack.c.bf16 %v148, %v148
  %v179 = vld [vmem:[%s3] sm:$0xf]
  %v180 = vld [vmem:[%s3 + $0x4] sm:$0xf]
  %v181 = vld [vmem:[%s3 + $0x8] sm:$0xf]
  %v182 = vld [vmem:[%s3 + $0xc] sm:$0xf]
  %v187 = vunpack.c.l.b16 %v179
  %v188 = vunpack.c.l.b16 %v180
  %v189 = vunpack.c.l.b16 %v181
  %v190 = vunpack.c.l.b16 %v182
  %v191 = vpack.c.b16 %v188, %v187
  %v192 = vpack.c.b16 %v190, %v189
  %v196 = vsel %vm49, %v177, 0
  %v199 = vsel %vm49, %v178, 0
  %201 = vmatprep.subr.bf16.mxu0 0
  %202 = vmatpush1.bf16.msra.mxu0 %v191
  %203 = vmatprep.subr.bf16.mxu0 0
  %204 = vmatpush1.bf16.msra.mxu0 %v192
  %205 = vmatprep.subr.bf16.mxu0 0
  %206 = vmatpush1.bf16.msra.mxu0 0
  %207 = vmatprep.subr.bf16.mxu0 0
  %208 = vmatpush1.bf16.msra.mxu0 0
  %209 = vmatprep.subr.bf16.mxu0 0
  %210 = vmatpush1.bf16.msra.mxu0 0
  %211 = vmatprep.subr.bf16.mxu0 0
  %212 = vmatpush1.bf16.msra.mxu0 0
  %213 = vmatprep.subr.bf16.mxu0 0
  %214 = vmatpush1.bf16.msra.mxu0 0
  %215 = vmatprep.subr.bf16.mxu0 0
  %216 = vmatpush1.bf16.msra.mxu0 0
  %217 = vmatprep.subr.bf16.mxu0 0
  %218 = vmatpush1.bf16.msra.mxu0 0
  %219 = vmatprep.subr.bf16.mxu0 0
  %220 = vmatpush1.bf16.msra.mxu0 0
  %221 = vmatprep.subr.bf16.mxu0 0
  %222 = vmatpush1.bf16.msra.mxu0 0
  %223 = vmatprep.subr.bf16.mxu0 0
  %224 = vmatpush1.bf16.msra.mxu0 0
  %225 = vmatprep.subr.bf16.mxu0 0
  %226 = vmatpush1.bf16.msra.mxu0 0
  %227 = vmatprep.subr.bf16.mxu0 0
  %228 = vmatpush1.bf16.msra.mxu0 0
  %229 = vmatprep.subr.bf16.mxu0 0
  %230 = vmatpush1.bf16.msra.mxu0 0
  %231 = vmatprep.subr.bf16.mxu0 0
  %232 = vmatpush1.bf16.msra.mxu0 0
  %233 = vmatprep.mubr.bf16.mxu0 0
  %234 = vmatmul.mubr.bf16.gmra.mrb[0].mxu0 %v196
  %v235 = vpop.f32.mrb[0].mxu0
  %v236 = vadd.f32 0.0, %v235
  %v237 = vpop.f32.mrb[0].mxu0
  %v238 = vpop.f32.mrb[0].mxu0
  %v239 = vadd.f32 0.0, %v238
  %v240 = vpop.f32.mrb[0].mxu0
  %241 = vmatprep.mubr.bf16.mxu0 0
  %242 = vmatmul.mubr.bf16.gmra.mrb[0].mxu0 %v199
  %v243 = vpop.f32.mrb[0].mxu0
  %v244 = vadd.f32 0.0, %v243
  %v245 = vpop.f32.mrb[0].mxu0
  %v246 = vpop.f32.mrb[0].mxu0
  %v247 = vpop.f32.mrb[0].mxu0
  %248 = vdwg.mxu0
  %v249 = vmul.f32 %v236, %v155
  %v250 = vmul.f32 %v239, %v173
  %v251 = vmul.f32 %v244, %v170
  %v252 = vadd.f32 %v174, %v249
  %v253 = vadd.f32 %v175, %v250
  %v254 = vadd.f32 %v176, %v251
  %256 = vrot.lane.b32.xlu0 %v153, 32
  %v257 = vpop.permute.xlu0 %256
  %258 = vrot.lane.b32.xlu0 %v165, 32
  %v259 = vpop.permute.xlu0 %258
  %260 = vrot.lane.b32.xlu0 %v162, 32
  %v261 = vpop.permute.xlu0 %260
  %v265 = vmul.f32 %v140, %v257
  %v266 = vmul.f32 %v143, %v259
  %v267 = vmul.f32 %v148, %v261
  %270 = vrot.lane.b32.xlu0 %v177, 96
  %v271 = vpop.permute.xlu0 %270
  %272 = vrot.lane.b32.xlu0 %v178, 96
  %v273 = vpop.permute.xlu0 %272
  %v275 = vsel %vm49, %v271, 0
  %v278 = vsel %vm49, %v273, 0
  %280 = vmatprep.subr.bf16.mxu0 0
  %281 = vmatpush1.bf16.msra.mxu0 %v191
  %282 = vmatprep.subr.bf16.mxu0 0
  %283 = vmatpush1.bf16.msra.mxu0 %v192
  %284 = vmatprep.subr.bf16.mxu0 0
  %285 = vmatpush1.bf16.msra.mxu0 0
  %286 = vmatprep.subr.bf16.mxu0 0
  %287 = vmatpush1.bf16.msra.mxu0 0
  %288 = vmatprep.subr.bf16.mxu0 0
  %289 = vmatpush1.bf16.msra.mxu0 0
  %290 = vmatprep.subr.bf16.mxu0 0
  %291 = vmatpush1.bf16.msra.mxu0 0
  %292 = vmatprep.subr.bf16.mxu0 0
  %293 = vmatpush1.bf16.msra.mxu0 0
  %294 = vmatprep.subr.bf16.mxu0 0
  %295 = vmatpush1.bf16.msra.mxu0 0
  %296 = vmatprep.subr.bf16.mxu0 0
  %297 = vmatpush1.bf16.msra.mxu0 0
  %298 = vmatprep.subr.bf16.mxu0 0
  %299 = vmatpush1.bf16.msra.mxu0 0
  %300 = vmatprep.subr.bf16.mxu0 0
  %301 = vmatpush1.bf16.msra.mxu0 0
  %302 = vmatprep.subr.bf16.mxu0 0
  %303 = vmatpush1.bf16.msra.mxu0 0
  %304 = vmatprep.subr.bf16.mxu0 0
  %305 = vmatpush1.bf16.msra.mxu0 0
  %306 = vmatprep.subr.bf16.mxu0 0
  %307 = vmatpush1.bf16.msra.mxu0 0
  %308 = vmatprep.subr.bf16.mxu0 0
  %309 = vmatpush1.bf16.msra.mxu0 0
  %310 = vmatprep.subr.bf16.mxu0 0
  %311 = vmatpush1.bf16.msra.mxu0 0
  %312 = vmatprep.mubr.bf16.mxu0 0
  %313 = vmatmul.mubr.bf16.gmra.mrb[0].mxu0 %v275
  %v314 = vpop.f32.mrb[0].mxu0
  %v315 = vadd.f32 0.0, %v314
  %v316 = vpop.f32.mrb[0].mxu0
  %v317 = vpop.f32.mrb[0].mxu0
  %v318 = vadd.f32 0.0, %v317
  %v319 = vpop.f32.mrb[0].mxu0
  %320 = vmatprep.mubr.bf16.mxu0 0
  %321 = vmatmul.mubr.bf16.gmra.mrb[0].mxu0 %v278
  %v322 = vpop.f32.mrb[0].mxu0
  %v323 = vadd.f32 0.0, %v322
  %v324 = vpop.f32.mrb[0].mxu0
  %v325 = vpop.f32.mrb[0].mxu0
  %v326 = vpop.f32.mrb[0].mxu0
  %327 = vdwg.mxu0
  %v328 = vmul.f32 %v315, %v155
  %v329 = vmul.f32 %v318, %v173
  %v330 = vmul.f32 %v323, %v170
  %334 = vrot.lane.b32.xlu0 %v328, 32
  %v335 = vpop.permute.xlu0 %334
  %336 = vrot.lane.b32.xlu0 %v329, 32
  %v337 = vpop.permute.xlu0 %336
  %338 = vrot.lane.b32.xlu0 %v330, 32
  %v339 = vpop.permute.xlu0 %338
  %v343 = vadd.f32 %v265, %v335
  %v344 = vadd.f32 %v266, %v337
  %v345 = vadd.f32 %v267, %v339
  %v346 = vpack.c.bf16 %v253, %v252
  %v347 = vpack.c.bf16 %v254, %v254
  %v348 = vpack.c.bf16 %v344, %v343
  %v349 = vpack.c.bf16 %v345, %v345
  %v350 = vlaneseq
  %v351 = vshrl.u32 %v350, 7
  %v352 = vadd.s32 %v351, 8
  %v353 = vlaneseq
  %v354 = vand.u32 %v353, 127
  %vm355 = vcmp.le.s32.totalorder %v354, %v351
  %vm356 = vcmp.le.s32.totalorder %v354, %v352
  %v357 = vsel %vm355, 0.0, -1e+09
  %v358 = vsel %vm356, 0.0, -1e+09
  %360 = vrot.lane.b32.xlu0 %v348, 96
  %v361 = vpop.permute.xlu0 %360
  %vm362 = vcmask 64512
  %v364 = vsel %vm362, %v346, 0
  %v367 = vsel %vm362, %v361, 0
  %369 = vmatprep.subr.bf16.mxu0 0
  %370 = vmatpush1.bf16.xpose.msra.mxu0 %v367
  %371 = vmatprep.subr.bf16.mxu0 0
  %372 = vmatpush1.bf16.xpose.msra.mxu0 0
  %373 = vmatprep.subr.bf16.mxu0 0
  %374 = vmatpush1.bf16.xpose.msra.mxu0 0
  %375 = vmatprep.subr.bf16.mxu0 0
  %376 = vmatpush1.bf16.xpose.msra.mxu0 0
  %377 = vmatprep.subr.bf16.mxu0 0
  %378 = vmatpush1.bf16.xpose.msra.mxu0 0
  %379 = vmatprep.subr.bf16.mxu0 0
  %380 = vmatpush1.bf16.xpose.msra.mxu0 0
  %381 = vmatprep.subr.bf16.mxu0 0
  %382 = vmatpush1.bf16.xpose.msra.mxu0 0
  %383 = vmatprep.subr.bf16.mxu0 0
  %384 = vmatpush1.bf16.xpose.msra.mxu0 0
  %385 = vmatprep.subr.bf16.mxu0 0
  %386 = vmatpush1.bf16.xpose.msra.mxu0 0
  %387 = vmatprep.subr.bf16.mxu0 0
  %388 = vmatpush1.bf16.xpose.msra.mxu0 0
  %389 = vmatprep.subr.bf16.mxu0 0
  %390 = vmatpush1.bf16.xpose.msra.mxu0 0
  %391 = vmatprep.subr.bf16.mxu0 0
  %392 = vmatpush1.bf16.xpose.msra.mxu0 0
  %393 = vmatprep.subr.bf16.mxu0 0
  %394 = vmatpush1.bf16.xpose.msra.mxu0 0
  %395 = vmatprep.subr.bf16.mxu0 0
  %396 = vmatpush1.bf16.xpose.msra.mxu0 0
  %397 = vmatprep.subr.bf16.mxu0 0
  %398 = vmatpush1.bf16.xpose.msra.mxu0 0
  %399 = vmatprep.subr.bf16.mxu0 0
  %400 = vmatpush1.bf16.xpose.msra.mxu0 0
  %401 = vmatprep.mubr.bf16.mxu0 0
  %402 = vmatmul.mubr.bf16.gmra.mrb[0].mxu0 %v364
  %v403 = vpop.f32.mrb[0].mxu0
  %v404 = vadd.f32 0.0, %v403
  %v405 = vpop.f32.mrb[0].mxu0
  %v406 = vpop.f32.mrb[0].mxu0
  %v407 = vadd.f32 0.0, %v406
  %v408 = vpop.f32.mrb[0].mxu0
  %409 = vdwg.mxu0
  %v410 = vmul.f32 %v404, 0.35355338
  %v411 = vmul.f32 %v407, 0.35355338
  %v412 = vadd.f32 %v410, %v357
  %v413 = vadd.f32 %v411, %v358
  %vm414 = vcmask 97280
  %v415 = vsel %vm414, %v412, -inf
  %416 = vmax.xlane.f32.xlu0 %v415
  %v417 = vpop.xlane.xlu0 %416
  %vm418 = vcmask 93184
  %v419 = vsel %vm418, %v413, -inf
  %420 = vmax.xlane.f32.xlu0 %v419
  %v421 = vpop.xlane.xlu0 %420
  %v422 = vsub.f32 %v412, %v417
  %v423 = vsub.f32 %v413, %v421
  %v424 = vmul.f32 %v422, 1.442695
  %v425 = vpow.pop %v424
  %v426 = vmul.f32 %v423, 1.442695
  %v427 = vpow.pop %v426
  %v428 = vsel %vm414, %v425, 0.0
  %429 = vadd.xlane.f32.xlu0 %v428
  %v430 = vpop.xlane.xlu0 %429
  %v431 = vsel %vm418, %v427, 0.0
  %432 = vadd.xlane.f32.xlu0 %v431
  %v433 = vpop.xlane.xlu0 %432
  %v434 = vrcp.pop %v430
  %v435 = vrcp.pop %v433
  %v436 = vmul.f32 %v425, %v434
  %v437 = vmul.f32 %v427, %v435
  %v438 = vpack.c.bf16 %v437, %v436
  %439 = vrot.lane.b32.xlu0 %v177, 64
  %v440 = vpop.permute.xlu0 %439
  %v442 = vsel %vm414, %v438, 0
  %vm444 = vcmask 1045504
  %v446 = vsel %vm444, %v440, 0
  %448 = vmatprep.subr.bf16.mxu0 0
  %449 = vmatpush1.bf16.msra.mxu0 %v446
  %450 = vmatprep.subr.bf16.mxu0 0
  %451 = vmatpush1.bf16.msra.mxu0 0
  %452 = vmatprep.subr.bf16.mxu0 0
  %453 = vmatpush1.bf16.msra.mxu0 0
  %454 = vmatprep.subr.bf16.mxu0 0
  %455 = vmatpush1.bf16.msra.mxu0 0
  %456 = vmatprep.subr.bf16.mxu0 0
  %457 = vmatpush1.bf16.msra.mxu0 0
  %458 = vmatprep.subr.bf16.mxu0 0
  %459 = vmatpush1.bf16.msra.mxu0 0
  %460 = vmatprep.subr.bf16.mxu0 0
  %461 = vmatpush1.bf16.msra.mxu0 0
  %462 = vmatprep.subr.bf16.mxu0 0
  %463 = vmatpush1.bf16.msra.mxu0 0
  %464 = vmatprep.subr.bf16.mxu0 0
  %465 = vmatpush1.bf16.msra.mxu0 0
  %466 = vmatprep.subr.bf16.mxu0 0
  %467 = vmatpush1.bf16.msra.mxu0 0
  %468 = vmatprep.subr.bf16.mxu0 0
  %469 = vmatpush1.bf16.msra.mxu0 0
  %470 = vmatprep.subr.bf16.mxu0 0
  %471 = vmatpush1.bf16.msra.mxu0 0
  %472 = vmatprep.subr.bf16.mxu0 0
  %473 = vmatpush1.bf16.msra.mxu0 0
  %474 = vmatprep.subr.bf16.mxu0 0
  %475 = vmatpush1.bf16.msra.mxu0 0
  %476 = vmatprep.subr.bf16.mxu0 0
  %477 = vmatpush1.bf16.msra.mxu0 0
  %478 = vmatprep.subr.bf16.mxu0 0
  %479 = vmatpush1.bf16.msra.mxu0 0
  %480 = vmatprep.mubr.bf16.mxu0 0
  %481 = vmatmul.mubr.bf16.gmra.mrb[0].mxu0 %v442
  %v482 = vpop.f32.mrb[0].mxu0
  %v483 = vadd.f32 0.0, %v482
  %v484 = vpop.f32.mrb[0].mxu0
  %v485 = vpop.f32.mrb[0].mxu0
  %v486 = vadd.f32 0.0, %v485
  %v487 = vpop.f32.mrb[0].mxu0
  %488 = vdwg.mxu0
  %489 = vst.msk [vmem:[#allocation2] sm:$0xff] %vm362, %v483
  %vm490 = vcmask 60416
  %491 = vst.msk [vmem:[#allocation2 + $0x8] sm:$0xf] %vm490, %v486
  %493 = vrot.lane.b32.xlu0 %v346, 120
  %v494 = vpop.permute.xlu0 %493
  %495 = vrot.lane.b32.xlu0 %v348, 88
  %v496 = vpop.permute.xlu0 %495
  %v498 = vsel %vm362, %v494, 0
  %v501 = vsel %vm362, %v496, 0
  %503 = vmatprep.subr.bf16.mxu0 0
  %504 = vmatpush1.bf16.xpose.msra.mxu0 %v501
  %505 = vmatprep.subr.bf16.mxu0 0
  %506 = vmatpush1.bf16.xpose.msra.mxu0 0
  %507 = vmatprep.subr.bf16.mxu0 0
  %508 = vmatpush1.bf16.xpose.msra.mxu0 0
  %509 = vmatprep.subr.bf16.mxu0 0
  %510 = vmatpush1.bf16.xpose.msra.mxu0 0
  %511 = vmatprep.subr.bf16.mxu0 0
  %512 = vmatpush1.bf16.xpose.msra.mxu0 0
  %513 = vmatprep.subr.bf16.mxu0 0
  %514 = vmatpush1.bf16.xpose.msra.mxu0 0
  %515 = vmatprep.subr.bf16.mxu0 0
  %516 = vmatpush1.bf16.xpose.msra.mxu0 0
  %517 = vmatprep.subr.bf16.mxu0 0
  %518 = vmatpush1.bf16.xpose.msra.mxu0 0
  %519 = vmatprep.subr.bf16.mxu0 0
  %520 = vmatpush1.bf16.xpose.msra.mxu0 0
  %521 = vmatprep.subr.bf16.mxu0 0
  %522 = vmatpush1.bf16.xpose.msra.mxu0 0
  %523 = vmatprep.subr.bf16.mxu0 0
  %524 = vmatpush1.bf16.xpose.msra.mxu0 0
  %525 = vmatprep.subr.bf16.mxu0 0
  %526 = vmatpush1.bf16.xpose.msra.mxu0 0
  %527 = vmatprep.subr.bf16.mxu0 0
  %528 = vmatpush1.bf16.xpose.msra.mxu0 0
  %529 = vmatprep.subr.bf16.mxu0 0
  %530 = vmatpush1.bf16.xpose.msra.mxu0 0
  %531 = vmatprep.subr.bf16.mxu0 0
  %532 = vmatpush1.bf16.xpose.msra.mxu0 0
  %533 = vmatprep.subr.bf16.mxu0 0
  %534 = vmatpush1.bf16.xpose.msra.mxu0 0
  %535 = vmatprep.mubr.bf16.mxu0 0
  %536 = vmatmul.mubr.bf16.gmra.mrb[0].mxu0 %v498
  %v537 = vpop.f32.mrb[0].mxu0
  %v538 = vadd.f32 0.0, %v537
  %v539 = vpop.f32.mrb[0].mxu0
  %v540 = vpop.f32.mrb[0].mxu0
  %v541 = vadd.f32 0.0, %v540
  %v542 = vpop.f32.mrb[0].mxu0
  %543 = vdwg.mxu0
  %v544 = vmul.f32 %v538, 0.35355338
  %v545 = vmul.f32 %v541, 0.35355338
  %v546 = vadd.f32 %v544, %v357
  %v547 = vadd.f32 %v545, %v358
  %v548 = vsel %vm414, %v546, -inf
  %549 = vmax.xlane.f32.xlu0 %v548
  %v550 = vpop.xlane.xlu0 %549
  %v551 = vsel %vm418, %v547, -inf
  %552 = vmax.xlane.f32.xlu0 %v551
  %v553 = vpop.xlane.xlu0 %552
  %v554 = vsub.f32 %v546, %v550
  %v555 = vsub.f32 %v547, %v553
  %v556 = vmul.f32 %v554, 1.442695
  %v557 = vpow.pop %v556
  %v558 = vmul.f32 %v555, 1.442695
  %v559 = vpow.pop %v558
  %v560 = vsel %vm414, %v557, 0.0
  %561 = vadd.xlane.f32.xlu0 %v560
  %v562 = vpop.xlane.xlu0 %561
  %v563 = vsel %vm418, %v559, 0.0
  %564 = vadd.xlane.f32.xlu0 %v563
  %v565 = vpop.xlane.xlu0 %564
  %v566 = vrcp.pop %v562
  %v567 = vrcp.pop %v565
  %v568 = vmul.f32 %v557, %v566
  %v569 = vmul.f32 %v559, %v567
  %v570 = vpack.c.bf16 %v569, %v568
  %571 = vrot.lane.b32.xlu0 %v177, 56
  %v572 = vpop.permute.xlu0 %571
  %v574 = vsel %vm414, %v570, 0
  %v577 = vsel %vm444, %v572, 0
  %579 = vmatprep.subr.bf16.mxu0 0
  %580 = vmatpush1.bf16.msra.mxu0 %v577
  %581 = vmatprep.subr.bf16.mxu0 0
  %582 = vmatpush1.bf16.msra.mxu0 0
  %583 = vmatprep.subr.bf16.mxu0 0
  %584 = vmatpush1.bf16.msra.mxu0 0
  %585 = vmatprep.subr.bf16.mxu0 0
  %586 = vmatpush1.bf16.msra.mxu0 0
  %587 = vmatprep.subr.bf16.mxu0 0
  %588 = vmatpush1.bf16.msra.mxu0 0
  %589 = vmatprep.subr.bf16.mxu0 0
  %590 = vmatpush1.bf16.msra.mxu0 0
  %591 = vmatprep.subr.bf16.mxu0 0
  %592 = vmatpush1.bf16.msra.mxu0 0
  %593 = vmatprep.subr.bf16.mxu0 0
  %594 = vmatpush1.bf16.msra.mxu0 0
  %595 = vmatprep.subr.bf16.mxu0 0
  %596 = vmatpush1.bf16.msra.mxu0 0
  %597 = vmatprep.subr.bf16.mxu0 0
  %598 = vmatpush1.bf16.msra.mxu0 0
  %599 = vmatprep.subr.bf16.mxu0 0
  %600 = vmatpush1.bf16.msra.mxu0 0
  %601 = vmatprep.subr.bf16.mxu0 0
  %602 = vmatpush1.bf16.msra.mxu0 0
  %603 = vmatprep.subr.bf16.mxu0 0
  %604 = vmatpush1.bf16.msra.mxu0 0
  %605 = vmatprep.subr.bf16.mxu0 0
  %606 = vmatpush1.bf16.msra.mxu0 0
  %607 = vmatprep.subr.bf16.mxu0 0
  %608 = vmatpush1.bf16.msra.mxu0 0
  %609 = vmatprep.subr.bf16.mxu0 0
  %610 = vmatpush1.bf16.msra.mxu0 0
  %611 = vmatprep.mubr.bf16.mxu0 0
  %612 = vmatmul.mubr.bf16.gmra.mrb[0].mxu0 %v574
  %v613 = vpop.f32.mrb[0].mxu0
  %v614 = vadd.f32 0.0, %v613
  %v615 = vpop.f32.mrb[0].mxu0
  %v616 = vpop.f32.mrb[0].mxu0
  %v617 = vadd.f32 0.0, %v616
  %v618 = vpop.f32.mrb[0].mxu0
  %619 = vdwg.mxu0
  %622 = vrot.lane.b32.xlu0 %v614, 8
  %v623 = vpop.permute.xlu0 %622
  %624 = vrot.lane.b32.xlu0 %v617, 8
  %v625 = vpop.permute.xlu0 %624
  %vm628 = vcmask 130112
  %629 = vst.msk [vmem:[#allocation2] sm:$0xff] %vm628, %v623
  %vm630 = vcmask 126016
  %631 = vst.msk [vmem:[#allocation2 + $0x8] sm:$0xf] %vm630, %v625
  %632 = vrot.lane.b32.xlu0 %v346, 112
  %v633 = vpop.permute.xlu0 %632
  %634 = vrot.lane.b32.xlu0 %v348, 80
  %v635 = vpop.permute.xlu0 %634
  %v637 = vsel %vm362, %v633, 0
  %v640 = vsel %vm362, %v635, 0
  %642 = vmatprep.subr.bf16.mxu0 0
  %643 = vmatpush1.bf16.xpose.msra.mxu0 %v640
  %644 = vmatprep.subr.bf16.mxu0 0
  %645 = vmatpush1.bf16.xpose.msra.mxu0 0
  %646 = vmatprep.subr.bf16.mxu0 0
  %647 = vmatpush1.bf16.xpose.msra.mxu0 0
  %648 = vmatprep.subr.bf16.mxu0 0
  %649 = vmatpush1.bf16.xpose.msra.mxu0 0
  %650 = vmatprep.subr.bf16.mxu0 0
  %651 = vmatpush1.bf16.xpose.msra.mxu0 0
  %652 = vmatprep.subr.bf16.mxu0 0
  %653 = vmatpush1.bf16.xpose.msra.mxu0 0
  %654 = vmatprep.subr.bf16.mxu0 0
  %655 = vmatpush1.bf16.xpose.msra.mxu0 0
  %656 = vmatprep.subr.bf16.mxu0 0
  %657 = vmatpush1.bf16.xpose.msra.mxu0 0
  %658 = vmatprep.subr.bf16.mxu0 0
  %659 = vmatpush1.bf16.xpose.msra.mxu0 0
  %660 = vmatprep.subr.bf16.mxu0 0
  %661 = vmatpush1.bf16.xpose.msra.mxu0 0
  %662 = vmatprep.subr.bf16.mxu0 0
  %663 = vmatpush1.bf16.xpose.msra.mxu0 0
  %664 = vmatprep.subr.bf16.mxu0 0
  %665 = vmatpush1.bf16.xpose.msra.mxu0 0
  %666 = vmatprep.subr.bf16.mxu0 0
  %667 = vmatpush1.bf16.xpose.msra.mxu0 0
  %668 = vmatprep.subr.bf16.mxu0 0
  %669 = vmatpush1.bf16.xpose.msra.mxu0 0
  %670 = vmatprep.subr.bf16.mxu0 0
  %671 = vmatpush1.bf16.xpose.msra.mxu0 0
  %672 = vmatprep.subr.bf16.mxu0 0
  %673 = vmatpush1.bf16.xpose.msra.mxu0 0
  %674 = vmatprep.mubr.bf16.mxu0 0
  %675 = vmatmul.mubr.bf16.gmra.mrb[0].mxu0 %v637
  %v676 = vpop.f32.mrb[0].mxu0
  %v677 = vadd.f32 0.0, %v676
  %v678 = vpop.f32.mrb[0].mxu0
  %v679 = vpop.f32.mrb[0].mxu0
  %v680 = vadd.f32 0.0, %v679
  %v681 = vpop.f32.mrb[0].mxu0
  %682 = vdwg.mxu0
  %v683 = vmul.f32 %v677, 0.35355338
  %v684 = vmul.f32 %v680, 0.35355338
  %v685 = vadd.f32 %v683, %v357
  %v686 = vadd.f32 %v684, %v358
  %v687 = vsel %vm414, %v685, -inf
  %688 = vmax.xlane.f32.xlu0 %v687
  %v689 = vpop.xlane.xlu0 %688
  %v690 = vsel %vm418, %v686, -inf
  %691 = vmax.xlane.f32.xlu0 %v690
  %v692 = vpop.xlane.xlu0 %691
  %v693 = vsub.f32 %v685, %v689
  %v694 = vsub.f32 %v686, %v692
  %v695 = vmul.f32 %v693, 1.442695
  %v696 = vpow.pop %v695
  %v697 = vmul.f32 %v694, 1.442695
  %v698 = vpow.pop %v697
  %v699 = vsel %vm414, %v696, 0.0
  %700 = vadd.xlane.f32.xlu0 %v699
  %v701 = vpop.xlane.xlu0 %700
  %v702 = vsel %vm418, %v698, 0.0
  %703 = vadd.xlane.f32.xlu0 %v702
  %v704 = vpop.xlane.xlu0 %703
  %v705 = vrcp.pop %v701
  %v706 = vrcp.pop %v704
  %v707 = vmul.f32 %v696, %v705
  %v708 = vmul.f32 %v698, %v706
  %v709 = vpack.c.bf16 %v708, %v707
  %710 = vrot.lane.b32.xlu0 %v177, 48
  %v711 = vpop.permute.xlu0 %710
  %v713 = vsel %vm414, %v709, 0
  %v716 = vsel %vm444, %v711, 0
  %718 = vmatprep.subr.bf16.mxu0 0
  %719 = vmatpush1.bf16.msra.mxu0 %v716
  %720 = vmatprep.subr.bf16.mxu0 0
  %721 = vmatpush1.bf16.msra.mxu0 0
  %722 = vmatprep.subr.bf16.mxu0 0
  %723 = vmatpush1.bf16.msra.mxu0 0
  %724 = vmatprep.subr.bf16.mxu0 0
  %725 = vmatpush1.bf16.msra.mxu0 0
  %726 = vmatprep.subr.bf16.mxu0 0
  %727 = vmatpush1.bf16.msra.mxu0 0
  %728 = vmatprep.subr.bf16.mxu0 0
  %729 = vmatpush1.bf16.msra.mxu0 0
  %730 = vmatprep.subr.bf16.mxu0 0
  %731 = vmatpush1.bf16.msra.mxu0 0
  %732 = vmatprep.subr.bf16.mxu0 0
  %733 = vmatpush1.bf16.msra.mxu0 0
  %734 = vmatprep.subr.bf16.mxu0 0
  %735 = vmatpush1.bf16.msra.mxu0 0
  %736 = vmatprep.subr.bf16.mxu0 0
  %737 = vmatpush1.bf16.msra.mxu0 0
  %738 = vmatprep.subr.bf16.mxu0 0
  %739 = vmatpush1.bf16.msra.mxu0 0
  %740 = vmatprep.subr.bf16.mxu0 0
  %741 = vmatpush1.bf16.msra.mxu0 0
  %742 = vmatprep.subr.bf16.mxu0 0
  %743 = vmatpush1.bf16.msra.mxu0 0
  %744 = vmatprep.subr.bf16.mxu0 0
  %745 = vmatpush1.bf16.msra.mxu0 0
  %746 = vmatprep.subr.bf16.mxu0 0
  %747 = vmatpush1.bf16.msra.mxu0 0
  %748 = vmatprep.subr.bf16.mxu0 0
  %749 = vmatpush1.bf16.msra.mxu0 0
  %750 = vmatprep.mubr.bf16.mxu0 0
  %751 = vmatmul.mubr.bf16.gmra.mrb[0].mxu0 %v713
  %v752 = vpop.f32.mrb[0].mxu0
  %v753 = vadd.f32 0.0, %v752
  %v754 = vpop.f32.mrb[0].mxu0
  %v755 = vpop.f32.mrb[0].mxu0
  %v756 = vadd.f32 0.0, %v755
  %v757 = vpop.f32.mrb[0].mxu0
  %758 = vdwg.mxu0
  %761 = vrot.lane.b32.xlu0 %v753, 16
  %v762 = vpop.permute.xlu0 %761
  %763 = vrot.lane.b32.xlu0 %v756, 16
  %v764 = vpop.permute.xlu0 %763
  %vm767 = vcmask 195712
  %768 = vst.msk [vmem:[#allocation2] sm:$0xff] %vm767, %v762
  %vm769 = vcmask 191616
  %770 = vst.msk [vmem:[#allocation2 + $0x8] sm:$0xf] %vm769, %v764
  %771 = vrot.lane.b32.xlu0 %v346, 104
  %v772 = vpop.permute.xlu0 %771
  %773 = vrot.lane.b32.xlu0 %v348, 72
  %v774 = vpop.permute.xlu0 %773
  %v776 = vsel %vm362, %v772, 0
  %v779 = vsel %vm362, %v774, 0
  %781 = vmatprep.subr.bf16.mxu0 0
  %782 = vmatpush1.bf16.xpose.msra.mxu0 %v779
  %783 = vmatprep.subr.bf16.mxu0 0
  %784 = vmatpush1.bf16.xpose.msra.mxu0 0
  %785 = vmatprep.subr.bf16.mxu0 0
  %786 = vmatpush1.bf16.xpose.msra.mxu0 0
  %787 = vmatprep.subr.bf16.mxu0 0
  %788 = vmatpush1.bf16.xpose.msra.mxu0 0
  %789 = vmatprep.subr.bf16.mxu0 0
  %790 = vmatpush1.bf16.xpose.msra.mxu0 0
  %791 = vmatprep.subr.bf16.mxu0 0
  %792 = vmatpush1.bf16.xpose.msra.mxu0 0
  %793 = vmatprep.subr.bf16.mxu0 0
  %794 = vmatpush1.bf16.xpose.msra.mxu0 0
  %795 = vmatprep.subr.bf16.mxu0 0
  %796 = vmatpush1.bf16.xpose.msra.mxu0 0
  %797 = vmatprep.subr.bf16.mxu0 0
  %798 = vmatpush1.bf16.xpose.msra.mxu0 0
  %799 = vmatprep.subr.bf16.mxu0 0
  %800 = vmatpush1.bf16.xpose.msra.mxu0 0
  %801 = vmatprep.subr.bf16.mxu0 0
  %802 = vmatpush1.bf16.xpose.msra.mxu0 0
  %803 = vmatprep.subr.bf16.mxu0 0
  %804 = vmatpush1.bf16.xpose.msra.mxu0 0
  %805 = vmatprep.subr.bf16.mxu0 0
  %806 = vmatpush1.bf16.xpose.msra.mxu0 0
  %807 = vmatprep.subr.bf16.mxu0 0
  %808 = vmatpush1.bf16.xpose.msra.mxu0 0
  %809 = vmatprep.subr.bf16.mxu0 0
  %810 = vmatpush1.bf16.xpose.msra.mxu0 0
  %811 = vmatprep.subr.bf16.mxu0 0
  %812 = vmatpush1.bf16.xpose.msra.mxu0 0
  %813 = vmatprep.mubr.bf16.mxu0 0
  %814 = vmatmul.mubr.bf16.gmra.mrb[0].mxu0 %v776
  %v815 = vpop.f32.mrb[0].mxu0
  %v816 = vadd.f32 0.0, %v815
  %v817 = vpop.f32.mrb[0].mxu0
  %v818 = vpop.f32.mrb[0].mxu0
  %v819 = vadd.f32 0.0, %v818
  %v820 = vpop.f32.mrb[0].mxu0
  %821 = vdwg.mxu0
  %v822 = vmul.f32 %v816, 0.35355338
  %v823 = vmul.f32 %v819, 0.35355338
  %v824 = vadd.f32 %v822, %v357
  %v825 = vadd.f32 %v823, %v358
  %v826 = vsel %vm414, %v824, -inf
  %827 = vmax.xlane.f32.xlu0 %v826
  %v828 = vpop.xlane.xlu0 %827
  %v829 = vsel %vm418, %v825, -inf
  %830 = vmax.xlane.f32.xlu0 %v829
  %v831 = vpop.xlane.xlu0 %830
  %v832 = vsub.f32 %v824, %v828
  %v833 = vsub.f32 %v825, %v831
  %v834 = vmul.f32 %v832, 1.442695
  %v835 = vpow.pop %v834
  %v836 = vmul.f32 %v833, 1.442695
  %v837 = vpow.pop %v836
  %v838 = vsel %vm414, %v835, 0.0
  %839 = vadd.xlane.f32.xlu0 %v838
  %v840 = vpop.xlane.xlu0 %839
  %v841 = vsel %vm418, %v837, 0.0
  %842 = vadd.xlane.f32.xlu0 %v841
  %v843 = vpop.xlane.xlu0 %842
  %v844 = vrcp.pop %v840
  %v845 = vrcp.pop %v843
  %v846 = vmul.f32 %v835, %v844
  %v847 = vmul.f32 %v837, %v845
  %v848 = vpack.c.bf16 %v847, %v846
  %849 = vrot.lane.b32.xlu0 %v177, 40
  %v850 = vpop.permute.xlu0 %849
  %v852 = vsel %vm414, %v848, 0
  %v855 = vsel %vm444, %v850, 0
  %857 = vmatprep.subr.bf16.mxu0 0
  %858 = vmatpush1.bf16.msra.mxu0 %v855
  %859 = vmatprep.subr.bf16.mxu0 0
  %860 = vmatpush1.bf16.msra.mxu0 0
  %861 = vmatprep.subr.bf16.mxu0 0
  %862 = vmatpush1.bf16.msra.mxu0 0
  %863 = vmatprep.subr.bf16.mxu0 0
  %864 = vmatpush1.bf16.msra.mxu0 0
  %865 = vmatprep.subr.bf16.mxu0 0
  %866 = vmatpush1.bf16.msra.mxu0 0
  %867 = vmatprep.subr.bf16.mxu0 0
  %868 = vmatpush1.bf16.msra.mxu0 0
  %869 = vmatprep.subr.bf16.mxu0 0
  %870 = vmatpush1.bf16.msra.mxu0 0
  %871 = vmatprep.subr.bf16.mxu0 0
  %872 = vmatpush1.bf16.msra.mxu0 0
  %873 = vmatprep.subr.bf16.mxu0 0
  %874 = vmatpush1.bf16.msra.mxu0 0
  %875 = vmatprep.subr.bf16.mxu0 0
  %876 = vmatpush1.bf16.msra.mxu0 0
  %877 = vmatprep.subr.bf16.mxu0 0
  %878 = vmatpush1.bf16.msra.mxu0 0
  %879 = vmatprep.subr.bf16.mxu0 0
  %880 = vmatpush1.bf16.msra.mxu0 0
  %881 = vmatprep.subr.bf16.mxu0 0
  %882 = vmatpush1.bf16.msra.mxu0 0
  %883 = vmatprep.subr.bf16.mxu0 0
  %884 = vmatpush1.bf16.msra.mxu0 0
  %885 = vmatprep.subr.bf16.mxu0 0
  %886 = vmatpush1.bf16.msra.mxu0 0
  %887 = vmatprep.subr.bf16.mxu0 0
  %888 = vmatpush1.bf16.msra.mxu0 0
  %889 = vmatprep.mubr.bf16.mxu0 0
  %890 = vmatmul.mubr.bf16.gmra.mrb[0].mxu0 %v852
  %v891 = vpop.f32.mrb[0].mxu0
  %v892 = vadd.f32 0.0, %v891
  %v893 = vpop.f32.mrb[0].mxu0
  %v894 = vpop.f32.mrb[0].mxu0
  %v895 = vadd.f32 0.0, %v894
  %v896 = vpop.f32.mrb[0].mxu0
  %897 = vdwg.mxu0
  %900 = vrot.lane.b32.xlu0 %v892, 24
  %v901 = vpop.permute.xlu0 %900
  %902 = vrot.lane.b32.xlu0 %v895, 24
  %v903 = vpop.permute.xlu0 %902
  %vm906 = vcmask 261312
  %907 = vst.msk [vmem:[#allocation2] sm:$0xff] %vm906, %v901
  %vm908 = vcmask 257216
  %909 = vst.msk [vmem:[#allocation2 + $0x8] sm:$0xf] %vm908, %v903
  %vm911 = vcmask 1041408
  %v912 = vrot.slane %v346, 6
  %v913 = vrot.slane %v347, 6
  %v914 = vsel %vm911, %v912, %v913
  %v916 = vrot.slane %v348, 6
  %v917 = vrot.slane %v349, 6
  %v918 = vsel %vm911, %v916, %v917
  %919 = vrot.lane.b32.xlu0 %v918, 96
  %v920 = vpop.permute.xlu0 %919
  %v922 = vsel %vm362, %v914, 0
  %v925 = vsel %vm362, %v920, 0
  %927 = vmatprep.subr.bf16.mxu0 0
  %928 = vmatpush1.bf16.xpose.msra.mxu0 %v925
  %929 = vmatprep.subr.bf16.mxu0 0
  %930 = vmatpush1.bf16.xpose.msra.mxu0 0
  %931 = vmatprep.subr.bf16.mxu0 0
  %932 = vmatpush1.bf16.xpose.msra.mxu0 0
  %933 = vmatprep.subr.bf16.mxu0 0
  %934 = vmatpush1.bf16.xpose.msra.mxu0 0
  %935 = vmatprep.subr.bf16.mxu0 0
  %936 = vmatpush1.bf16.xpose.msra.mxu0 0
  %937 = vmatprep.subr.bf16.mxu0 0
  %938 = vmatpush1.bf16.xpose.msra.mxu0 0
  %939 = vmatprep.subr.bf16.mxu0 0
  %940 = vmatpush1.bf16.xpose.msra.mxu0 0
  %941 = vmatprep.subr.bf16.mxu0 0
  %942 = vmatpush1.bf16.xpose.msra.mxu0 0
  %943 = vmatprep.subr.bf16.mxu0 0
  %944 = vmatpush1.bf16.xpose.msra.mxu0 0
  %945 = vmatprep.subr.bf16.mxu0 0
  %946 = vmatpush1.bf16.xpose.msra.mxu0 0
  %947 = vmatprep.subr.bf16.mxu0 0
  %948 = vmatpush1.bf16.xpose.msra.mxu0 0
  %949 = vmatprep.subr.bf16.mxu0 0
  %950 = vmatpush1.bf16.xpose.msra.mxu0 0
  %951 = vmatprep.subr.bf16.mxu0 0
  %952 = vmatpush1.bf16.xpose.msra.mxu0 0
  %953 = vmatprep.subr.bf16.mxu0 0
  %954 = vmatpush1.bf16.xpose.msra.mxu0 0
  %955 = vmatprep.subr.bf16.mxu0 0
  %956 = vmatpush1.bf16.xpose.msra.mxu0 0
  %957 = vmatprep.subr.bf16.mxu0 0
  %958 = vmatpush1.bf16.xpose.msra.mxu0 0
  %959 = vmatprep.mubr.bf16.mxu0 0
  %960 = vmatmul.mubr.bf16.gmra.mrb[0].mxu0 %v922
  %v961 = vpop.f32.mrb[0].mxu0
  %v962 = vadd.f32 0.0, %v961
  %v963 = vpop.f32.mrb[0].mxu0
  %v964 = vpop.f32.mrb[0].mxu0
  %v965 = vadd.f32 0.0, %v964
  %v966 = vpop.f32.mrb[0].mxu0
  %967 = vdwg.mxu0
  %v968 = vmul.f32 %v962, 0.35355338
  %v969 = vmul.f32 %v965, 0.35355338
  %v970 = vadd.f32 %v968, %v357
  %v971 = vadd.f32 %v969, %v358
  %v972 = vsel %vm414, %v970, -inf
  %973 = vmax.xlane.f32.xlu0 %v972
  %v974 = vpop.xlane.xlu0 %973
  %v975 = vsel %vm418, %v971, -inf
  %976 = vmax.xlane.f32.xlu0 %v975
  %v977 = vpop.xlane.xlu0 %976
  %v978 = vsub.f32 %v970, %v974
  %v979 = vsub.f32 %v971, %v977
  %v980 = vmul.f32 %v978, 1.442695
  %v981 = vpow.pop %v980
  %v982 = vmul.f32 %v979, 1.442695
  %v983 = vpow.pop %v982
  %v984 = vsel %vm414, %v981, 0.0
  %985 = vadd.xlane.f32.xlu0 %v984
  %v986 = vpop.xlane.xlu0 %985
  %v987 = vsel %vm418, %v983, 0.0
  %988 = vadd.xlane.f32.xlu0 %v987
  %v989 = vpop.xlane.xlu0 %988
  %v990 = vrcp.pop %v986
  %v991 = vrcp.pop %v989
  %v992 = vmul.f32 %v981, %v990
  %v993 = vmul.f32 %v983, %v991
  %v994 = vpack.c.bf16 %v993, %v992
  %v995 = vrot.slane %v177, 6
  %v996 = vrot.slane %v178, 6
  %v997 = vsel %vm911, %v995, %v996
  %998 = vrot.lane.b32.xlu0 %v997, 64
  %v999 = vpop.permute.xlu0 %998
  %v1001 = vsel %vm414, %v994, 0
  %v1004 = vsel %vm444, %v999, 0
  %1006 = vmatprep.subr.bf16.mxu0 0
  %1007 = vmatpush1.bf16.msra.mxu0 %v1004
  %1008 = vmatprep.subr.bf16.mxu0 0
  %1009 = vmatpush1.bf16.msra.mxu0 0
  %1010 = vmatprep.subr.bf16.mxu0 0
  %1011 = vmatpush1.bf16.msra.mxu0 0
  %1012 = vmatprep.subr.bf16.mxu0 0
  %1013 = vmatpush1.bf16.msra.mxu0 0
  %1014 = vmatprep.subr.bf16.mxu0 0
  %1015 = vmatpush1.bf16.msra.mxu0 0
  %1016 = vmatprep.subr.bf16.mxu0 0
  %1017 = vmatpush1.bf16.msra.mxu0 0
  %1018 = vmatprep.subr.bf16.mxu0 0
  %1019 = vmatpush1.bf16.msra.mxu0 0
  %1020 = vmatprep.subr.bf16.mxu0 0
  %1021 = vmatpush1.bf16.msra.mxu0 0
  %1022 = vmatprep.subr.bf16.mxu0 0
  %1023 = vmatpush1.bf16.msra.mxu0 0
  %1024 = vmatprep.subr.bf16.mxu0 0
  %1025 = vmatpush1.bf16.msra.mxu0 0
  %1026 = vmatprep.subr.bf16.mxu0 0
  %1027 = vmatpush1.bf16.msra.mxu0 0
  %1028 = vmatprep.subr.bf16.mxu0 0
  %1029 = vmatpush1.bf16.msra.mxu0 0
  %1030 = vmatprep.subr.bf16.mxu0 0
  %1031 = vmatpush1.bf16.msra.mxu0 0
  %1032 = vmatprep.subr.bf16.mxu0 0
  %1033 = vmatpush1.bf16.msra.mxu0 0
  %1034 = vmatprep.subr.bf16.mxu0 0
  %1035 = vmatpush1.bf16.msra.mxu0 0
  %1036 = vmatprep.subr.bf16.mxu0 0
  %1037 = vmatpush1.bf16.msra.mxu0 0
  %1038 = vmatprep.mubr.bf16.mxu0 0
  %1039 = vmatmul.mubr.bf16.gmra.mrb[0].mxu0 %v1001
  %v1040 = vpop.f32.mrb[0].mxu0
  %v1041 = vadd.f32 0.0, %v1040
  %v1042 = vpop.f32.mrb[0].mxu0
  %v1043 = vpop.f32.mrb[0].mxu0
  %v1044 = vadd.f32 0.0, %v1043
  %v1045 = vpop.f32.mrb[0].mxu0
  %1046 = vdwg.mxu0
  %1047 = vst.msk [vmem:[#allocation2 + $0xc] sm:$0xff] %vm362, %v1041
  %1048 = vst.msk [vmem:[#allocation2 + $0x14] sm:$0xf] %vm490, %v1044
  %1049 = vrot.lane.b32.xlu0 %v914, 120
  %v1050 = vpop.permute.xlu0 %1049
  %1051 = vrot.lane.b32.xlu0 %v918, 88
  %v1052 = vpop.permute.xlu0 %1051
  %v1054 = vsel %vm362, %v1050, 0
  %v1057 = vsel %vm362, %v1052, 0
  %1059 = vmatprep.subr.bf16.mxu0 0
  %1060 = vmatpush1.bf16.xpose.msra.mxu0 %v1057
  %1061 = vmatprep.subr.bf16.mxu0 0
  %1062 = vmatpush1.bf16.xpose.msra.mxu0 0
  %1063 = vmatprep.subr.bf16.mxu0 0
  %1064 = vmatpush1.bf16.xpose.msra.mxu0 0
  %1065 = vmatprep.subr.bf16.mxu0 0
  %1066 = vmatpush1.bf16.xpose.msra.mxu0 0
  %1067 = vmatprep.subr.bf16.mxu0 0
  %1068 = vmatpush1.bf16.xpose.msra.mxu0 0
  %1069 = vmatprep.subr.bf16.mxu0 0
  %1070 = vmatpush1.bf16.xpose.msra.mxu0 0
  %1071 = vmatprep.subr.bf16.mxu0 0
  %1072 = vmatpush1.bf16.xpose.msra.mxu0 0
  %1073 = vmatprep.subr.bf16.mxu0 0
  %1074 = vmatpush1.bf16.xpose.msra.mxu0 0
  %1075 = vmatprep.subr.bf16.mxu0 0
  %1076 = vmatpush1.bf16.xpose.msra.mxu0 0
  %1077 = vmatprep.subr.bf16.mxu0 0
  %1078 = vmatpush1.bf16.xpose.msra.mxu0 0
  %1079 = vmatprep.subr.bf16.mxu0 0
  %1080 = vmatpush1.bf16.xpose.msra.mxu0 0
  %1081 = vmatprep.subr.bf16.mxu0 0
  %1082 = vmatpush1.bf16.xpose.msra.mxu0 0
  %1083 = vmatprep.subr.bf16.mxu0 0
  %1084 = vmatpush1.bf16.xpose.msra.mxu0 0
  %1085 = vmatprep.subr.bf16.mxu0 0
  %1086 = vmatpush1.bf16.xpose.msra.mxu0 0
  %1087 = vmatprep.subr.bf16.mxu0 0
  %1088 = vmatpush1.bf16.xpose.msra.mxu0 0
  %1089 = vmatprep.subr.bf16.mxu0 0
  %1090 = vmatpush1.bf16.xpose.msra.mxu0 0
  %1091 = vmatprep.mubr.bf16.mxu0 0
  %1092 = vmatmul.mubr.bf16.gmra.mrb[0].mxu0 %v1054
  %v1093 = vpop.f32.mrb[0].mxu0
  %v1094 = vadd.f32 0.0, %v1093
  %v1095 = vpop.f32.mrb[0].mxu0
  %v1096 = vpop.f32.mrb[0].mxu0
  %v1097 = vadd.f32 0.0, %v1096
  %v1098 = vpop.f32.mrb[0].mxu0
  %1099 = vdwg.mxu0
  %v1100 = vmul.f32 %v1094, 0.35355338
  %v1101 = vmul.f32 %v1097, 0.35355338
  %v1102 = vadd.f32 %v1100, %v357
  %v1103 = vadd.f32 %v1101, %v358
  %v1104 = vsel %vm414, %v1102, -inf
  %1105 = vmax.xlane.f32.xlu0 %v1104
  %v1106 = vpop.xlane.xlu0 %1105
  %v1107 = vsel %vm418, %v1103, -inf
  %1108 = vmax.xlane.f32.xlu0 %v1107
  %v1109 = vpop.xlane.xlu0 %1108
  %v1110 = vsub.f32 %v1102, %v1106
  %v1111 = vsub.f32 %v1103, %v1109
  %v1112 = vmul.f32 %v1110, 1.442695
  %v1113 = vpow.pop %v1112
  %v1114 = vmul.f32 %v1111, 1.442695
  %v1115 = vpow.pop %v1114
  %v1116 = vsel %vm414, %v1113, 0.0
  %1117 = vadd.xlane.f32.xlu0 %v1116
  %v1118 = vpop.xlane.xlu0 %1117
  %v1119 = vsel %vm418, %v1115, 0.0
  %1120 = vadd.xlane.f32.xlu0 %v1119
  %v1121 = vpop.xlane.xlu0 %1120
  %v1122 = vrcp.pop %v1118
  %v1123 = vrcp.pop %v1121
  %v1124 = vmul.f32 %v1113, %v1122
  %v1125 = vmul.f32 %v1115, %v1123
  %v1126 = vpack.c.bf16 %v1125, %v1124
  %1127 = vrot.lane.b32.xlu0 %v997, 56
  %v1128 = vpop.permute.xlu0 %1127
  %v1130 = vsel %vm414, %v1126, 0
  %v1133 = vsel %vm444, %v1128, 0
  %1135 = vmatprep.subr.bf16.mxu0 0
  %1136 = vmatpush1.bf16.msra.mxu0 %v1133
  %1137 = vmatprep.subr.bf16.mxu0 0
  %1138 = vmatpush1.bf16.msra.mxu0 0
  %1139 = vmatprep.subr.bf16.mxu0 0
  %1140 = vmatpush1.bf16.msra.mxu0 0
  %1141 = vmatprep.subr.bf16.mxu0 0
  %1142 = vmatpush1.bf16.msra.mxu0 0
  %1143 = vmatprep.subr.bf16.mxu0 0
  %1144 = vmatpush1.bf16.msra.mxu0 0
  %1145 = vmatprep.subr.bf16.mxu0 0
  %1146 = vmatpush1.bf16.msra.mxu0 0
  %1147 = vmatprep.subr.bf16.mxu0 0
  %1148 = vmatpush1.bf16.msra.mxu0 0
  %1149 = vmatprep.subr.bf16.mxu0 0
  %1150 = vmatpush1.bf16.msra.mxu0 0
  %1151 = vmatprep.subr.bf16.mxu0 0
  %1152 = vmatpush1.bf16.msra.mxu0 0
  %1153 = vmatprep.subr.bf16.mxu0 0
  %1154 = vmatpush1.bf16.msra.mxu0 0
  %1155 = vmatprep.subr.bf16.mxu0 0
  %1156 = vmatpush1.bf16.msra.mxu0 0
  %1157 = vmatprep.subr.bf16.mxu0 0
  %1158 = vmatpush1.bf16.msra.mxu0 0
  %1159 = vmatprep.subr.bf16.mxu0 0
  %1160 = vmatpush1.bf16.msra.mxu0 0
  %1161 = vmatprep.subr.bf16.mxu0 0
  %1162 = vmatpush1.bf16.msra.mxu0 0
  %1163 = vmatprep.subr.bf16.mxu0 0
  %1164 = vmatpush1.bf16.msra.mxu0 0
  %1165 = vmatprep.subr.bf16.mxu0 0
  %1166 = vmatpush1.bf16.msra.mxu0 0
  %1167 = vmatprep.mubr.bf16.mxu0 0
  %1168 = vmatmul.mubr.bf16.gmra.mrb[0].mxu0 %v1130
  %v1169 = vpop.f32.mrb[0].mxu0
  %v1170 = vadd.f32 0.0, %v1169
  %v1171 = vpop.f32.mrb[0].mxu0
  %v1172 = vpop.f32.mrb[0].mxu0
  %v1173 = vadd.f32 0.0, %v1172
  %v1174 = vpop.f32.mrb[0].mxu0
  %1175 = vdwg.mxu0
  %1178 = vrot.lane.b32.xlu0 %v1170, 8
  %v1179 = vpop.permute.xlu0 %1178
  %1180 = vrot.lane.b32.xlu0 %v1173, 8
  %v1181 = vpop.permute.xlu0 %1180
  %1184 = vst.msk [vmem:[#allocation2 + $0xc] sm:$0xff] %vm628, %v1179
  %1185 = vst.msk [vmem:[#allocation2 + $0x14] sm:$0xf] %vm630, %v1181
  %1186 = vrot.lane.b32.xlu0 %v914, 112
  %v1187 = vpop.permute.xlu0 %1186
  %1188 = vrot.lane.b32.xlu0 %v918, 80
  %v1189 = vpop.permute.xlu0 %1188
  %v1191 = vsel %vm362, %v1187, 0
  %v1194 = vsel %vm362, %v1189, 0
  %1196 = vmatprep.subr.bf16.mxu0 0
  %1197 = vmatpush1.bf16.xpose.msra.mxu0 %v1194
  %1198 = vmatprep.subr.bf16.mxu0 0
  %1199 = vmatpush1.bf16.xpose.msra.mxu0 0
  %1200 = vmatprep.subr.bf16.mxu0 0
  %1201 = vmatpush1.bf16.xpose.msra.mxu0 0
  %1202 = vmatprep.subr.bf16.mxu0 0
  %1203 = vmatpush1.bf16.xpose.msra.mxu0 0
  %1204 = vmatprep.subr.bf16.mxu0 0
  %1205 = vmatpush1.bf16.xpose.msra.mxu0 0
  %1206 = vmatprep.subr.bf16.mxu0 0
  %1207 = vmatpush1.bf16.xpose.msra.mxu0 0
  %1208 = vmatprep.subr.bf16.mxu0 0
  %1209 = vmatpush1.bf16.xpose.msra.mxu0 0
  %1210 = vmatprep.subr.bf16.mxu0 0
  %1211 = vmatpush1.bf16.xpose.msra.mxu0 0
  %1212 = vmatprep.subr.bf16.mxu0 0
  %1213 = vmatpush1.bf16.xpose.msra.mxu0 0
  %1214 = vmatprep.subr.bf16.mxu0 0
  %1215 = vmatpush1.bf16.xpose.msra.mxu0 0
  %1216 = vmatprep.subr.bf16.mxu0 0
  %1217 = vmatpush1.bf16.xpose.msra.mxu0 0
  %1218 = vmatprep.subr.bf16.mxu0 0
  %1219 = vmatpush1.bf16.xpose.msra.mxu0 0
  %1220 = vmatprep.subr.bf16.mxu0 0
  %1221 = vmatpush1.bf16.xpose.msra.mxu0 0
  %1222 = vmatprep.subr.bf16.mxu0 0
  %1223 = vmatpush1.bf16.xpose.msra.mxu0 0
  %1224 = vmatprep.subr.bf16.mxu0 0
  %1225 = vmatpush1.bf16.xpose.msra.mxu0 0
  %1226 = vmatprep.subr.bf16.mxu0 0
  %1227 = vmatpush1.bf16.xpose.msra.mxu0 0
  %1228 = vmatprep.mubr.bf16.mxu0 0
  %1229 = vmatmul.mubr.bf16.gmra.mrb[0].mxu0 %v1191
  %v1230 = vpop.f32.mrb[0].mxu0
  %v1231 = vadd.f32 0.0, %v1230
  %v1232 = vpop.f32.mrb[0].mxu0
  %v1233 = vpop.f32.mrb[0].mxu0
  %v1234 = vadd.f32 0.0, %v1233
  %v1235 = vpop.f32.mrb[0].mxu0
  %1236 = vdwg.mxu0
  %v1237 = vmul.f32 %v1231, 0.35355338
  %v1238 = vmul.f32 %v1234, 0.35355338
  %v1239 = vadd.f32 %v1237, %v357
  %v1240 = vadd.f32 %v1238, %v358
  %v1241 = vsel %vm414, %v1239, -inf
  %1242 = vmax.xlane.f32.xlu0 %v1241
  %v1243 = vpop.xlane.xlu0 %1242
  %v1244 = vsel %vm418, %v1240, -inf
  %1245 = vmax.xlane.f32.xlu0 %v1244
  %v1246 = vpop.xlane.xlu0 %1245
  %v1247 = vsub.f32 %v1239, %v1243
  %v1248 = vsub.f32 %v1240, %v1246
  %v1249 = vmul.f32 %v1247, 1.442695
  %v1250 = vpow.pop %v1249
  %v1251 = vmul.f32 %v1248, 1.442695
  %v1252 = vpow.pop %v1251
  %v1253 = vsel %vm414, %v1250, 0.0
  %1254 = vadd.xlane.f32.xlu0 %v1253
  %v1255 = vpop.xlane.xlu0 %1254
  %v1256 = vsel %vm418, %v1252, 0.0
  %1257 = vadd.xlane.f32.xlu0 %v1256
  %v1258 = vpop.xlane.xlu0 %1257
  %v1259 = vrcp.pop %v1255
  %v1260 = vrcp.pop %v1258
  %v1261 = vmul.f32 %v1250, %v1259
  %v1262 = vmul.f32 %v1252, %v1260
  %v1263 = vpack.c.bf16 %v1262, %v1261
  %1264 = vrot.lane.b32.xlu0 %v997, 48
  %v1265 = vpop.permute.xlu0 %1264
  %v1267 = vsel %vm414, %v1263, 0
  %v1270 = vsel %vm444, %v1265, 0
  %1272 = vmatprep.subr.bf16.mxu0 0
  %1273 = vmatpush1.bf16.msra.mxu0 %v1270
  %1274 = vmatprep.subr.bf16.mxu0 0
  %1275 = vmatpush1.bf16.msra.mxu0 0
  %1276 = vmatprep.subr.bf16.mxu0 0
  %1277 = vmatpush1.bf16.msra.mxu0 0
  %1278 = vmatprep.subr.bf16.mxu0 0
  %1279 = vmatpush1.bf16.msra.mxu0 0
  %1280 = vmatprep.subr.bf16.mxu0 0
  %1281 = vmatpush1.bf16.msra.mxu0 0
  %1282 = vmatprep.subr.bf16.mxu0 0
  %1283 = vmatpush1.bf16.msra.mxu0 0
  %1284 = vmatprep.subr.bf16.mxu0 0
  %1285 = vmatpush1.bf16.msra.mxu0 0
  %1286 = vmatprep.subr.bf16.mxu0 0
  %1287 = vmatpush1.bf16.msra.mxu0 0
  %1288 = vmatprep.subr.bf16.mxu0 0
  %1289 = vmatpush1.bf16.msra.mxu0 0
  %1290 = vmatprep.subr.bf16.mxu0 0
  %1291 = vmatpush1.bf16.msra.mxu0 0
  %1292 = vmatprep.subr.bf16.mxu0 0
  %1293 = vmatpush1.bf16.msra.mxu0 0
  %1294 = vmatprep.subr.bf16.mxu0 0
  %1295 = vmatpush1.bf16.msra.mxu0 0
  %1296 = vmatprep.subr.bf16.mxu0 0
  %1297 = vmatpush1.bf16.msra.mxu0 0
  %1298 = vmatprep.subr.bf16.mxu0 0
  %1299 = vmatpush1.bf16.msra.mxu0 0
  %1300 = vmatprep.subr.bf16.mxu0 0
  %1301 = vmatpush1.bf16.msra.mxu0 0
  %1302 = vmatprep.subr.bf16.mxu0 0
  %1303 = vmatpush1.bf16.msra.mxu0 0
  %1304 = vmatprep.mubr.bf16.mxu0 0
  %1305 = vmatmul.mubr.bf16.gmra.mrb[0].mxu0 %v1267
  %v1306 = vpop.f32.mrb[0].mxu0
  %v1307 = vadd.f32 0.0, %v1306
  %v1308 = vpop.f32.mrb[0].mxu0
  %v1309 = vpop.f32.mrb[0].mxu0
  %v1310 = vadd.f32 0.0, %v1309
  %v1311 = vpop.f32.mrb[0].mxu0
  %1312 = vdwg.mxu0
  %1315 = vrot.lane.b32.xlu0 %v1307, 16
  %v1316 = vpop.permute.xlu0 %1315
  %1317 = vrot.lane.b32.xlu0 %v1310, 16
  %v1318 = vpop.permute.xlu0 %1317
  %1321 = vst.msk [vmem:[#allocation2 + $0xc] sm:$0xff] %vm767, %v1316
  %1322 = vst.msk [vmem:[#allocation2 + $0x14] sm:$0xf] %vm769, %v1318
  %1323 = vrot.lane.b32.xlu0 %v914, 104
  %v1324 = vpop.permute.xlu0 %1323
  %1325 = vrot.lane.b32.xlu0 %v918, 72
  %v1326 = vpop.permute.xlu0 %1325
  %v1328 = vsel %vm362, %v1324, 0
  %v1331 = vsel %vm362, %v1326, 0
  %1333 = vmatprep.subr.bf16.mxu0 0
  %1334 = vmatpush1.bf16.xpose.msra.mxu0 %v1331
  %1335 = vmatprep.subr.bf16.mxu0 0
  %1336 = vmatpush1.bf16.xpose.msra.mxu0 0
  %1337 = vmatprep.subr.bf16.mxu0 0
  %1338 = vmatpush1.bf16.xpose.msra.mxu0 0
  %1339 = vmatprep.subr.bf16.mxu0 0
  %1340 = vmatpush1.bf16.xpose.msra.mxu0 0
  %1341 = vmatprep.subr.bf16.mxu0 0
  %1342 = vmatpush1.bf16.xpose.msra.mxu0 0
  %1343 = vmatprep.subr.bf16.mxu0 0
  %1344 = vmatpush1.bf16.xpose.msra.mxu0 0
  %1345 = vmatprep.subr.bf16.mxu0 0
  %1346 = vmatpush1.bf16.xpose.msra.mxu0 0
  %1347 = vmatprep.subr.bf16.mxu0 0
  %1348 = vmatpush1.bf16.xpose.msra.mxu0 0
  %1349 = vmatprep.subr.bf16.mxu0 0
  %1350 = vmatpush1.bf16.xpose.msra.mxu0 0
  %1351 = vmatprep.subr.bf16.mxu0 0
  %1352 = vmatpush1.bf16.xpose.msra.mxu0 0
  %1353 = vmatprep.subr.bf16.mxu0 0
  %1354 = vmatpush1.bf16.xpose.msra.mxu0 0
  %1355 = vmatprep.subr.bf16.mxu0 0
  %1356 = vmatpush1.bf16.xpose.msra.mxu0 0
  %1357 = vmatprep.subr.bf16.mxu0 0
  %1358 = vmatpush1.bf16.xpose.msra.mxu0 0
  %1359 = vmatprep.subr.bf16.mxu0 0
  %1360 = vmatpush1.bf16.xpose.msra.mxu0 0
  %1361 = vmatprep.subr.bf16.mxu0 0
  %1362 = vmatpush1.bf16.xpose.msra.mxu0 0
  %1363 = vmatprep.subr.bf16.mxu0 0
  %1364 = vmatpush1.bf16.xpose.msra.mxu0 0
  %1365 = vmatprep.mubr.bf16.mxu0 0
  %1366 = vmatmul.mubr.bf16.gmra.mrb[0].mxu0 %v1328
  %v1367 = vpop.f32.mrb[0].mxu0
  %v1368 = vadd.f32 0.0, %v1367
  %v1369 = vpop.f32.mrb[0].mxu0
  %v1370 = vpop.f32.mrb[0].mxu0
  %v1371 = vadd.f32 0.0, %v1370
  %v1372 = vpop.f32.mrb[0].mxu0
  %1373 = vdwg.mxu0
  %v1374 = vmul.f32 %v1368, 0.35355338
  %v1375 = vmul.f32 %v1371, 0.35355338
  %v1376 = vadd.f32 %v1374, %v357
  %v1377 = vadd.f32 %v1375, %v358
  %v1378 = vsel %vm414, %v1376, -inf
  %1379 = vmax.xlane.f32.xlu0 %v1378
  %v1380 = vpop.xlane.xlu0 %1379
  %v1381 = vsel %vm418, %v1377, -inf
  %1382 = vmax.xlane.f32.xlu0 %v1381
  %v1383 = vpop.xlane.xlu0 %1382
  %v1384 = vsub.f32 %v1376, %v1380
  %v1385 = vsub.f32 %v1377, %v1383
  %v1386 = vmul.f32 %v1384, 1.442695
  %v1387 = vpow.pop %v1386
  %v1388 = vmul.f32 %v1385, 1.442695
  %v1389 = vpow.pop %v1388
  %v1390 = vsel %vm414, %v1387, 0.0
  %1391 = vadd.xlane.f32.xlu0 %v1390
  %v1392 = vpop.xlane.xlu0 %1391
  %v1393 = vsel %vm418, %v1389, 0.0
  %1394 = vadd.xlane.f32.xlu0 %v1393
  %v1395 = vpop.xlane.xlu0 %1394
  %v1396 = vrcp.pop %v1392
  %v1397 = vrcp.pop %v1395
  %v1398 = vmul.f32 %v1387, %v1396
  %v1399 = vmul.f32 %v1389, %v1397
  %v1400 = vpack.c.bf16 %v1399, %v1398
  %1401 = vrot.lane.b32.xlu0 %v997, 40
  %v1402 = vpop.permute.xlu0 %1401
  %v1404 = vsel %vm414, %v1400, 0
  %v1407 = vsel %vm444, %v1402, 0
  %1409 = vmatprep.subr.bf16.mxu0 0
  %1410 = vmatpush1.bf16.msra.mxu0 %v1407
  %1411 = vmatprep.subr.bf16.mxu0 0
  %1412 = vmatpush1.bf16.msra.mxu0 0
  %1413 = vmatprep.subr.bf16.mxu0 0
  %1414 = vmatpush1.bf16.msra.mxu0 0
  %1415 = vmatprep.subr.bf16.mxu0 0
  %1416 = vmatpush1.bf16.msra.mxu0 0
  %1417 = vmatprep.subr.bf16.mxu0 0
  %1418 = vmatpush1.bf16.msra.mxu0 0
  %1419 = vmatprep.subr.bf16.mxu0 0
  %1420 = vmatpush1.bf16.msra.mxu0 0
  %1421 = vmatprep.subr.bf16.mxu0 0
  %1422 = vmatpush1.bf16.msra.mxu0 0
  %1423 = vmatprep.subr.bf16.mxu0 0
  %1424 = vmatpush1.bf16.msra.mxu0 0
  %1425 = vmatprep.subr.bf16.mxu0 0
  %1426 = vmatpush1.bf16.msra.mxu0 0
  %1427 = vmatprep.subr.bf16.mxu0 0
  %1428 = vmatpush1.bf16.msra.mxu0 0
  %1429 = vmatprep.subr.bf16.mxu0 0
  %1430 = vmatpush1.bf16.msra.mxu0 0
  %1431 = vmatprep.subr.bf16.mxu0 0
  %1432 = vmatpush1.bf16.msra.mxu0 0
  %1433 = vmatprep.subr.bf16.mxu0 0
  %1434 = vmatpush1.bf16.msra.mxu0 0
  %1435 = vmatprep.subr.bf16.mxu0 0
  %1436 = vmatpush1.bf16.msra.mxu0 0
  %1437 = vmatprep.subr.bf16.mxu0 0
  %1438 = vmatpush1.bf16.msra.mxu0 0
  %1439 = vmatprep.subr.bf16.mxu0 0
  %1440 = vmatpush1.bf16.msra.mxu0 0
  %1441 = vmatprep.mubr.bf16.mxu0 0
  %1442 = vmatmul.mubr.bf16.gmra.mrb[0].mxu0 %v1404
  %v1443 = vpop.f32.mrb[0].mxu0
  %v1444 = vadd.f32 0.0, %v1443
  %v1445 = vpop.f32.mrb[0].mxu0
  %v1446 = vpop.f32.mrb[0].mxu0
  %v1447 = vadd.f32 0.0, %v1446
  %v1448 = vpop.f32.mrb[0].mxu0
  %1449 = vdwg.mxu0
  %1452 = vrot.lane.b32.xlu0 %v1444, 24
  %v1453 = vpop.permute.xlu0 %1452
  %1454 = vrot.lane.b32.xlu0 %v1447, 24
  %v1455 = vpop.permute.xlu0 %1454
  %1458 = vst.msk [vmem:[#allocation2 + $0xc] sm:$0xff] %vm906, %v1453
  %1459 = vst.msk [vmem:[#allocation2 + $0x14] sm:$0xf] %vm908, %v1455
  %v1460 = vld [vmem:[#allocation2] sm:$0xff]
  %v1461 = vld [vmem:[#allocation2 + $0x8] sm:$0xff]
  %v1462 = vld [vmem:[#allocation2 + $0x10] sm:$0xff]
  %v1463 = vpack.c.bf16 %v1461, %v1460
  %v1464 = vpack.c.bf16 %v1462, %v1462
  %v1465 = vld [vmem:[%s6] sm:$0xf]
  %v1466 = vld [vmem:[%s6 + $0x4] sm:$0xf]
  %v1467 = vld [vmem:[%s6 + $0x8] sm:$0xf]
  %v1468 = vld [vmem:[%s6 + $0xc] sm:$0xf]
  %v1473 = vunpack.c.l.b16 %v1465
  %v1474 = vunpack.c.l.b16 %v1466
  %v1475 = vunpack.c.l.b16 %v1467
  %v1476 = vunpack.c.l.b16 %v1468
  %v1477 = vpack.c.b16 %v1474, %v1473
  %v1478 = vpack.c.b16 %v1476, %v1475
  %v1482 = vsel %vm49, %v1463, 0
  %v1485 = vsel %vm49, %v1464, 0
  %1487 = vmatprep.subr.bf16.mxu0 0
  %1488 = vmatpush1.bf16.msra.mxu0 %v1477
  %1489 = vmatprep.subr.bf16.mxu0 0
  %1490 = vmatpush1.bf16.msra.mxu0 %v1478
  %1491 = vmatprep.subr.bf16.mxu0 0
  %1492 = vmatpush1.bf16.msra.mxu0 0
  %1493 = vmatprep.subr.bf16.mxu0 0
  %1494 = vmatpush1.bf16.msra.mxu0 0
  %1495 = vmatprep.subr.bf16.mxu0 0
  %1496 = vmatpush1.bf16.msra.mxu0 0
  %1497 = vmatprep.subr.bf16.mxu0 0
  %1498 = vmatpush1.bf16.msra.mxu0 0
  %1499 = vmatprep.subr.bf16.mxu0 0
  %1500 = vmatpush1.bf16.msra.mxu0 0
  %1501 = vmatprep.subr.bf16.mxu0 0
  %1502 = vmatpush1.bf16.msra.mxu0 0
  %1503 = vmatprep.subr.bf16.mxu0 0
  %1504 = vmatpush1.bf16.msra.mxu0 0
  %1505 = vmatprep.subr.bf16.mxu0 0
  %1506 = vmatpush1.bf16.msra.mxu0 0
  %1507 = vmatprep.subr.bf16.mxu0 0
  %1508 = vmatpush1.bf16.msra.mxu0 0
  %1509 = vmatprep.subr.bf16.mxu0 0
  %1510 = vmatpush1.bf16.msra.mxu0 0
  %1511 = vmatprep.subr.bf16.mxu0 0
  %1512 = vmatpush1.bf16.msra.mxu0 0
  %1513 = vmatprep.subr.bf16.mxu0 0
  %1514 = vmatpush1.bf16.msra.mxu0 0
  %1515 = vmatprep.subr.bf16.mxu0 0
  %1516 = vmatpush1.bf16.msra.mxu0 0
  %1517 = vmatprep.subr.bf16.mxu0 0
  %1518 = vmatpush1.bf16.msra.mxu0 0
  %1519 = vmatprep.mubr.bf16.mxu0 0
  %1520 = vmatmul.mubr.bf16.gmra.mrb[0].mxu0 %v1482
  %v1521 = vpop.f32.mrb[0].mxu0
  %v1522 = vadd.f32 0.0, %v1521
  %v1523 = vpop.f32.mrb[0].mxu0
  %v1524 = vpop.f32.mrb[0].mxu0
  %v1525 = vadd.f32 0.0, %v1524
  %v1526 = vpop.f32.mrb[0].mxu0
  %1527 = vmatprep.mubr.bf16.mxu0 0
  %1528 = vmatmul.mubr.bf16.gmra.mrb[0].mxu0 %v1485
  %v1529 = vpop.f32.mrb[0].mxu0
  %v1530 = vadd.f32 0.0, %v1529
  %v1531 = vpop.f32.mrb[0].mxu0
  %v1532 = vpop.f32.mrb[0].mxu0
  %v1533 = vpop.f32.mrb[0].mxu0
  %1534 = vdwg.mxu0
  %v1535 = vadd.f32 %v42, %v1522
  %v1536 = vadd.f32 %v43, %v1525
  %v1537 = vadd.f32 %v44, %v1530
  %v1538 = vld [vmem:[%s7] sm:$0x1]
  %v1539 = vmul.f32 %v1535, %v1535
  %v1540 = vmul.f32 %v1536, %v1536
  %v1541 = vmul.f32 %v1537, %v1537
  %v1542 = vsel %vm49, %v1539, 0.0
  %1543 = vadd.xlane.f32.xlu0 %v1542
  %v1544 = vpop.xlane.xlu0 %1543
  %v1545 = vsel %vm49, %v1540, 0.0
  %1546 = vadd.xlane.f32.xlu0 %v1545
  %v1547 = vpop.xlane.xlu0 %1546
  %v1548 = vsel %vm49, %v1541, 0.0
  %1549 = vadd.xlane.f32.xlu0 %v1548
  %v1550 = vpop.xlane.xlu0 %1549
  %v1551 = vmul.f32 %v1544, %v59
  %v1552 = vmul.f32 %v1547, %v59
  %v1553 = vmul.f32 %v1550, %v59
  %v1554 = vadd.f32 %v1551, 1e-05
  %v1555 = vadd.f32 %v1552, 1e-05
  %v1556 = vadd.f32 %v1553, 1e-05
  %v1557 = vrsqrt.pop %v1554
  %v1558 = vrsqrt.pop %v1555
  %v1559 = vrsqrt.pop %v1556
  %v1560 = vmul.f32 %v1535, %v1557
  %v1561 = vmul.f32 %v1536, %v1558
  %v1562 = vmul.f32 %v1537, %v1559
  %v1564 = vlaneseq
  %v1565 = vshrl.u32 %v1564, 7
  %v1566 = vsub.s32 0, %v1565
  %v1567 = vrot.slane %v1538, %v1566
  %v1569 = vmul.f32 %v1560, %v1567
  %v1570 = vmul.f32 %v1561, %v1567
  %v1571 = vmul.f32 %v1562, %v1567
  %v1572 = vpack.c.bf16 %v1570, %v1569
  %v1573 = vpack.c.bf16 %v1571, %v1571
  %v1574 = vld [vmem:[%s8] sm:$0xf]
  %v1575 = vld [vmem:[%s8 + $0x4] sm:$0xf]
  %v1576 = vld [vmem:[%s8 + $0x8] sm:$0xf]
  %v1577 = vld [vmem:[%s8 + $0xc] sm:$0xf]
  %v1582 = vunpack.c.l.b16 %v1574
  %v1583 = vunpack.c.l.b16 %v1575
  %v1584 = vunpack.c.l.b16 %v1576
  %v1585 = vunpack.c.l.b16 %v1577
  %v1586 = vpack.c.b16 %v1583, %v1582
  %v1587 = vpack.c.b16 %v1585, %v1584
  %v1591 = vsel %vm49, %v1572, 0
  %v1594 = vsel %vm49, %v1573, 0
  %1596 = vmatprep.subr.bf16.mxu0 0
  %1597 = vmatpush1.bf16.msra.mxu0 %v1586
  %1598 = vmatprep.subr.bf16.mxu0 0
  %1599 = vmatpush1.bf16.msra.mxu0 %v1587
  %1600 = vmatprep.subr.bf16.mxu0 0
  %1601 = vmatpush1.bf16.msra.mxu0 0
  %1602 = vmatprep.subr.bf16.mxu0 0
  %1603 = vmatpush1.bf16.msra.mxu0 0
  %1604 = vmatprep.subr.bf16.mxu0 0
  %1605 = vmatpush1.bf16.msra.mxu0 0
  %1606 = vmatprep.subr.bf16.mxu0 0
  %1607 = vmatpush1.bf16.msra.mxu0 0
  %1608 = vmatprep.subr.bf16.mxu0 0
  %1609 = vmatpush1.bf16.msra.mxu0 0
  %1610 = vmatprep.subr.bf16.mxu0 0
  %1611 = vmatpush1.bf16.msra.mxu0 0
  %1612 = vmatprep.subr.bf16.mxu0 0
  %1613 = vmatpush1.bf16.msra.mxu0 0
  %1614 = vmatprep.subr.bf16.mxu0 0
  %1615 = vmatpush1.bf16.msra.mxu0 0
  %1616 = vmatprep.subr.bf16.mxu0 0
  %1617 = vmatpush1.bf16.msra.mxu0 0
  %1618 = vmatprep.subr.bf16.mxu0 0
  %1619 = vmatpush1.bf16.msra.mxu0 0
  %1620 = vmatprep.subr.bf16.mxu0 0
  %1621 = vmatpush1.bf16.msra.mxu0 0
  %1622 = vmatprep.subr.bf16.mxu0 0
  %1623 = vmatpush1.bf16.msra.mxu0 0
  %1624 = vmatprep.subr.bf16.mxu0 0
  %1625 = vmatpush1.bf16.msra.mxu0 0
  %1626 = vmatprep.subr.bf16.mxu0 0
  %1627 = vmatpush1.bf16.msra.mxu0 0
  %1628 = vmatprep.mubr.bf16.mxu0 0
  %1629 = vmatmul.mubr.bf16.gmra.mrb[0].mxu0 %v1591
  %v1630 = vpop.f32.mrb[0].mxu0
  %v1631 = vadd.f32 0.0, %v1630
  %v1632 = vpop.f32.mrb[0].mxu0
  %v1633 = vpop.f32.mrb[0].mxu0
  %v1634 = vadd.f32 0.0, %v1633
  %v1635 = vpop.f32.mrb[0].mxu0
  %1636 = vmatprep.mubr.bf16.mxu0 0
  %1637 = vmatmul.mubr.bf16.gmra.mrb[0].mxu0 %v1594
  %v1638 = vpop.f32.mrb[0].mxu0
  %v1639 = vadd.f32 0.0, %v1638
  %v1640 = vpop.f32.mrb[0].mxu0
  %v1641 = vpop.f32.mrb[0].mxu0
  %v1642 = vpop.f32.mrb[0].mxu0
  %1643 = vdwg.mxu0
  %v1644 = vmul.f32 %v1631, 0.5
  %v1645 = vmul.f32 %v1634, 0.5
  %v1646 = vmul.f32 %v1639, 0.5
  %v1647 = vtanh.pop %v1644
  %v1648 = vtanh.pop %v1645
  %v1649 = vtanh.pop %v1646
  %v1650 = vadd.f32 %v1647, 1.0
  %v1651 = vadd.f32 %v1648, 1.0
  %v1652 = vadd.f32 %v1649, 1.0
  %v1653 = vmul.f32 %v1650, 0.5
  %v1654 = vmul.f32 %v1651, 0.5
  %v1655 = vmul.f32 %v1652, 0.5
  %v1656 = vmul.f32 %v1631, %v1653
  %v1657 = vmul.f32 %v1634, %v1654
  %v1658 = vmul.f32 %v1639, %v1655
  %1662 = vrot.lane.b32.xlu0 %v1631, 64
  %v1663 = vpop.permute.xlu0 %1662
  %1664 = vrot.lane.b32.xlu0 %v1634, 64
  %v1665 = vpop.permute.xlu0 %1664
  %1666 = vrot.lane.b32.xlu0 %v1639, 64
  %v1667 = vpop.permute.xlu0 %1666
  %v1671 = vmul.f32 %v1656, %v1663
  %v1672 = vmul.f32 %v1657, %v1665
  %v1673 = vmul.f32 %v1658, %v1667
  %v1674 = vpack.c.bf16 %v1672, %v1671
  %v1675 = vpack.c.bf16 %v1673, %v1673
  %v1676 = vld [vmem:[%s9] sm:$0xf]
  %v1677 = vld [vmem:[%s9 + $0x4] sm:$0xf]
  %v1678 = vld [vmem:[%s9 + $0x8] sm:$0xf]
  %v1679 = vld [vmem:[%s9 + $0xc] sm:$0xf]
  %v1680 = vld [vmem:[%s9 + $0x10] sm:$0xf]
  %v1681 = vld [vmem:[%s9 + $0x14] sm:$0xf]
  %v1682 = vld [vmem:[%s9 + $0x18] sm:$0xf]
  %v1683 = vld [vmem:[%s9 + $0x1c] sm:$0xf]
  %v1692 = vunpack.c.l.b16 %v1676
  %v1693 = vunpack.c.l.b16 %v1677
  %v1694 = vunpack.c.l.b16 %v1678
  %v1695 = vunpack.c.l.b16 %v1679
  %v1696 = vunpack.c.l.b16 %v1680
  %v1697 = vunpack.c.l.b16 %v1681
  %v1698 = vunpack.c.l.b16 %v1682
  %v1699 = vunpack.c.l.b16 %v1683
  %v1700 = vpack.c.b16 %v1693, %v1692
  %v1701 = vpack.c.b16 %v1695, %v1694
  %v1702 = vpack.c.b16 %v1697, %v1696
  %v1703 = vpack.c.b16 %v1699, %v1698
  %vm1708 = vcmask 523264
  %v1710 = vsel %vm1708, %v1674, 0
  %v1713 = vsel %vm1708, %v1675, 0
  %1715 = vmatprep.subr.bf16.mxu0 0
  %1716 = vmatpush1.bf16.msra.mxu0 %v1700
  %1717 = vmatprep.subr.bf16.mxu0 0
  %1718 = vmatpush1.bf16.msra.mxu0 %v1701
  %1719 = vmatprep.subr.bf16.mxu0 0
  %1720 = vmatpush1.bf16.msra.mxu0 %v1702
  %1721 = vmatprep.subr.bf16.mxu0 0
  %1722 = vmatpush1.bf16.msra.mxu0 %v1703
  %1723 = vmatprep.subr.bf16.mxu0 0
  %1724 = vmatpush1.bf16.msra.mxu0 0
  %1725 = vmatprep.subr.bf16.mxu0 0
  %1726 = vmatpush1.bf16.msra.mxu0 0
  %1727 = vmatprep.subr.bf16.mxu0 0
  %1728 = vmatpush1.bf16.msra.mxu0 0
  %1729 = vmatprep.subr.bf16.mxu0 0
  %1730 = vmatpush1.bf16.msra.mxu0 0
  %1731 = vmatprep.subr.bf16.mxu0 0
  %1732 = vmatpush1.bf16.msra.mxu0 0
  %1733 = vmatprep.subr.bf16.mxu0 0
  %1734 = vmatpush1.bf16.msra.mxu0 0
  %1735 = vmatprep.subr.bf16.mxu0 0
  %1736 = vmatpush1.bf16.msra.mxu0 0
  %1737 = vmatprep.subr.bf16.mxu0 0
  %1738 = vmatpush1.bf16.msra.mxu0 0
  %1739 = vmatprep.subr.bf16.mxu0 0
  %1740 = vmatpush1.bf16.msra.mxu0 0
  %1741 = vmatprep.subr.bf16.mxu0 0
  %1742 = vmatpush1.bf16.msra.mxu0 0
  %1743 = vmatprep.subr.bf16.mxu0 0
  %1744 = vmatpush1.bf16.msra.mxu0 0
  %1745 = vmatprep.subr.bf16.mxu0 0
  %1746 = vmatpush1.bf16.msra.mxu0 0
  %1747 = vmatprep.mubr.bf16.mxu0 0
  %1748 = vmatmul.mubr.bf16.gmra.mrb[0].mxu0 %v1710
  %v1749 = vpop.f32.mrb[0].mxu0
  %v1750 = vadd.f32 0.0, %v1749
  %v1751 = vpop.f32.mrb[0].mxu0
  %v1752 = vpop.f32.mrb[0].mxu0
  %v1753 = vadd.f32 0.0, %v1752
  %v1754 = vpop.f32.mrb[0].mxu0
  %1755 = vmatprep.mubr.bf16.mxu0 0
  %1756 = vmatmul.mubr.bf16.gmra.mrb[0].mxu0 %v1713
  %v1757 = vpop.f32.mrb[0].mxu0
  %v1758 = vadd.f32 0.0, %v1757
  %v1759 = vpop.f32.mrb[0].mxu0
  %v1760 = vpop.f32.mrb[0].mxu0
  %v1761 = vpop.f32.mrb[0].mxu0
  %1762 = vdwg.mxu0
  %v1763 = vadd.f32 %v1535, %v1750
  %v1764 = vadd.f32 %v1536, %v1753
  %v1765 = vadd.f32 %v1537, %v1758
  %v1766 = vld [vmem:[%s10] sm:$0x1]
  %v1767 = vmul.f32 %v1763, %v1763
  %v1768 = vmul.f32 %v1764, %v1764
  %v1769 = vmul.f32 %v1765, %v1765
  %v1770 = vsel %vm49, %v1767, 0.0
  %1771 = vadd.xlane.f32.xlu0 %v1770
  %v1772 = vpop.xlane.xlu0 %1771
  %v1773 = vsel %vm49, %v1768, 0.0
  %1774 = vadd.xlane.f32.xlu0 %v1773
  %v1775 = vpop.xlane.xlu0 %1774
  %v1776 = vsel %vm49, %v1769, 0.0
  %1777 = vadd.xlane.f32.xlu0 %v1776
  %v1778 = vpop.xlane.xlu0 %1777
  %v1779 = vmul.f32 %v1772, %v59
  %v1780 = vmul.f32 %v1775, %v59
  %v1781 = vmul.f32 %v1778, %v59
  %v1782 = vadd.f32 %v1779, 1e-05
  %v1783 = vadd.f32 %v1780, 1e-05
  %v1784 = vadd.f32 %v1781, 1e-05
  %v1785 = vrsqrt.pop %v1782
  %v1786 = vrsqrt.pop %v1783
  %v1787 = vrsqrt.pop %v1784
  %v1788 = vmul.f32 %v1763, %v1785
  %v1789 = vmul.f32 %v1764, %v1786
  %v1790 = vmul.f32 %v1765, %v1787
  %v1792 = vlaneseq
  %v1793 = vshrl.u32 %v1792, 7
  %v1794 = vsub.s32 0, %v1793
  %v1795 = vrot.slane %v1766, %v1794
  %v1797 = vmul.f32 %v1788, %v1795
  %v1798 = vmul.f32 %v1789, %v1795
  %v1799 = vmul.f32 %v1790, %v1795
  %v1800 = vpack.c.bf16 %v1798, %v1797
  %v1801 = vpack.c.bf16 %v1799, %v1799
  %v1802 = vld [vmem:[%s11] sm:$0xf]
  %v1803 = vld [vmem:[%s11 + $0x4] sm:$0xf]
  %v1804 = vld [vmem:[%s11 + $0x8] sm:$0xf]
  %v1805 = vld [vmem:[%s11 + $0xc] sm:$0xf]
  %v1810 = vunpack.c.l.b16 %v1802
  %v1811 = vunpack.c.l.b16 %v1803
  %v1812 = vunpack.c.l.b16 %v1804
  %v1813 = vunpack.c.l.b16 %v1805
  %v1814 = vpack.c.b16 %v1811, %v1810
  %v1815 = vpack.c.b16 %v1813, %v1812
  %v1819 = vsel %vm49, %v1800, 0
  %v1822 = vsel %vm49, %v1801, 0
  %1824 = vmatprep.subr.bf16.mxu0 0
  %1825 = vmatpush1.bf16.msra.mxu0 %v1814
  %1826 = vmatprep.subr.bf16.mxu0 0
  %1827 = vmatpush1.bf16.msra.mxu0 %v1815
  %1828 = vmatprep.subr.bf16.mxu0 0
  %1829 = vmatpush1.bf16.msra.mxu0 0
  %1830 = vmatprep.subr.bf16.mxu0 0
  %1831 = vmatpush1.bf16.msra.mxu0 0
  %1832 = vmatprep.subr.bf16.mxu0 0
  %1833 = vmatpush1.bf16.msra.mxu0 0
  %1834 = vmatprep.subr.bf16.mxu0 0
  %1835 = vmatpush1.bf16.msra.mxu0 0
  %1836 = vmatprep.subr.bf16.mxu0 0
  %1837 = vmatpush1.bf16.msra.mxu0 0
  %1838 = vmatprep.subr.bf16.mxu0 0
  %1839 = vmatpush1.bf16.msra.mxu0 0
  %1840 = vmatprep.subr.bf16.mxu0 0
  %1841 = vmatpush1.bf16.msra.mxu0 0
  %1842 = vmatprep.subr.bf16.mxu0 0
  %1843 = vmatpush1.bf16.msra.mxu0 0
  %1844 = vmatprep.subr.bf16.mxu0 0
  %1845 = vmatpush1.bf16.msra.mxu0 0
  %1846 = vmatprep.subr.bf16.mxu0 0
  %1847 = vmatpush1.bf16.msra.mxu0 0
  %1848 = vmatprep.subr.bf16.mxu0 0
  %1849 = vmatpush1.bf16.msra.mxu0 0
  %1850 = vmatprep.subr.bf16.mxu0 0
  %1851 = vmatpush1.bf16.msra.mxu0 0
  %1852 = vmatprep.subr.bf16.mxu0 0
  %1853 = vmatpush1.bf16.msra.mxu0 0
  %1854 = vmatprep.subr.bf16.mxu0 0
  %1855 = vmatpush1.bf16.msra.mxu0 0
  %1856 = vmatprep.mubr.bf16.mxu0 0
  %1857 = vmatmul.mubr.bf16.gmra.mrb[0].mxu0 %v1819
  %v1858 = vpop.f32.mrb[0].mxu0
  %v1859 = vadd.f32 0.0, %v1858
  %v1860 = vpop.f32.mrb[0].mxu0
  %v1861 = vpop.f32.mrb[0].mxu0
  %v1862 = vadd.f32 0.0, %v1861
  %v1863 = vpop.f32.mrb[0].mxu0
  %1864 = vmatprep.mubr.bf16.mxu0 0
  %1865 = vmatmul.mubr.bf16.gmra.mrb[0].mxu0 %v1822
  %v1866 = vpop.f32.mrb[0].mxu0
  %v1867 = vadd.f32 0.0, %v1866
  %v1868 = vpop.f32.mrb[0].mxu0
  %v1869 = vpop.f32.mrb[0].mxu0
  %v1870 = vpop.f32.mrb[0].mxu0
  %1871 = vdwg.mxu0
  %1872 = vst [vmem:[%s12] sm:$0xff] %v1859
  %1873 = vst [vmem:[%s12 + $0x8] sm:$0xff] %v1862
  %1874 = vst [vmem:[%s12 + $0x10] sm:$0xff] %v1867
  // Predicated region
  $region50: #{llava_forward.3} parent=0 // pred_check
    _
  $region51: #{llava_forward.3} parent=0 // pred_check_branch
    %1876 = sbr.rel (0) target = $region53
  $region52: #{llava_forward.3} parent=0 // pred_region
    _
  $region53: #{llava_forward.3} parent=0 // pred_fallthru
    _
  // Predicated region
  $region54: #{llava_forward.3} parent=0 // pred_check
    _
  $region55: #{llava_forward.3} parent=0 // pred_check_branch
    %1878 = sbr.rel (0) target = $region57
  $region56: #{llava_forward.3} parent=0 // pred_region
    _
  $region57: #{llava_forward.3} parent=0 // pred_fallthru
    _

</llo_original>
